<compile_context>
chip_gen: v7x
topology: tpu7x:2x2x1
jax: 0.10.0
libtpu: 0.0.40
codegen_flags: <defaults>
</compile_context>

<pallas_src>
import math
import functools

import numpy as np
import jax
import jax.numpy as jnp
from jax.experimental import pallas as pl
from jax.experimental.pallas import tpu as pltpu

LN_EPS = 1e-12                  # BERT LayerNorm eps
TM = 512                        # row tile for large-M matmul / fused kernels
TM_LN = 512                     # row tile for standalone layernorm
TN = 1024                       # max lane tile for N-tiled matmuls
X_RESIDENT_BYTES = 8 * 1024 * 1024    # keep activation slab resident below this
OUT_TILE_BYTES = 24 * 1024 * 1024     # cap on double-buffered out tile (resident path)


def _round_up(x, m):
    return ((x + m - 1) // m) * m


def _vmem_limit_bytes():
    # 3/4 of the chip's VMEM, capped at 96 MiB (v5e/v6e have 128 MiB, v7x 64).
    cap = 64 * 1024 * 1024
    try:
        info = pltpu.get_tpu_info()
        cap = int(getattr(info, "vmem_capacity_bytes", cap))
    except Exception:
        pass
    return min(96 * 1024 * 1024, (cap * 3) // 4)


VMEM_LIMIT = _vmem_limit_bytes()


def _cp(sem):
    return pltpu.CompilerParams(dimension_semantics=sem,
                                vmem_limit_bytes=VMEM_LIMIT)


# ------------------- single-buffering probe (pl.Buffered(1)) -----------------

def _copy_kernel(x_ref, o_ref):
    o_ref[...] = x_ref[...]


@functools.lru_cache(maxsize=None)
def _single_buffer_supported():
    """True if BlockSpec(pipeline_mode=pl.Buffered(1)) works on this runtime."""
    try:
        x = jnp.arange(8 * 128, dtype=jnp.float32).reshape(8, 128)
        f = pl.pallas_call(
            _copy_kernel,
            out_shape=jax.ShapeDtypeStruct((8, 128), jnp.float32),
            grid=(1,),
            in_specs=[pl.BlockSpec((8, 128), lambda i: (0, 0),
                                   pipeline_mode=pl.Buffered(1))],
            out_specs=pl.BlockSpec((8, 128), lambda i: (0, 0)),
        )
        y = jax.block_until_ready(f(x))
        return bool(jnp.all(y == x))
    except Exception:
        return False


def _resident_spec(block_shape, index_map):
    """Spec for a block whose index map is constant across the grid: it never
    changes, so single-buffer it (saves a full copy of a resident weight in
    VMEM) when the runtime supports Buffered(1); otherwise plain spec."""
    if _single_buffer_supported():
        return pl.BlockSpec(block_shape, index_map, pipeline_mode=pl.Buffered(1))
    return pl.BlockSpec(block_shape, index_map)


# ------------------------------ tiling helpers -------------------------------

def _row_tile(m, max_tile=TM):
    # Full-M block when it fits (legal for any M); otherwise 512-row tiles with
    # a masked partial edge block.
    return m if m <= max_tile else max_tile


def _col_tile(n):
    """Lane tile: full width for small N; otherwise a multiple of 256 (full
    v6e/v7x MXU pass width), preferring an exact divisor, never collapsing to
    128 -- a non-dividing tile is handled by Pallas' masked edge block."""
    if n <= TN:
        return _round_up(n, 128)
    for t in (TN, 768, 512, 256):
        if n % t == 0:
            return t
    return TN


# ------------------------------- Pallas kernels -------------------------------

def _act(y, act):
    if act == "gelu":          # exact erf GELU (matches the PyTorch reference)
        return 0.5 * y * (1.0 + jax.lax.erf(y * (1.0 / math.sqrt(2.0))))
    if act == "gelu_tanh":     # tanh approximation: transcendental on the EUP
        c = math.sqrt(2.0 / math.pi)
        return 0.5 * y * (1.0 + jnp.tanh(c * (y + 0.044715 * y * y * y)))
    if act == "tanh":
        return jnp.tanh(y)
    return y


def _ln(x, g, b, eps):
    mu = jnp.mean(x, axis=-1, keepdims=True)
    var = jnp.mean(jnp.square(x - mu), axis=-1, keepdims=True)
    return (x - mu) * jax.lax.rsqrt(var + eps) * g + b


def linear_kernel(x_ref, w_ref, b_ref, o_ref, *, act):
    # x:(tm,K) bf16 @ w:(K,tn) bf16 -> f32 acc, + bias, [+ activation]
    y = jnp.dot(x_ref[...], w_ref[...], preferred_element_type=jnp.float32)
    y = _act(y + b_ref[...], act)
    o_ref[...] = y.astype(o_ref.dtype)


def linear_res_ln_kernel(x_ref, w_ref, b_ref, r_ref, g_ref, bt_ref, o_ref, *, eps):
    # fused: dense + bias + residual add + LayerNorm
    y = jnp.dot(x_ref[...], w_ref[...], preferred_element_type=jnp.float32)
    y = y + b_ref[...] + r_ref[...].astype(jnp.float32)
    o_ref[...] = _ln(y, g_ref[...], bt_ref[...], eps).astype(o_ref.dtype)


def linear_act_ln_kernel(x_ref, w_ref, b_ref, g_ref, bt_ref, o_ref, *, act, eps):
    # fused: dense + bias + activation + LayerNorm (MLM transform)
    y = jnp.dot(x_ref[...], w_ref[...], preferred_element_type=jnp.float32)
    y = _act(y + b_ref[...], act)
    o_ref[...] = _ln(y, g_ref[...], bt_ref[...], eps).astype(o_ref.dtype)


def layernorm_kernel(x_ref, g_ref, b_ref, o_ref, *, eps):
    x = x_ref[...].astype(jnp.float32)
    o_ref[...] = _ln(x, g_ref[...], b_ref[...], eps).astype(o_ref.dtype)


def attention_group_kernel(q_ref, k_ref, v_ref, m_ref, o_ref, *, heads, head_dim):
    # One (batch, head-group) tile.  1/sqrt(head_dim) is folded into the Q
    # projection weights at parameter-setup time -> no score scaling here.
    q = q_ref[0]                                  # (S, heads*head_dim) bf16
    k = k_ref[0]
    v = v_ref[0]
    m = m_ref[0].astype(jnp.float32)              # (1, S) additive mask
    ctx = []
    for h in range(heads):
        lo, hi = h * head_dim, (h + 1) * head_dim
        s = jax.lax.dot_general(q[:, lo:hi], k[:, lo:hi],
                                (((1,), (1,)), ((), ())),
                                preferred_element_type=jnp.float32)
        s = s + m
        s = s - jnp.max(s, axis=-1, keepdims=True)
        p = jnp.exp(s)
        # approx reciprocal runs on the EUP; small deviation vs. exact softmax.
        p = p * pl.reciprocal(jnp.sum(p, axis=-1, keepdims=True), approx=True)
        ctx.append(jnp.dot(p.astype(v.dtype), v[:, lo:hi],
                           preferred_element_type=jnp.float32))
    out = ctx[0] if heads == 1 else jnp.concatenate(ctx, axis=-1)
    o_ref[0] = out.astype(o_ref.dtype)            # lane-dense (S, group_width)


def attention_allheads_kernel(qkv_ref, m_ref, o_ref, *, num_heads, head_dim):
    # Fallback when head widths cannot be 128-aligned: one batch element,
    # all heads, in-kernel slicing of the fused (S, 3H) block.
    H = num_heads * head_dim
    qkv = qkv_ref[0]
    m = m_ref[0].astype(jnp.float32)
    ctx = []
    for h in range(num_heads):
        q = qkv[:, h * head_dim:(h + 1) * head_dim]
        k = qkv[:, H + h * head_dim:H + (h + 1) * head_dim]
        v = qkv[:, 2 * H + h * head_dim:2 * H + (h + 1) * head_dim]
        s = jax.lax.dot_general(q, k, (((1,), (1,)), ((), ())),
                                preferred_element_type=jnp.float32)
        s = s + m
        s = s - jnp.max(s, axis=-1, keepdims=True)
        p = jnp.exp(s)
        p = p * pl.reciprocal(jnp.sum(p, axis=-1, keepdims=True), approx=True)
        ctx.append(jnp.dot(p.astype(qkv.dtype), v,
                           preferred_element_type=jnp.float32))
    o_ref[0] = jnp.concatenate(ctx, axis=-1).astype(o_ref.dtype)


# ------------------------------ kernel wrappers -------------------------------

def linear(x, w_kn, b, act="none", out_dtype=jnp.bfloat16, out_cols=None):
    """y = act(x @ w_kn + b).

    x:(M,K) bf16, w_kn:(K,Nw) pre-transposed bf16, b:(Nw,) f32.
    out_cols: true output width (<= Nw).  The weight may be column-padded
    (e.g. tied decoder weight padded to a 128 multiple); the output is emitted
    at its true width and Pallas masks the partial final N block, so no XLA
    slice of the logits is needed.
    """
    M, K = x.shape
    Nw = w_kn.shape[1]
    N = Nw if out_cols is None else out_cols
    b2 = b.reshape(1, Nw).astype(jnp.float32)
    tn = _col_tile(N)

    if M * K * x.dtype.itemsize <= X_RESIDENT_BYTES:
        # Activation slab fully VMEM-resident; grid over N only.  Weight and
        # activation are each streamed exactly once from HBM.
        out_size = np.dtype(out_dtype).itemsize
        while tn > 256 and 2 * M * tn * out_size > OUT_TILE_BYTES:
            tn -= 256
        grid = (pl.cdiv(N, tn),)
        return pl.pallas_call(
            functools.partial(linear_kernel, act=act),
            out_shape=jax.ShapeDtypeStruct((M, N), out_dtype),
            grid=grid,
            in_specs=[_resident_spec((M, K), lambda j: (0, 0)),
                      pl.BlockSpec((K, tn), lambda j: (0, j)),
                      pl.BlockSpec((1, tn), lambda j: (0, j))],
            out_specs=pl.BlockSpec((M, tn), lambda j: (0, j)),
            compiler_params=_cp(("parallel",)),
        )(x, w_kn, b2)

    # Large-M fallback: 2-D grid, N outer / M inner so each weight tile is
    # streamed once; partial edge blocks are masked (no pad/slice copies).
    tm = TM
    grid = (pl.cdiv(N, tn), pl.cdiv(M, tm))
    return pl.pallas_call(
        functools.partial(linear_kernel, act=act),
        out_shape=jax.ShapeDtypeStruct((M, N), out_dtype),
        grid=grid,
        in_specs=[pl.BlockSpec((tm, K), lambda j, i: (i, 0)),
                  pl.BlockSpec((K, tn), lambda j, i: (0, j)),
                  pl.BlockSpec((1, tn), lambda j, i: (0, j))],
        out_specs=pl.BlockSpec((tm, tn), lambda j, i: (i, j)),
        compiler_params=_cp(("parallel", "parallel")),
    )(x, w_kn, b2)


def linear_res_ln(x, w_kn, b, residual, gamma, beta, eps=LN_EPS,
                  out_dtype=jnp.bfloat16):
    """Fused dense + bias + residual + LayerNorm.  N (= hidden) untiled; the
    full (K,N) weight is resident (constant index map, single-buffered when
    supported)."""
    M, K = x.shape
    N = w_kn.shape[1]
    tm = _row_tile(M)
    b2 = b.reshape(1, N).astype(jnp.float32)
    g2 = gamma.reshape(1, N).astype(jnp.float32)
    bt2 = beta.reshape(1, N).astype(jnp.float32)
    row_in = pl.BlockSpec((tm, K), lambda i: (i, 0))
    row_nd = pl.BlockSpec((tm, N), lambda i: (i, 0))
    vec = pl.BlockSpec((1, N), lambda i: (0, 0))
    return pl.pallas_call(
        functools.partial(linear_res_ln_kernel, eps=eps),
        out_shape=jax.ShapeDtypeStruct((M, N), out_dtype),
        grid=(pl.cdiv(M, tm),),
        in_specs=[row_in, _resident_spec((K, N), lambda i: (0, 0)),
                  vec, row_nd, vec, vec],
        out_specs=row_nd,
        compiler_params=_cp(("parallel",)),
    )(x, w_kn, b2, residual, g2, bt2)


def linear_act_ln(x, w_kn, b, gamma, beta, act="gelu", eps=LN_EPS,
                  out_dtype=jnp.bfloat16):
    """Fused dense + bias + activation + LayerNorm (MLM transform)."""
    M, K = x.shape
    N = w_kn.shape[1]
    tm = _row_tile(M)
    b2 = b.reshape(1, N).astype(jnp.float32)
    g2 = gamma.reshape(1, N).astype(jnp.float32)
    bt2 = beta.reshape(1, N).astype(jnp.float32)
    row_out = pl.BlockSpec((tm, N), lambda i: (i, 0))
    vec = pl.BlockSpec((1, N), lambda i: (0, 0))
    return pl.pallas_call(
        functools.partial(linear_act_ln_kernel, act=act, eps=eps),
        out_shape=jax.ShapeDtypeStruct((M, N), out_dtype),
        grid=(pl.cdiv(M, tm),),
        in_specs=[pl.BlockSpec((tm, K), lambda i: (i, 0)),
                  _resident_spec((K, N), lambda i: (0, 0)),
                  vec, vec, vec],
        out_specs=row_out,
        compiler_params=_cp(("parallel",)),
    )(x, w_kn, b2, g2, bt2)


def layernorm(x, gamma, beta, eps=LN_EPS, out_dtype=jnp.bfloat16):
    M, H = x.shape
    tm = _row_tile(M, TM_LN)
    g2 = gamma.reshape(1, H).astype(jnp.float32)
    b2 = beta.reshape(1, H).astype(jnp.float32)
    return pl.pallas_call(
        functools.partial(layernorm_kernel, eps=eps),
        out_shape=jax.ShapeDtypeStruct((M, H), out_dtype),
        grid=(pl.cdiv(M, tm),),
        in_specs=[pl.BlockSpec((tm, H), lambda i: (i, 0)),
                  pl.BlockSpec((1, H), lambda i: (0, 0)),
                  pl.BlockSpec((1, H), lambda i: (0, 0))],
        out_specs=pl.BlockSpec((tm, H), lambda i: (i, 0)),
        compiler_params=_cp(("parallel",)),
    )(x, g2, b2)


def _head_group_size(num_heads, head_dim):
    # smallest head count whose combined width is a lane-aligned 128 multiple
    for g in range(1, num_heads + 1):
        if num_heads % g == 0 and (g * head_dim) % 128 == 0:
            return g
    return None


def attention(qkv, ext_mask, num_heads, out_dtype=jnp.bfloat16):
    """qkv: (B, S, 3H) fused projections ([Q|K|V], heads ascending inside each);
    ext_mask: (B,1,S) additive.  Returns merged-head context (B, S, H)."""
    B, S, three_h = qkv.shape
    H = three_h // 3
    Dh = H // num_heads
    g = _head_group_size(num_heads, Dh)
    if g is None:
        # Head width cannot be 128-aligned: fall back to per-batch all-heads.
        return pl.pallas_call(
            functools.partial(attention_allheads_kernel,
                              num_heads=num_heads, head_dim=Dh),
            out_shape=jax.ShapeDtypeStruct((B, S, H), out_dtype),
            grid=(B,),
            in_specs=[pl.BlockSpec((1, S, three_h), lambda b: (b, 0, 0)),
                      pl.BlockSpec((1, 1, S), lambda b: (b, 0, 0))],
            out_specs=pl.BlockSpec((1, S, H), lambda b: (b, 0, 0)),
            compiler_params=_cp(("parallel",)),
        )(qkv, ext_mask)

    nG = num_heads // g
    GW = g * Dh
    # Grid over (batch, head-group); the same qkv array is passed three times
    # so BlockSpecs extract lane-aligned Q / K / V group slabs via DMA.
    return pl.pallas_call(
        functools.partial(attention_group_kernel, heads=g, head_dim=Dh),
        out_shape=jax.ShapeDtypeStruct((B, S, H), out_dtype),
        grid=(B, nG),
        in_specs=[pl.BlockSpec((1, S, GW), lambda b, p: (b, 0, p)),
                  pl.BlockSpec((1, S, GW), lambda b, p: (b, 0, nG + p)),
                  pl.BlockSpec((1, S, GW), lambda b, p: (b, 0, 2 * nG + p)),
                  pl.BlockSpec((1, 1, S), lambda b, p: (b, 0, 0))],
        out_specs=pl.BlockSpec((1, S, GW), lambda b, p: (b, 0, p)),
        compiler_params=_cp(("parallel", "parallel")),
    )(qkv, qkv, qkv, ext_mask)


# --------------------------------- model glue ---------------------------------

def init_params(key, cfg):
    """Weights stored in matmul-ready (in, out) bf16 layout; vocab column-padded
    to a 128 multiple; 1/sqrt(head_dim) folded into the Q projection."""
    H = cfg["hidden_size"]
    I = cfg["intermediate_size"]
    V = cfg["vocab_size"]
    nH = cfg["num_attention_heads"]
    Dh = H // nH
    Vp = _round_up(V, 128)
    std = cfg["initializer_range"]
    L = cfg["num_hidden_layers"]
    keys = iter(jax.random.split(key, 8 + 4 * L))

    def normal(shape):
        return std * jax.random.normal(next(keys), shape, dtype=jnp.float32)

    word_emb = jnp.pad(normal((V, H)), ((0, Vp - V), (0, 0))).astype(jnp.bfloat16)
    params = {
        "word_emb": word_emb,                     # (Vp, H); pad rows are zero
        "word_emb_t": jnp.transpose(word_emb),    # (H, Vp) tied decoder weight
        "pos_emb": normal((cfg["max_position_embeddings"], H)).astype(jnp.bfloat16),
        "tok_emb": normal((cfg["type_vocab_size"], H)).astype(jnp.bfloat16),
        "emb_ln_g": jnp.ones((H,), jnp.float32),
        "emb_ln_b": jnp.zeros((H,), jnp.float32),
        "mlm_transform_w": normal((H, H)).astype(jnp.bfloat16),
        "mlm_transform_b": jnp.zeros((H,), jnp.float32),
        "mlm_ln_g": jnp.ones((H,), jnp.float32),
        "mlm_ln_b": jnp.zeros((H,), jnp.float32),
        "mlm_decoder_bias": jnp.zeros((Vp,), jnp.float32),
        "layers": [],
    }
    # Fold 1/sqrt(Dh) into Q weights+bias (columns [0, H) of the fused QKV).
    # When importing a real checkpoint, scale its Q weight/bias the same way.
    qscale = jnp.concatenate([jnp.full((H,), 1.0 / math.sqrt(Dh), jnp.float32),
                              jnp.ones((2 * H,), jnp.float32)])
    for _ in range(L):
        params["layers"].append({
            "qkv_w": (normal((H, 3 * H)) * qscale[None, :]).astype(jnp.bfloat16),
            "qkv_b": jnp.zeros((3 * H,), jnp.float32) * qscale,
            "attn_out_w": normal((H, H)).astype(jnp.bfloat16),
            "attn_out_b": jnp.zeros((H,), jnp.float32),
            "ln1_g": jnp.ones((H,), jnp.float32),
            "ln1_b": jnp.zeros((H,), jnp.float32),
            "ffn_w1": normal((H, I)).astype(jnp.bfloat16),
            "ffn_b1": jnp.zeros((I,), jnp.float32),
            "ffn_w2": normal((I, H)).astype(jnp.bfloat16),
            "ffn_b2": jnp.zeros((H,), jnp.float32),
            "ln2_g": jnp.ones((H,), jnp.float32),
            "ln2_b": jnp.zeros((H,), jnp.float32),
        })
    return params


def masked_lm_loss(logits, labels):
    """nn.CrossEntropyLoss(ignore_index=-1) over flattened logits/labels."""
    V = logits.shape[-1]
    lp = jax.nn.log_softmax(logits.reshape(-1, V).astype(jnp.float32), axis=-1)
    lab = labels.reshape(-1)
    valid = lab != -1
    safe = jnp.where(valid, lab, 0)
    nll = -jnp.take_along_axis(lp, safe[:, None], axis=-1)[:, 0]
    nll = jnp.where(valid, nll, 0.0)
    return jnp.sum(nll) / jnp.maximum(jnp.sum(valid), 1)


def bert_for_masked_lm_forward(params, cfg, input_ids, token_type_ids,
                               attention_mask, masked_lm_labels=None):
    B, S = input_ids.shape
    H = cfg["hidden_size"]
    V = cfg["vocab_size"]
    nH = cfg["num_attention_heads"]

    # --- BertEmbeddings (index gathers in plain JAX, LayerNorm in Pallas) ---
    pos_ids = jnp.arange(S, dtype=jnp.int32)
    emb = (params["word_emb"][input_ids]
           + params["pos_emb"][pos_ids][None, :, :]
           + params["tok_emb"][token_type_ids])             # (B, S, H) bf16
    x = layernorm(emb.reshape(B * S, H), params["emb_ln_g"], params["emb_ln_b"])
    # hidden_dropout(p=0.1) -> identity at inference

    # extended attention mask: (1 - mask) * -10000, broadcast over heads/query
    ext_mask = ((1.0 - attention_mask.astype(jnp.float32)) * -10000.0
                ).reshape(B, 1, S)

    # --- BertEncoder ---
    for p in params["layers"]:
        qkv = linear(x, p["qkv_w"], p["qkv_b"])              # fused Q|K|V
        ctx = attention(qkv.reshape(B, S, 3 * H), ext_mask, nH)      # (B,S,H)
        x = linear_res_ln(ctx.reshape(B * S, H), p["attn_out_w"], p["attn_out_b"],
                          x, p["ln1_g"], p["ln1_b"])         # attn out + res + LN
        # FFN up: tanh-form GELU (EUP); use act="gelu" for exact erf parity.
        inter = linear(x, p["ffn_w1"], p["ffn_b1"], act="gelu_tanh")
        x = linear_res_ln(inter, p["ffn_w2"], p["ffn_b2"],
                          x, p["ln2_g"], p["ln2_b"])         # FFN out + res + LN

    # BertPooler output is discarded by BertForMaskedLM -> not computed.

    # --- BertOnlyMLMHead: transform (dense + gelu + LN) then tied decoder ---
    t = linear_act_ln(x, params["mlm_transform_w"], params["mlm_transform_b"],
                      params["mlm_ln_g"], params["mlm_ln_b"], act="gelu")
    # Tied decoder: weight column-padded to 128 multiple, logits emitted at
    # true vocab width (masked final block) -> no XLA slice copy.
    logits = linear(t, params["word_emb_t"], params["mlm_decoder_bias"],
                    out_dtype=jnp.float32, out_cols=V)       # (B*S, V) f32
    prediction_scores = logits.reshape(B, S, V)

    if masked_lm_labels is not None:
        return masked_lm_loss(prediction_scores, masked_lm_labels)
    return prediction_scores


# ------------------------------------ main ------------------------------------

if __name__ == "__main__":
    cfg = dict(
        vocab_size=512,
        hidden_size=128,
        num_hidden_layers=2,
        num_attention_heads=2,       # head_dim = 64 (same as BERT-base heads)
        intermediate_size=512,
        max_position_embeddings=64,
        type_vocab_size=2,
        initializer_range=0.02,
    )
    B, S = 2, 16

    # probe single-buffering support once, eagerly (cached for trace time)
    _single_buffer_supported()

    key = jax.random.PRNGKey(0)
    k_params, k_ids, k_types, k_lab = jax.random.split(key, 4)

    params = init_params(k_params, cfg)
    input_ids = jax.random.randint(k_ids, (B, S), 0, cfg["vocab_size"],
                                   dtype=jnp.int32)
    token_type_ids = jax.random.randint(k_types, (B, S), 0,
                                        cfg["type_vocab_size"], dtype=jnp.int32)
    attention_mask = jnp.ones((B, S), dtype=jnp.int32).at[1, -4:].set(0)
    labels = jnp.full((B, S), -1, dtype=jnp.int32).at[:, :3].set(
        jax.random.randint(k_lab, (B, 3), 0, cfg["vocab_size"], dtype=jnp.int32))

    @jax.jit
    def fwd(p, ids, tt, am):
        return bert_for_masked_lm_forward(p, cfg, ids, tt, am)

    logits = jax.block_until_ready(fwd(params, input_ids, token_type_ids,
                                       attention_mask))

    assert logits.shape == (B, S, cfg["vocab_size"])
    assert logits.dtype == jnp.float32
    assert bool(jnp.all(jnp.isfinite(logits)))

    # masked_lm_labels branch (CrossEntropyLoss with ignore_index=-1)
    loss = jax.block_until_ready(masked_lm_loss(logits, labels))
    assert bool(jnp.isfinite(loss))

    print("KERNEL_OK")
</pallas_src>

<mosaic_0001>
module attributes {stable_mosaic.version = 11 : i64} {
  func.func @_copy_kernel(%arg0: i32, %arg1: memref<8x128xf32, #tpu.memory_space<vmem>>, %arg2: memref<8x128xf32, #tpu.memory_space<vmem>>) attributes {dimension_semantics = [#tpu.dimension_semantics<arbitrary>], iteration_bounds = array<i64: 1>, scalar_prefetch = 0 : i64, scratch_operands = 0 : i64, tpu.core_type = #tpu.core_type<tc>, window_params = [{pipeline_mode = #tpu.pipeline_mode<synchronous>, transform_indices = @transform_0, window_bounds = array<i64: 8, 128>}, {pipeline_mode = #tpu.pipeline_mode<synchronous>, transform_indices = @transform_1, window_bounds = array<i64: 8, 128>}]} {
    %c0 = arith.constant 0 : index
    %c0_0 = arith.constant 0 : index
    %0 = vector.load %arg1[%c0, %c0_0] : memref<8x128xf32, #tpu.memory_space<vmem>>, vector<8x128xf32>
    %c0_1 = arith.constant 0 : index
    %c0_2 = arith.constant 0 : index
    %1 = vector.load %arg2[%c0_1, %c0_2] : memref<8x128xf32, #tpu.memory_space<vmem>>, vector<8x128xf32>
    tpu.vector_store %arg2[%c0_1, %c0_2], %0 {strides = array<i32>} : memref<8x128xf32, #tpu.memory_space<vmem>>, vector<8x128xf32>,
    return
  }
  func.func @transform_0(%arg0: i32) -> (i32, i32) {
    %c0_i32 = arith.constant 0 : i32
    %c0_i32_0 = arith.constant 0 : i32
    %c0_i32_1 = arith.constant 0 : i32
    return %c0_i32, %c0_i32_0 : i32, i32
  }
  func.func @transform_1(%arg0: i32) -> (i32, i32) {
    %c0_i32 = arith.constant 0 : i32
    %c0_i32_0 = arith.constant 0 : i32
    %c0_i32_1 = arith.constant 0 : i32
    return %c0_i32, %c0_i32_0 : i32, i32
  }
}

module attributes {stable_mosaic.version = 11 : i64} {
  func.func @layernorm_kernel(%arg0: i32, %arg1: memref<32x128xbf16, #tpu.memory_space<vmem>>, %arg2: memref<1x128xf32, #tpu.memory_space<vmem>>, %arg3: memref<1x128xf32, #tpu.memory_space<vmem>>, %arg4: memref<32x128xbf16, #tpu.memory_space<vmem>>) attributes {dimension_semantics = [#tpu.dimension_semantics<parallel>], iteration_bounds = array<i64: 1>, scalar_prefetch = 0 : i64, scratch_operands = 0 : i64, tpu.core_type = #tpu.core_type<tc>, window_params = [{transform_indices = @transform_0, window_bounds = array<i64: 32, 128>}, {pipeline_mode = #tpu.pipeline_mode<synchronous>, transform_indices = @transform_1, window_bounds = array<i64: 1, 128>}, {pipeline_mode = #tpu.pipeline_mode<synchronous>, transform_indices = @transform_2, window_bounds = array<i64: 1, 128>}, {transform_indices = @transform_3, window_bounds = array<i64: 32, 128>}]} {
    %c0 = arith.constant 0 : index
    %c0_0 = arith.constant 0 : index
    %0 = vector.load %arg1[%c0, %c0_0] : memref<32x128xbf16, #tpu.memory_space<vmem>>, vector<32x128xbf16>
    %1 = arith.extf %0 : vector<32x128xbf16> to vector<32x128xf32>
    %c0_1 = arith.constant 0 : index
    %c0_2 = arith.constant 0 : index
    %2 = vector.load %arg2[%c0_1, %c0_2] : memref<1x128xf32, #tpu.memory_space<vmem>>, vector<1x128xf32>
    %c0_3 = arith.constant 0 : index
    %c0_4 = arith.constant 0 : index
    %3 = vector.load %arg3[%c0_3, %c0_4] : memref<1x128xf32, #tpu.memory_space<vmem>>, vector<1x128xf32>
    %cst = arith.constant dense<0.000000e+00> : vector<32xf32>
    %4 = vector.multi_reduction <add>, %1, %cst [1] : vector<32x128xf32> to vector<32xf32>
    %5 = vector.shape_cast %4 : vector<32xf32> to vector<32x1xf32>
    %cst_5 = arith.constant 1.280000e+02 : f32
    %6 = vector.broadcast %cst_5 : f32 to vector<32x1xf32>
    %7 = arith.divf %5, %6 : vector<32x1xf32>
    %8 = vector.broadcast %7 : vector<32x1xf32> to vector<32x128xf32>
    %9 = arith.subf %1, %8 : vector<32x128xf32>
    %10 = arith.mulf %9, %9 : vector<32x128xf32>
    %cst_6 = arith.constant dense<0.000000e+00> : vector<32xf32>
    %11 = vector.multi_reduction <add>, %10, %cst_6 [1] : vector<32x128xf32> to vector<32xf32>
    %12 = vector.shape_cast %11 : vector<32xf32> to vector<32x1xf32>
    %cst_7 = arith.constant 1.280000e+02 : f32
    %13 = vector.broadcast %cst_7 : f32 to vector<32x1xf32>
    %14 = arith.divf %12, %13 : vector<32x1xf32>
    %15 = vector.broadcast %7 : vector<32x1xf32> to vector<32x128xf32>
    %16 = arith.subf %1, %15 : vector<32x128xf32>
    %cst_8 = arith.constant 9.99999996E-13 : f32
    %17 = vector.broadcast %cst_8 : f32 to vector<32x1xf32>
    %18 = arith.addf %14, %17 : vector<32x1xf32>
    %19 = math.rsqrt %18 : vector<32x1xf32>
    %20 = vector.broadcast %19 : vector<32x1xf32> to vector<32x128xf32>
    %21 = arith.mulf %16, %20 : vector<32x128xf32>
    %22 = vector.broadcast %2 : vector<1x128xf32> to vector<32x128xf32>
    %23 = arith.mulf %21, %22 : vector<32x128xf32>
    %24 = vector.broadcast %3 : vector<1x128xf32> to vector<32x128xf32>
    %25 = arith.addf %23, %24 : vector<32x128xf32>
    %26 = arith.truncf %25 : vector<32x128xf32> to vector<32x128xbf16>
    %c0_9 = arith.constant 0 : index
    %c0_10 = arith.constant 0 : index
    %27 = vector.load %arg4[%c0_9, %c0_10] : memref<32x128xbf16, #tpu.memory_space<vmem>>, vector<32x128xbf16>
    tpu.vector_store %arg4[%c0_9, %c0_10], %26 {strides = array<i32>} : memref<32x128xbf16, #tpu.memory_space<vmem>>, vector<32x128xbf16>,
    return
  }
  func.func @transform_0(%arg0: i32) -> (i32, i32) {
    %c0_i32 = arith.constant 0 : i32
    %c0_i32_0 = arith.constant 0 : i32
    return %arg0, %c0_i32 : i32, i32
  }
  func.func @transform_1(%arg0: i32) -> (i32, i32) {
    %c0_i32 = arith.constant 0 : i32
    %c0_i32_0 = arith.constant 0 : i32
    %c0_i32_1 = arith.constant 0 : i32
    return %c0_i32, %c0_i32_0 : i32, i32
  }
  func.func @transform_2(%arg0: i32) -> (i32, i32) {
    %c0_i32 = arith.constant 0 : i32
    %c0_i32_0 = arith.constant 0 : i32
    %c0_i32_1 = arith.constant 0 : i32
    return %c0_i32, %c0_i32_0 : i32, i32
  }
  func.func @transform_3(%arg0: i32) -> (i32, i32) {
    %c0_i32 = arith.constant 0 : i32
    %c0_i32_0 = arith.constant 0 : i32
    return %arg0, %c0_i32 : i32, i32
  }
}

module attributes {stable_mosaic.version = 11 : i64} {
  func.func @linear_kernel(%arg0: i32, %arg1: memref<32x128xbf16, #tpu.memory_space<vmem>>, %arg2: memref<128x384xbf16, #tpu.memory_space<vmem>>, %arg3: memref<1x384xf32, #tpu.memory_space<vmem>>, %arg4: memref<32x384xbf16, #tpu.memory_space<vmem>>) attributes {dimension_semantics = [#tpu.dimension_semantics<parallel>], iteration_bounds = array<i64: 1>, scalar_prefetch = 0 : i64, scratch_operands = 0 : i64, tpu.core_type = #tpu.core_type<tc>, window_params = [{pipeline_mode = #tpu.pipeline_mode<synchronous>, transform_indices = @transform_0, window_bounds = array<i64: 32, 128>}, {transform_indices = @transform_1, window_bounds = array<i64: 128, 384>}, {transform_indices = @transform_2, window_bounds = array<i64: 1, 384>}, {transform_indices = @transform_3, window_bounds = array<i64: 32, 384>}]} {
    %c0 = arith.constant 0 : index
    %c0_0 = arith.constant 0 : index
    %0 = vector.load %arg1[%c0, %c0_0] : memref<32x128xbf16, #tpu.memory_space<vmem>>, vector<32x128xbf16>
    %c0_1 = arith.constant 0 : index
    %c0_2 = arith.constant 0 : index
    %1 = vector.load %arg2[%c0_1, %c0_2] : memref<128x384xbf16, #tpu.memory_space<vmem>>, vector<128x384xbf16>
    %cst = arith.constant dense<0.000000e+00> : vector<32x384xf32>
    %2 = tpu.matmul %0, %1, %cst {dimension_numbers = #tpu.dot_dimension_numbers<[1], [0], [0], [1], [0, 0, 1, 1], [], []>} : vector<32x128xbf16>, vector<128x384xbf16>, vector<32x384xf32> -> vector<32x384xf32>
    %c0_3 = arith.constant 0 : index
    %c0_4 = arith.constant 0 : index
    %3 = vector.load %arg3[%c0_3, %c0_4] : memref<1x384xf32, #tpu.memory_space<vmem>>, vector<1x384xf32>
    %4 = vector.broadcast %3 : vector<1x384xf32> to vector<32x384xf32>
    %5 = arith.addf %2, %4 : vector<32x384xf32>
    %6 = arith.truncf %5 : vector<32x384xf32> to vector<32x384xbf16>
    %c0_5 = arith.constant 0 : index
    %c0_6 = arith.constant 0 : index
    %7 = vector.load %arg4[%c0_5, %c0_6] : memref<32x384xbf16, #tpu.memory_space<vmem>>, vector<32x384xbf16>
    tpu.vector_store %arg4[%c0_5, %c0_6], %6 {strides = array<i32>} : memref<32x384xbf16, #tpu.memory_space<vmem>>, vector<32x384xbf16>,
    return
  }
  func.func @transform_0(%arg0: i32) -> (i32, i32) {
    %c0_i32 = arith.constant 0 : i32
    %c0_i32_0 = arith.constant 0 : i32
    %c0_i32_1 = arith.constant 0 : i32
    return %c0_i32, %c0_i32_0 : i32, i32
  }
  func.func @transform_1(%arg0: i32) -> (i32, i32) {
    %c0_i32 = arith.constant 0 : i32
    %c0_i32_0 = arith.constant 0 : i32
    return %c0_i32, %arg0 : i32, i32
  }
  func.func @transform_2(%arg0: i32) -> (i32, i32) {
    %c0_i32 = arith.constant 0 : i32
    %c0_i32_0 = arith.constant 0 : i32
    return %c0_i32, %arg0 : i32, i32
  }
  func.func @transform_3(%arg0: i32) -> (i32, i32) {
    %c0_i32 = arith.constant 0 : i32
    %c0_i32_0 = arith.constant 0 : i32
    return %c0_i32, %arg0 : i32, i32
  }
}

module attributes {stable_mosaic.version = 11 : i64} {
  func.func @attention_group_kernel(%arg0: i32, %arg1: i32, %arg2: memref<1x16x128xbf16, #tpu.memory_space<vmem>>, %arg3: memref<1x16x128xbf16, #tpu.memory_space<vmem>>, %arg4: memref<1x16x128xbf16, #tpu.memory_space<vmem>>, %arg5: memref<1x1x16xf32, #tpu.memory_space<vmem>>, %arg6: memref<1x16x128xbf16, #tpu.memory_space<vmem>>) attributes {dimension_semantics = [#tpu.dimension_semantics<parallel>, #tpu.dimension_semantics<parallel>], iteration_bounds = array<i64: 2, 1>, scalar_prefetch = 0 : i64, scratch_operands = 0 : i64, tpu.core_type = #tpu.core_type<tc>, window_params = [{transform_indices = @transform_0, window_bounds = array<i64: 1, 16, 128>}, {transform_indices = @transform_1, window_bounds = array<i64: 1, 16, 128>}, {transform_indices = @transform_2, window_bounds = array<i64: 1, 16, 128>}, {transform_indices = @transform_3, window_bounds = array<i64: 1, 1, 16>}, {transform_indices = @transform_4, window_bounds = array<i64: 1, 16, 128>}]} {
    %c0 = arith.constant 0 : index
    %c0_0 = arith.constant 0 : index
    %c0_1 = arith.constant 0 : index
    %0 = vector.load %arg2[%c0, %c0_0, %c0_1] : memref<1x16x128xbf16, #tpu.memory_space<vmem>>, vector<1x16x128xbf16>
    %1 = vector.shape_cast %0 : vector<1x16x128xbf16> to vector<16x128xbf16>
    %c0_2 = arith.constant 0 : index
    %c0_3 = arith.constant 0 : index
    %c0_4 = arith.constant 0 : index
    %2 = vector.load %arg3[%c0_2, %c0_3, %c0_4] : memref<1x16x128xbf16, #tpu.memory_space<vmem>>, vector<1x16x128xbf16>
    %3 = vector.shape_cast %2 : vector<1x16x128xbf16> to vector<16x128xbf16>
    %c0_5 = arith.constant 0 : index
    %c0_6 = arith.constant 0 : index
    %c0_7 = arith.constant 0 : index
    %4 = vector.load %arg4[%c0_5, %c0_6, %c0_7] : memref<1x16x128xbf16, #tpu.memory_space<vmem>>, vector<1x16x128xbf16>
    %5 = vector.shape_cast %4 : vector<1x16x128xbf16> to vector<16x128xbf16>
    %c0_8 = arith.constant 0 : index
    %c0_9 = arith.constant 0 : index
    %c0_10 = arith.constant 0 : index
    %6 = vector.load %arg5[%c0_8, %c0_9, %c0_10] : memref<1x1x16xf32, #tpu.memory_space<vmem>>, vector<1x1x16xf32>
    %7 = vector.shape_cast %6 : vector<1x1x16xf32> to vector<1x16xf32>
    %8 = vector.extract_strided_slice %1 {offsets = [0, 0], sizes = [16, 64], strides = [1, 1]} : vector<16x128xbf16> to vector<16x64xbf16>
    %9 = vector.extract_strided_slice %3 {offsets = [0, 0], sizes = [16, 64], strides = [1, 1]} : vector<16x128xbf16> to vector<16x64xbf16>
    %cst = arith.constant dense<0.000000e+00> : vector<16x16xf32>
    %10 = tpu.matmul %8, %9, %cst {dimension_numbers = #tpu.dot_dimension_numbers<[1], [1], [0], [0], [0, 0, 1, 0], [], []>} : vector<16x64xbf16>, vector<16x64xbf16>, vector<16x16xf32> -> vector<16x16xf32>
    %11 = vector.broadcast %7 : vector<1x16xf32> to vector<16x16xf32>
    %12 = arith.addf %10, %11 : vector<16x16xf32>
    %cst_11 = arith.constant dense<0xFF800000> : vector<16xf32>
    %13 = vector.multi_reduction <maximumf>, %12, %cst_11 [1] : vector<16x16xf32> to vector<16xf32>
    %14 = vector.shape_cast %13 : vector<16xf32> to vector<16x1xf32>
    %15 = vector.broadcast %14 : vector<16x1xf32> to vector<16x16xf32>
    %16 = arith.subf %12, %15 : vector<16x16xf32>
    %17 = math.exp %16 : vector<16x16xf32>
    %cst_12 = arith.constant dense<0.000000e+00> : vector<16xf32>
    %18 = vector.multi_reduction <add>, %17, %cst_12 [1] : vector<16x16xf32> to vector<16xf32>
    %19 = vector.shape_cast %18 : vector<16xf32> to vector<16x1xf32>
    %20 = tpu.reciprocal %19 {approx = true} : vector<16x1xf32> -> vector<16x1xf32>
    %21 = vector.broadcast %20 : vector<16x1xf32> to vector<16x16xf32>
    %22 = arith.mulf %17, %21 : vector<16x16xf32>
    %23 = arith.truncf %22 : vector<16x16xf32> to vector<16x16xbf16>
    %24 = vector.extract_strided_slice %5 {offsets = [0, 0], sizes = [16, 64], strides = [1, 1]} : vector<16x128xbf16> to vector<16x64xbf16>
    %cst_13 = arith.constant dense<0.000000e+00> : vector<16x64xf32>
    %25 = tpu.matmul %23, %24, %cst_13 {dimension_numbers = #tpu.dot_dimension_numbers<[1], [0], [0], [1], [0, 0, 1, 1], [], []>} : vector<16x16xbf16>, vector<16x64xbf16>, vector<16x64xf32> -> vector<16x64xf32>
    %26 = vector.extract_strided_slice %1 {offsets = [0, 64], sizes = [16, 64], strides = [1, 1]} : vector<16x128xbf16> to vector<16x64xbf16>
    %27 = vector.extract_strided_slice %3 {offsets = [0, 64], sizes = [16, 64], strides = [1, 1]} : vector<16x128xbf16> to vector<16x64xbf16>
    %cst_14 = arith.constant dense<0.000000e+00> : vector<16x16xf32>
    %28 = tpu.matmul %26, %27, %cst_14 {dimension_numbers = #tpu.dot_dimension_numbers<[1], [1], [0], [0], [0, 0, 1, 0], [], []>} : vector<16x64xbf16>, vector<16x64xbf16>, vector<16x16xf32> -> vector<16x16xf32>
    %29 = vector.broadcast %7 : vector<1x16xf32> to vector<16x16xf32>
    %30 = arith.addf %28, %29 : vector<16x16xf32>
    %cst_15 = arith.constant dense<0xFF800000> : vector<16xf32>
    %31 = vector.multi_reduction <maximumf>, %30, %cst_15 [1] : vector<16x16xf32> to vector<16xf32>
    %32 = vector.shape_cast %31 : vector<16xf32> to vector<16x1xf32>
    %33 = vector.broadcast %32 : vector<16x1xf32> to vector<16x16xf32>
    %34 = arith.subf %30, %33 : vector<16x16xf32>
    %35 = math.exp %34 : vector<16x16xf32>
    %cst_16 = arith.constant dense<0.000000e+00> : vector<16xf32>
    %36 = vector.multi_reduction <add>, %35, %cst_16 [1] : vector<16x16xf32> to vector<16xf32>
    %37 = vector.shape_cast %36 : vector<16xf32> to vector<16x1xf32>
    %38 = tpu.reciprocal %37 {approx = true} : vector<16x1xf32> -> vector<16x1xf32>
    %39 = vector.broadcast %38 : vector<16x1xf32> to vector<16x16xf32>
    %40 = arith.mulf %35, %39 : vector<16x16xf32>
    %41 = arith.truncf %40 : vector<16x16xf32> to vector<16x16xbf16>
    %42 = vector.extract_strided_slice %5 {offsets = [0, 64], sizes = [16, 64], strides = [1, 1]} : vector<16x128xbf16> to vector<16x64xbf16>
    %cst_17 = arith.constant dense<0.000000e+00> : vector<16x64xf32>
    %43 = tpu.matmul %41, %42, %cst_17 {dimension_numbers = #tpu.dot_dimension_numbers<[1], [0], [0], [1], [0, 0, 1, 1], [], []>} : vector<16x16xbf16>, vector<16x64xbf16>, vector<16x64xf32> -> vector<16x64xf32>
    %44 = tpu.concatenate %25, %43 in 1 : vector<16x64xf32>, vector<16x64xf32> -> vector<16x128xf32>
    %45 = arith.truncf %44 : vector<16x128xf32> to vector<16x128xbf16>
    %c0_18 = arith.constant 0 : index
    %c0_19 = arith.constant 0 : index
    %c0_20 = arith.constant 0 : index
    %46 = vector.load %arg6[%c0_18, %c0_19, %c0_20] : memref<1x16x128xbf16, #tpu.memory_space<vmem>>, vector<1x16x128xbf16>
    %47 = vector.shape_cast %46 : vector<1x16x128xbf16> to vector<16x128xbf16>
    %48 = vector.shape_cast %45 : vector<16x128xbf16> to vector<1x16x128xbf16>
    tpu.vector_store %arg6[%c0_18, %c0_19, %c0_20], %48 {strides = array<i32>} : memref<1x16x128xbf16, #tpu.memory_space<vmem>>, vector<1x16x128xbf16>,
    return
  }
  func.func @transform_0(%arg0: i32, %arg1: i32) -> (i32, i32, i32) {
    %c0_i32 = arith.constant 0 : i32
    %c0_i32_0 = arith.constant 0 : i32
    return %arg0, %c0_i32, %arg1 : i32, i32, i32
  }
  func.func @transform_1(%arg0: i32, %arg1: i32) -> (i32, i32, i32) {
    %c1_i32 = arith.constant 1 : i32
    %0 = arith.addi %c1_i32, %arg1 : i32
    %c0_i32 = arith.constant 0 : i32
    %c0_i32_0 = arith.constant 0 : i32
    return %arg0, %c0_i32, %0 : i32, i32, i32
  }
  func.func @transform_2(%arg0: i32, %arg1: i32) -> (i32, i32, i32) {
    %c2_i32 = arith.constant 2 : i32
    %0 = arith.addi %c2_i32, %arg1 : i32
    %c0_i32 = arith.constant 0 : i32
    %c0_i32_0 = arith.constant 0 : i32
    return %arg0, %c0_i32, %0 : i32, i32, i32
  }
  func.func @transform_3(%arg0: i32, %arg1: i32) -> (i32, i32, i32) {
    %c0_i32 = arith.constant 0 : i32
    %c0_i32_0 = arith.constant 0 : i32
    %c0_i32_1 = arith.constant 0 : i32
    return %arg0, %c0_i32, %c0_i32_0 : i32, i32, i32
  }
  func.func @transform_4(%arg0: i32, %arg1: i32) -> (i32, i32, i32) {
    %c0_i32 = arith.constant 0 : i32
    %c0_i32_0 = arith.constant 0 : i32
    return %arg0, %c0_i32, %arg1 : i32, i32, i32
  }
}

module attributes {stable_mosaic.version = 11 : i64} {
  func.func @linear_res_ln_kernel(%arg0: i32, %arg1: memref<32x128xbf16, #tpu.memory_space<vmem>>, %arg2: memref<128x128xbf16, #tpu.memory_space<vmem>>, %arg3: memref<1x128xf32, #tpu.memory_space<vmem>>, %arg4: memref<32x128xbf16, #tpu.memory_space<vmem>>, %arg5: memref<1x128xf32, #tpu.memory_space<vmem>>, %arg6: memref<1x128xf32, #tpu.memory_space<vmem>>, %arg7: memref<32x128xbf16, #tpu.memory_space<vmem>>) attributes {dimension_semantics = [#tpu.dimension_semantics<parallel>], iteration_bounds = array<i64: 1>, scalar_prefetch = 0 : i64, scratch_operands = 0 : i64, tpu.core_type = #tpu.core_type<tc>, window_params = [{transform_indices = @transform_0, window_bounds = array<i64: 32, 128>}, {pipeline_mode = #tpu.pipeline_mode<synchronous>, transform_indices = @transform_1, window_bounds = array<i64: 128, 128>}, {pipeline_mode = #tpu.pipeline_mode<synchronous>, transform_indices = @transform_2, window_bounds = array<i64: 1, 128>}, {transform_indices = @transform_3, window_bounds = array<i64: 32, 128>}, {pipeline_mode = #tpu.pipeline_mode<synchronous>, transform_indices = @transform_4, window_bounds = array<i64: 1, 128>}, {pipeline_mode = #tpu.pipeline_mode<synchronous>, transform_indices = @transform_5, window_bounds = array<i64: 1, 128>}, {transform_indices = @transform_6, window_bounds = array<i64: 32, 128>}]} {
    %c0 = arith.constant 0 : index
    %c0_0 = arith.constant 0 : index
    %0 = vector.load %arg1[%c0, %c0_0] : memref<32x128xbf16, #tpu.memory_space<vmem>>, vector<32x128xbf16>
    %c0_1 = arith.constant 0 : index
    %c0_2 = arith.constant 0 : index
    %1 = vector.load %arg2[%c0_1, %c0_2] : memref<128x128xbf16, #tpu.memory_space<vmem>>, vector<128x128xbf16>
    %cst = arith.constant dense<0.000000e+00> : vector<32x128xf32>
    %2 = tpu.matmul %0, %1, %cst {dimension_numbers = #tpu.dot_dimension_numbers<[1], [0], [0], [1], [0, 0, 1, 1], [], []>} : vector<32x128xbf16>, vector<128x128xbf16>, vector<32x128xf32> -> vector<32x128xf32>
    %c0_3 = arith.constant 0 : index
    %c0_4 = arith.constant 0 : index
    %3 = vector.load %arg3[%c0_3, %c0_4] : memref<1x128xf32, #tpu.memory_space<vmem>>, vector<1x128xf32>
    %4 = vector.broadcast %3 : vector<1x128xf32> to vector<32x128xf32>
    %5 = arith.addf %2, %4 : vector<32x128xf32>
    %c0_5 = arith.constant 0 : index
    %c0_6 = arith.constant 0 : index
    %6 = vector.load %arg4[%c0_5, %c0_6] : memref<32x128xbf16, #tpu.memory_space<vmem>>, vector<32x128xbf16>
    %7 = arith.extf %6 : vector<32x128xbf16> to vector<32x128xf32>
    %8 = arith.addf %5, %7 : vector<32x128xf32>
    %c0_7 = arith.constant 0 : index
    %c0_8 = arith.constant 0 : index
    %9 = vector.load %arg5[%c0_7, %c0_8] : memref<1x128xf32, #tpu.memory_space<vmem>>, vector<1x128xf32>
    %c0_9 = arith.constant 0 : index
    %c0_10 = arith.constant 0 : index
    %10 = vector.load %arg6[%c0_9, %c0_10] : memref<1x128xf32, #tpu.memory_space<vmem>>, vector<1x128xf32>
    %cst_11 = arith.constant dense<0.000000e+00> : vector<32xf32>
    %11 = vector.multi_reduction <add>, %8, %cst_11 [1] : vector<32x128xf32> to vector<32xf32>
    %12 = vector.shape_cast %11 : vector<32xf32> to vector<32x1xf32>
    %cst_12 = arith.constant 1.280000e+02 : f32
    %13 = vector.broadcast %cst_12 : f32 to vector<32x1xf32>
    %14 = arith.divf %12, %13 : vector<32x1xf32>
    %15 = vector.broadcast %14 : vector<32x1xf32> to vector<32x128xf32>
    %16 = arith.subf %8, %15 : vector<32x128xf32>
    %17 = arith.mulf %16, %16 : vector<32x128xf32>
    %cst_13 = arith.constant dense<0.000000e+00> : vector<32xf32>
    %18 = vector.multi_reduction <add>, %17, %cst_13 [1] : vector<32x128xf32> to vector<32xf32>
    %19 = vector.shape_cast %18 : vector<32xf32> to vector<32x1xf32>
    %cst_14 = arith.constant 1.280000e+02 : f32
    %20 = vector.broadcast %cst_14 : f32 to vector<32x1xf32>
    %21 = arith.divf %19, %20 : vector<32x1xf32>
    %22 = vector.broadcast %14 : vector<32x1xf32> to vector<32x128xf32>
    %23 = arith.subf %8, %22 : vector<32x128xf32>
    %cst_15 = arith.constant 9.99999996E-13 : f32
    %24 = vector.broadcast %cst_15 : f32 to vector<32x1xf32>
    %25 = arith.addf %21, %24 : vector<32x1xf32>
    %26 = math.rsqrt %25 : vector<32x1xf32>
    %27 = vector.broadcast %26 : vector<32x1xf32> to vector<32x128xf32>
    %28 = arith.mulf %23, %27 : vector<32x128xf32>
    %29 = vector.broadcast %9 : vector<1x128xf32> to vector<32x128xf32>
    %30 = arith.mulf %28, %29 : vector<32x128xf32>
    %31 = vector.broadcast %10 : vector<1x128xf32> to vector<32x128xf32>
    %32 = arith.addf %30, %31 : vector<32x128xf32>
    %33 = arith.truncf %32 : vector<32x128xf32> to vector<32x128xbf16>
    %c0_16 = arith.constant 0 : index
    %c0_17 = arith.constant 0 : index
    %34 = vector.load %arg7[%c0_16, %c0_17] : memref<32x128xbf16, #tpu.memory_space<vmem>>, vector<32x128xbf16>
    tpu.vector_store %arg7[%c0_16, %c0_17], %33 {strides = array<i32>} : memref<32x128xbf16, #tpu.memory_space<vmem>>, vector<32x128xbf16>,
    return
  }
  func.func @transform_0(%arg0: i32) -> (i32, i32) {
    %c0_i32 = arith.constant 0 : i32
    %c0_i32_0 = arith.constant 0 : i32
    return %arg0, %c0_i32 : i32, i32
  }
  func.func @transform_1(%arg0: i32) -> (i32, i32) {
    %c0_i32 = arith.constant 0 : i32
    %c0_i32_0 = arith.constant 0 : i32
    %c0_i32_1 = arith.constant 0 : i32
    return %c0_i32, %c0_i32_0 : i32, i32
  }
  func.func @transform_2(%arg0: i32) -> (i32, i32) {
    %c0_i32 = arith.constant 0 : i32
    %c0_i32_0 = arith.constant 0 : i32
    %c0_i32_1 = arith.constant 0 : i32
    return %c0_i32, %c0_i32_0 : i32, i32
  }
  func.func @transform_3(%arg0: i32) -> (i32, i32) {
    %c0_i32 = arith.constant 0 : i32
    %c0_i32_0 = arith.constant 0 : i32
    return %arg0, %c0_i32 : i32, i32
  }
  func.func @transform_4(%arg0: i32) -> (i32, i32) {
    %c0_i32 = arith.constant 0 : i32
    %c0_i32_0 = arith.constant 0 : i32
    %c0_i32_1 = arith.constant 0 : i32
    return %c0_i32, %c0_i32_0 : i32, i32
  }
  func.func @transform_5(%arg0: i32) -> (i32, i32) {
    %c0_i32 = arith.constant 0 : i32
    %c0_i32_0 = arith.constant 0 : i32
    %c0_i32_1 = arith.constant 0 : i32
    return %c0_i32, %c0_i32_0 : i32, i32
  }
  func.func @transform_6(%arg0: i32) -> (i32, i32) {
    %c0_i32 = arith.constant 0 : i32
    %c0_i32_0 = arith.constant 0 : i32
    return %arg0, %c0_i32 : i32, i32
  }
}

module attributes {stable_mosaic.version = 11 : i64} {
  func.func @linear_kernel(%arg0: i32, %arg1: memref<32x128xbf16, #tpu.memory_space<vmem>>, %arg2: memref<128x512xbf16, #tpu.memory_space<vmem>>, %arg3: memref<1x512xf32, #tpu.memory_space<vmem>>, %arg4: memref<32x512xbf16, #tpu.memory_space<vmem>>) attributes {dimension_semantics = [#tpu.dimension_semantics<parallel>], iteration_bounds = array<i64: 1>, scalar_prefetch = 0 : i64, scratch_operands = 0 : i64, tpu.core_type = #tpu.core_type<tc>, window_params = [{pipeline_mode = #tpu.pipeline_mode<synchronous>, transform_indices = @transform_0, window_bounds = array<i64: 32, 128>}, {transform_indices = @transform_1, window_bounds = array<i64: 128, 512>}, {transform_indices = @transform_2, window_bounds = array<i64: 1, 512>}, {transform_indices = @transform_3, window_bounds = array<i64: 32, 512>}]} {
    %c0 = arith.constant 0 : index
    %c0_0 = arith.constant 0 : index
    %0 = vector.load %arg1[%c0, %c0_0] : memref<32x128xbf16, #tpu.memory_space<vmem>>, vector<32x128xbf16>
    %c0_1 = arith.constant 0 : index
    %c0_2 = arith.constant 0 : index
    %1 = vector.load %arg2[%c0_1, %c0_2] : memref<128x512xbf16, #tpu.memory_space<vmem>>, vector<128x512xbf16>
    %cst = arith.constant dense<0.000000e+00> : vector<32x512xf32>
    %2 = tpu.matmul %0, %1, %cst {dimension_numbers = #tpu.dot_dimension_numbers<[1], [0], [0], [1], [0, 0, 1, 1], [], []>} : vector<32x128xbf16>, vector<128x512xbf16>, vector<32x512xf32> -> vector<32x512xf32>
    %c0_3 = arith.constant 0 : index
    %c0_4 = arith.constant 0 : index
    %3 = vector.load %arg3[%c0_3, %c0_4] : memref<1x512xf32, #tpu.memory_space<vmem>>, vector<1x512xf32>
    %4 = vector.broadcast %3 : vector<1x512xf32> to vector<32x512xf32>
    %5 = arith.addf %2, %4 : vector<32x512xf32>
    %cst_5 = arith.constant 5.000000e-01 : f32
    %6 = vector.broadcast %cst_5 : f32 to vector<32x512xf32>
    %7 = arith.mulf %6, %5 : vector<32x512xf32>
    %cst_6 = arith.constant 4.471500e-02 : f32
    %8 = vector.broadcast %cst_6 : f32 to vector<32x512xf32>
    %9 = arith.mulf %8, %5 : vector<32x512xf32>
    %10 = arith.mulf %9, %5 : vector<32x512xf32>
    %11 = arith.mulf %10, %5 : vector<32x512xf32>
    %12 = arith.addf %5, %11 : vector<32x512xf32>
    %cst_7 = arith.constant 0.797884583 : f32
    %13 = vector.broadcast %cst_7 : f32 to vector<32x512xf32>
    %14 = arith.mulf %13, %12 : vector<32x512xf32>
    %15 = math.tanh %14 : vector<32x512xf32>
    %cst_8 = arith.constant 1.000000e+00 : f32
    %16 = vector.broadcast %cst_8 : f32 to vector<32x512xf32>
    %17 = arith.addf %16, %15 : vector<32x512xf32>
    %18 = arith.mulf %7, %17 : vector<32x512xf32>
    %19 = arith.truncf %18 : vector<32x512xf32> to vector<32x512xbf16>
    %c0_9 = arith.constant 0 : index
    %c0_10 = arith.constant 0 : index
    %20 = vector.load %arg4[%c0_9, %c0_10] : memref<32x512xbf16, #tpu.memory_space<vmem>>, vector<32x512xbf16>
    tpu.vector_store %arg4[%c0_9, %c0_10], %19 {strides = array<i32>} : memref<32x512xbf16, #tpu.memory_space<vmem>>, vector<32x512xbf16>,
    return
  }
  func.func @transform_0(%arg0: i32) -> (i32, i32) {
    %c0_i32 = arith.constant 0 : i32
    %c0_i32_0 = arith.constant 0 : i32
    %c0_i32_1 = arith.constant 0 : i32
    return %c0_i32, %c0_i32_0 : i32, i32
  }
  func.func @transform_1(%arg0: i32) -> (i32, i32) {
    %c0_i32 = arith.constant 0 : i32
    %c0_i32_0 = arith.constant 0 : i32
    return %c0_i32, %arg0 : i32, i32
  }
  func.func @transform_2(%arg0: i32) -> (i32, i32) {
    %c0_i32 = arith.constant 0 : i32
    %c0_i32_0 = arith.constant 0 : i32
    return %c0_i32, %arg0 : i32, i32
  }
  func.func @transform_3(%arg0: i32) -> (i32, i32) {
    %c0_i32 = arith.constant 0 : i32
    %c0_i32_0 = arith.constant 0 : i32
    return %c0_i32, %arg0 : i32, i32
  }
}

module attributes {stable_mosaic.version = 11 : i64} {
  func.func @linear_res_ln_kernel(%arg0: i32, %arg1: memref<32x512xbf16, #tpu.memory_space<vmem>>, %arg2: memref<512x128xbf16, #tpu.memory_space<vmem>>, %arg3: memref<1x128xf32, #tpu.memory_space<vmem>>, %arg4: memref<32x128xbf16, #tpu.memory_space<vmem>>, %arg5: memref<1x128xf32, #tpu.memory_space<vmem>>, %arg6: memref<1x128xf32, #tpu.memory_space<vmem>>, %arg7: memref<32x128xbf16, #tpu.memory_space<vmem>>) attributes {dimension_semantics = [#tpu.dimension_semantics<parallel>], iteration_bounds = array<i64: 1>, scalar_prefetch = 0 : i64, scratch_operands = 0 : i64, tpu.core_type = #tpu.core_type<tc>, window_params = [{transform_indices = @transform_0, window_bounds = array<i64: 32, 512>}, {pipeline_mode = #tpu.pipeline_mode<synchronous>, transform_indices = @transform_1, window_bounds = array<i64: 512, 128>}, {pipeline_mode = #tpu.pipeline_mode<synchronous>, transform_indices = @transform_2, window_bounds = array<i64: 1, 128>}, {transform_indices = @transform_3, window_bounds = array<i64: 32, 128>}, {pipeline_mode = #tpu.pipeline_mode<synchronous>, transform_indices = @transform_4, window_bounds = array<i64: 1, 128>}, {pipeline_mode = #tpu.pipeline_mode<synchronous>, transform_indices = @transform_5, window_bounds = array<i64: 1, 128>}, {transform_indices = @transform_6, window_bounds = array<i64: 32, 128>}]} {
    %c0 = arith.constant 0 : index
    %c0_0 = arith.constant 0 : index
    %0 = vector.load %arg1[%c0, %c0_0] : memref<32x512xbf16, #tpu.memory_space<vmem>>, vector<32x512xbf16>
    %c0_1 = arith.constant 0 : index
    %c0_2 = arith.constant 0 : index
    %1 = vector.load %arg2[%c0_1, %c0_2] : memref<512x128xbf16, #tpu.memory_space<vmem>>, vector<512x128xbf16>
    %cst = arith.constant dense<0.000000e+00> : vector<32x128xf32>
    %2 = tpu.matmul %0, %1, %cst {dimension_numbers = #tpu.dot_dimension_numbers<[1], [0], [0], [1], [0, 0, 1, 1], [], []>} : vector<32x512xbf16>, vector<512x128xbf16>, vector<32x128xf32> -> vector<32x128xf32>
    %c0_3 = arith.constant 0 : index
    %c0_4 = arith.constant 0 : index
    %3 = vector.load %arg3[%c0_3, %c0_4] : memref<1x128xf32, #tpu.memory_space<vmem>>, vector<1x128xf32>
    %4 = vector.broadcast %3 : vector<1x128xf32> to vector<32x128xf32>
    %5 = arith.addf %2, %4 : vector<32x128xf32>
    %c0_5 = arith.constant 0 : index
    %c0_6 = arith.constant 0 : index
    %6 = vector.load %arg4[%c0_5, %c0_6] : memref<32x128xbf16, #tpu.memory_space<vmem>>, vector<32x128xbf16>
    %7 = arith.extf %6 : vector<32x128xbf16> to vector<32x128xf32>
    %8 = arith.addf %5, %7 : vector<32x128xf32>
    %c0_7 = arith.constant 0 : index
    %c0_8 = arith.constant 0 : index
    %9 = vector.load %arg5[%c0_7, %c0_8] : memref<1x128xf32, #tpu.memory_space<vmem>>, vector<1x128xf32>
    %c0_9 = arith.constant 0 : index
    %c0_10 = arith.constant 0 : index
    %10 = vector.load %arg6[%c0_9, %c0_10] : memref<1x128xf32, #tpu.memory_space<vmem>>, vector<1x128xf32>
    %cst_11 = arith.constant dense<0.000000e+00> : vector<32xf32>
    %11 = vector.multi_reduction <add>, %8, %cst_11 [1] : vector<32x128xf32> to vector<32xf32>
    %12 = vector.shape_cast %11 : vector<32xf32> to vector<32x1xf32>
    %cst_12 = arith.constant 1.280000e+02 : f32
    %13 = vector.broadcast %cst_12 : f32 to vector<32x1xf32>
    %14 = arith.divf %12, %13 : vector<32x1xf32>
    %15 = vector.broadcast %14 : vector<32x1xf32> to vector<32x128xf32>
    %16 = arith.subf %8, %15 : vector<32x128xf32>
    %17 = arith.mulf %16, %16 : vector<32x128xf32>
    %cst_13 = arith.constant dense<0.000000e+00> : vector<32xf32>
    %18 = vector.multi_reduction <add>, %17, %cst_13 [1] : vector<32x128xf32> to vector<32xf32>
    %19 = vector.shape_cast %18 : vector<32xf32> to vector<32x1xf32>
    %cst_14 = arith.constant 1.280000e+02 : f32
    %20 = vector.broadcast %cst_14 : f32 to vector<32x1xf32>
    %21 = arith.divf %19, %20 : vector<32x1xf32>
    %22 = vector.broadcast %14 : vector<32x1xf32> to vector<32x128xf32>
    %23 = arith.subf %8, %22 : vector<32x128xf32>
    %cst_15 = arith.constant 9.99999996E-13 : f32
    %24 = vector.broadcast %cst_15 : f32 to vector<32x1xf32>
    %25 = arith.addf %21, %24 : vector<32x1xf32>
    %26 = math.rsqrt %25 : vector<32x1xf32>
    %27 = vector.broadcast %26 : vector<32x1xf32> to vector<32x128xf32>
    %28 = arith.mulf %23, %27 : vector<32x128xf32>
    %29 = vector.broadcast %9 : vector<1x128xf32> to vector<32x128xf32>
    %30 = arith.mulf %28, %29 : vector<32x128xf32>
    %31 = vector.broadcast %10 : vector<1x128xf32> to vector<32x128xf32>
    %32 = arith.addf %30, %31 : vector<32x128xf32>
    %33 = arith.truncf %32 : vector<32x128xf32> to vector<32x128xbf16>
    %c0_16 = arith.constant 0 : index
    %c0_17 = arith.constant 0 : index
    %34 = vector.load %arg7[%c0_16, %c0_17] : memref<32x128xbf16, #tpu.memory_space<vmem>>, vector<32x128xbf16>
    tpu.vector_store %arg7[%c0_16, %c0_17], %33 {strides = array<i32>} : memref<32x128xbf16, #tpu.memory_space<vmem>>, vector<32x128xbf16>,
    return
  }
  func.func @transform_0(%arg0: i32) -> (i32, i32) {
    %c0_i32 = arith.constant 0 : i32
    %c0_i32_0 = arith.constant 0 : i32
    return %arg0, %c0_i32 : i32, i32
  }
  func.func @transform_1(%arg0: i32) -> (i32, i32) {
    %c0_i32 = arith.constant 0 : i32
    %c0_i32_0 = arith.constant 0 : i32
    %c0_i32_1 = arith.constant 0 : i32
    return %c0_i32, %c0_i32_0 : i32, i32
  }
  func.func @transform_2(%arg0: i32) -> (i32, i32) {
    %c0_i32 = arith.constant 0 : i32
    %c0_i32_0 = arith.constant 0 : i32
    %c0_i32_1 = arith.constant 0 : i32
    return %c0_i32, %c0_i32_0 : i32, i32
  }
  func.func @transform_3(%arg0: i32) -> (i32, i32) {
    %c0_i32 = arith.constant 0 : i32
    %c0_i32_0 = arith.constant 0 : i32
    return %arg0, %c0_i32 : i32, i32
  }
  func.func @transform_4(%arg0: i32) -> (i32, i32) {
    %c0_i32 = arith.constant 0 : i32
    %c0_i32_0 = arith.constant 0 : i32
    %c0_i32_1 = arith.constant 0 : i32
    return %c0_i32, %c0_i32_0 : i32, i32
  }
  func.func @transform_5(%arg0: i32) -> (i32, i32) {
    %c0_i32 = arith.constant 0 : i32
    %c0_i32_0 = arith.constant 0 : i32
    %c0_i32_1 = arith.constant 0 : i32
    return %c0_i32, %c0_i32_0 : i32, i32
  }
  func.func @transform_6(%arg0: i32) -> (i32, i32) {
    %c0_i32 = arith.constant 0 : i32
    %c0_i32_0 = arith.constant 0 : i32
    return %arg0, %c0_i32 : i32, i32
  }
}

module attributes {stable_mosaic.version = 11 : i64} {
  func.func @linear_kernel(%arg0: i32, %arg1: memref<32x128xbf16, #tpu.memory_space<vmem>>, %arg2: memref<128x512xbf16, #tpu.memory_space<vmem>>, %arg3: memref<1x512xf32, #tpu.memory_space<vmem>>, %arg4: memref<32x512xf32, #tpu.memory_space<vmem>>) attributes {dimension_semantics = [#tpu.dimension_semantics<parallel>], iteration_bounds = array<i64: 1>, scalar_prefetch = 0 : i64, scratch_operands = 0 : i64, tpu.core_type = #tpu.core_type<tc>, window_params = [{pipeline_mode = #tpu.pipeline_mode<synchronous>, transform_indices = @transform_0, window_bounds = array<i64: 32, 128>}, {transform_indices = @transform_1, window_bounds = array<i64: 128, 512>}, {transform_indices = @transform_2, window_bounds = array<i64: 1, 512>}, {transform_indices = @transform_3, window_bounds = array<i64: 32, 512>}]} {
    %c0 = arith.constant 0 : index
    %c0_0 = arith.constant 0 : index
    %0 = vector.load %arg1[%c0, %c0_0] : memref<32x128xbf16, #tpu.memory_space<vmem>>, vector<32x128xbf16>
    %c0_1 = arith.constant 0 : index
    %c0_2 = arith.constant 0 : index
    %1 = vector.load %arg2[%c0_1, %c0_2] : memref<128x512xbf16, #tpu.memory_space<vmem>>, vector<128x512xbf16>
    %cst = arith.constant dense<0.000000e+00> : vector<32x512xf32>
    %2 = tpu.matmul %0, %1, %cst {dimension_numbers = #tpu.dot_dimension_numbers<[1], [0], [0], [1], [0, 0, 1, 1], [], []>} : vector<32x128xbf16>, vector<128x512xbf16>, vector<32x512xf32> -> vector<32x512xf32>
    %c0_3 = arith.constant 0 : index
    %c0_4 = arith.constant 0 : index
    %3 = vector.load %arg3[%c0_3, %c0_4] : memref<1x512xf32, #tpu.memory_space<vmem>>, vector<1x512xf32>
    %4 = vector.broadcast %3 : vector<1x512xf32> to vector<32x512xf32>
    %5 = arith.addf %2, %4 : vector<32x512xf32>
    %c0_5 = arith.constant 0 : index
    %c0_6 = arith.constant 0 : index
    %6 = vector.load %arg4[%c0_5, %c0_6] : memref<32x512xf32, #tpu.memory_space<vmem>>, vector<32x512xf32>
    tpu.vector_store %arg4[%c0_5, %c0_6], %5 {strides = array<i32>} : memref<32x512xf32, #tpu.memory_space<vmem>>, vector<32x512xf32>,
    return
  }
  func.func @transform_0(%arg0: i32) -> (i32, i32) {
    %c0_i32 = arith.constant 0 : i32
    %c0_i32_0 = arith.constant 0 : i32
    %c0_i32_1 = arith.constant 0 : i32
    return %c0_i32, %c0_i32_0 : i32, i32
  }
  func.func @transform_1(%arg0: i32) -> (i32, i32) {
    %c0_i32 = arith.constant 0 : i32
    %c0_i32_0 = arith.constant 0 : i32
    return %c0_i32, %arg0 : i32, i32
  }
  func.func @transform_2(%arg0: i32) -> (i32, i32) {
    %c0_i32 = arith.constant 0 : i32
    %c0_i32_0 = arith.constant 0 : i32
    return %c0_i32, %arg0 : i32, i32
  }
  func.func @transform_3(%arg0: i32) -> (i32, i32) {
    %c0_i32 = arith.constant 0 : i32
    %c0_i32_0 = arith.constant 0 : i32
    return %c0_i32, %arg0 : i32, i32
  }
}

module attributes {stable_mosaic.version = 11 : i64} {
  func.func @linear_act_ln_kernel(%arg0: i32, %arg1: memref<32x128xbf16, #tpu.memory_space<vmem>>, %arg2: memref<128x128xbf16, #tpu.memory_space<vmem>>, %arg3: memref<1x128xf32, #tpu.memory_space<vmem>>, %arg4: memref<1x128xf32, #tpu.memory_space<vmem>>, %arg5: memref<1x128xf32, #tpu.memory_space<vmem>>, %arg6: memref<32x128xbf16, #tpu.memory_space<vmem>>) attributes {dimension_semantics = [#tpu.dimension_semantics<parallel>], iteration_bounds = array<i64: 1>, scalar_prefetch = 0 : i64, scratch_operands = 0 : i64, tpu.core_type = #tpu.core_type<tc>, window_params = [{transform_indices = @transform_0, window_bounds = array<i64: 32, 128>}, {pipeline_mode = #tpu.pipeline_mode<synchronous>, transform_indices = @transform_1, window_bounds = array<i64: 128, 128>}, {pipeline_mode = #tpu.pipeline_mode<synchronous>, transform_indices = @transform_2, window_bounds = array<i64: 1, 128>}, {pipeline_mode = #tpu.pipeline_mode<synchronous>, transform_indices = @transform_3, window_bounds = array<i64: 1, 128>}, {pipeline_mode = #tpu.pipeline_mode<synchronous>, transform_indices = @transform_4, window_bounds = array<i64: 1, 128>}, {transform_indices = @transform_5, window_bounds = array<i64: 32, 128>}]} {
    %c0 = arith.constant 0 : index
    %c0_0 = arith.constant 0 : index
    %0 = vector.load %arg1[%c0, %c0_0] : memref<32x128xbf16, #tpu.memory_space<vmem>>, vector<32x128xbf16>
    %c0_1 = arith.constant 0 : index
    %c0_2 = arith.constant 0 : index
    %1 = vector.load %arg2[%c0_1, %c0_2] : memref<128x128xbf16, #tpu.memory_space<vmem>>, vector<128x128xbf16>
    %cst = arith.constant dense<0.000000e+00> : vector<32x128xf32>
    %2 = tpu.matmul %0, %1, %cst {dimension_numbers = #tpu.dot_dimension_numbers<[1], [0], [0], [1], [0, 0, 1, 1], [], []>} : vector<32x128xbf16>, vector<128x128xbf16>, vector<32x128xf32> -> vector<32x128xf32>
    %c0_3 = arith.constant 0 : index
    %c0_4 = arith.constant 0 : index
    %3 = vector.load %arg3[%c0_3, %c0_4] : memref<1x128xf32, #tpu.memory_space<vmem>>, vector<1x128xf32>
    %4 = vector.broadcast %3 : vector<1x128xf32> to vector<32x128xf32>
    %5 = arith.addf %2, %4 : vector<32x128xf32>
    %cst_5 = arith.constant 5.000000e-01 : f32
    %6 = vector.broadcast %cst_5 : f32 to vector<32x128xf32>
    %7 = arith.mulf %6, %5 : vector<32x128xf32>
    %cst_6 = arith.constant 0.707106769 : f32
    %8 = vector.broadcast %cst_6 : f32 to vector<32x128xf32>
    %9 = arith.mulf %5, %8 : vector<32x128xf32>
    %10 = math.erf %9 : vector<32x128xf32>
    %cst_7 = arith.constant 1.000000e+00 : f32
    %11 = vector.broadcast %cst_7 : f32 to vector<32x128xf32>
    %12 = arith.addf %11, %10 : vector<32x128xf32>
    %13 = arith.mulf %7, %12 : vector<32x128xf32>
    %c0_8 = arith.constant 0 : index
    %c0_9 = arith.constant 0 : index
    %14 = vector.load %arg4[%c0_8, %c0_9] : memref<1x128xf32, #tpu.memory_space<vmem>>, vector<1x128xf32>
    %c0_10 = arith.constant 0 : index
    %c0_11 = arith.constant 0 : index
    %15 = vector.load %arg5[%c0_10, %c0_11] : memref<1x128xf32, #tpu.memory_space<vmem>>, vector<1x128xf32>
    %cst_12 = arith.constant dense<0.000000e+00> : vector<32xf32>
    %16 = vector.multi_reduction <add>, %13, %cst_12 [1] : vector<32x128xf32> to vector<32xf32>
    %17 = vector.shape_cast %16 : vector<32xf32> to vector<32x1xf32>
    %cst_13 = arith.constant 1.280000e+02 : f32
    %18 = vector.broadcast %cst_13 : f32 to vector<32x1xf32>
    %19 = arith.divf %17, %18 : vector<32x1xf32>
    %20 = vector.broadcast %19 : vector<32x1xf32> to vector<32x128xf32>
    %21 = arith.subf %13, %20 : vector<32x128xf32>
    %22 = arith.mulf %21, %21 : vector<32x128xf32>
    %cst_14 = arith.constant dense<0.000000e+00> : vector<32xf32>
    %23 = vector.multi_reduction <add>, %22, %cst_14 [1] : vector<32x128xf32> to vector<32xf32>
    %24 = vector.shape_cast %23 : vector<32xf32> to vector<32x1xf32>
    %cst_15 = arith.constant 1.280000e+02 : f32
    %25 = vector.broadcast %cst_15 : f32 to vector<32x1xf32>
    %26 = arith.divf %24, %25 : vector<32x1xf32>
    %27 = vector.broadcast %19 : vector<32x1xf32> to vector<32x128xf32>
    %28 = arith.subf %13, %27 : vector<32x128xf32>
    %cst_16 = arith.constant 9.99999996E-13 : f32
    %29 = vector.broadcast %cst_16 : f32 to vector<32x1xf32>
    %30 = arith.addf %26, %29 : vector<32x1xf32>
    %31 = math.rsqrt %30 : vector<32x1xf32>
    %32 = vector.broadcast %31 : vector<32x1xf32> to vector<32x128xf32>
    %33 = arith.mulf %28, %32 : vector<32x128xf32>
    %34 = vector.broadcast %14 : vector<1x128xf32> to vector<32x128xf32>
    %35 = arith.mulf %33, %34 : vector<32x128xf32>
    %36 = vector.broadcast %15 : vector<1x128xf32> to vector<32x128xf32>
    %37 = arith.addf %35, %36 : vector<32x128xf32>
    %38 = arith.truncf %37 : vector<32x128xf32> to vector<32x128xbf16>
    %c0_17 = arith.constant 0 : index
    %c0_18 = arith.constant 0 : index
    %39 = vector.load %arg6[%c0_17, %c0_18] : memref<32x128xbf16, #tpu.memory_space<vmem>>, vector<32x128xbf16>
    tpu.vector_store %arg6[%c0_17, %c0_18], %38 {strides = array<i32>} : memref<32x128xbf16, #tpu.memory_space<vmem>>, vector<32x128xbf16>,
    return
  }
  func.func @transform_0(%arg0: i32) -> (i32, i32) {
    %c0_i32 = arith.constant 0 : i32
    %c0_i32_0 = arith.constant 0 : i32
    return %arg0, %c0_i32 : i32, i32
  }
  func.func @transform_1(%arg0: i32) -> (i32, i32) {
    %c0_i32 = arith.constant 0 : i32
    %c0_i32_0 = arith.constant 0 : i32
    %c0_i32_1 = arith.constant 0 : i32
    return %c0_i32, %c0_i32_0 : i32, i32
  }
  func.func @transform_2(%arg0: i32) -> (i32, i32) {
    %c0_i32 = arith.constant 0 : i32
    %c0_i32_0 = arith.constant 0 : i32
    %c0_i32_1 = arith.constant 0 : i32
    return %c0_i32, %c0_i32_0 : i32, i32
  }
  func.func @transform_3(%arg0: i32) -> (i32, i32) {
    %c0_i32 = arith.constant 0 : i32
    %c0_i32_0 = arith.constant 0 : i32
    %c0_i32_1 = arith.constant 0 : i32
    return %c0_i32, %c0_i32_0 : i32, i32
  }
  func.func @transform_4(%arg0: i32) -> (i32, i32) {
    %c0_i32 = arith.constant 0 : i32
    %c0_i32_0 = arith.constant 0 : i32
    %c0_i32_1 = arith.constant 0 : i32
    return %c0_i32, %c0_i32_0 : i32, i32
  }
  func.func @transform_5(%arg0: i32) -> (i32, i32) {
    %c0_i32 = arith.constant 0 : i32
    %c0_i32_0 = arith.constant 0 : i32
    return %arg0, %c0_i32 : i32, i32
  }
}

</mosaic_0001>

<llo_original>
// kernel: tpu_custom_call.1
$region0: #{tpu_custom_call.1}
  #allocation0 [shape = 'u32[]', space=smem, size = 0x4, offset = 0x4, fixed_abs, tag = 'smem constant byte address 0x4 - core index']
  #allocation1 [shape = 'u32[144,128]{1,0:T(1,128)}', space=vmem, size = 0x12000, scoped, tag = 'internal scratch']
  %s0 = inlined_call_operand.hbm [shape: f32[8,128], index: 0, kind: input, shape index: {}]
  %s1 = inlined_call_operand.hbm [shape: f32[8,128], index: 1, kind: output, shape index: {}]
  %s2 = sld [smem:[#allocation0]]
  $region18: #{tpu_custom_call.1} parent=0
    _
  %s4 = ssub.s32 1, %s2
  %s5 = scalar_select 0, %s4, %s2
  $region1: #{tpu_custom_call.1} parent=0
    #allocation2 [shape = 'u8[4096]{0}', space=vmem, size = 0x1000, scoped, tag = 'input window, operand 0, single buffered']
    #allocation3 [shape = 's32[1]{0}', space=sflag, size = 0x4, scoped, tag = 'scoped memory for tpu_custom_call.1']
    #allocation4 [shape = 's32[1]{0}', space=sflag, size = 0x4, scoped, tag = 'scoped memory for tpu_custom_call.1']
    #allocation5 [shape = 'u8[4096]{0}', space=vmem, size = 0x1000, scoped, tag = 'output window, operand 0, single buffered']
    %6 = vsyncpa [#allocation3], 0
    %7 = vsyncpa [#allocation4], 0
    // Predicated region
    $region2: #{tpu_custom_call.1} parent=1 // pred_check
      _
    $region3: #{tpu_custom_call.1} parent=1 // pred_check_branch
      %9 = sbr.rel (0) target = $region5
    $region4: #{tpu_custom_call.1} parent=1 // pred_region
      %s11 = ssub.s32 128, 128
      %12 = vsyncadd [#allocation3], %s11
      %s14 = sshll.u32 [#allocation2], 4
      %s15 = int_to_ptr.vmem [resolvable:$true] %s14
      %17 = dma.hbm_to_vmem [thread:$0]  %s0, 128, %s15, [#allocation3]
    $region5: #{tpu_custom_call.1} parent=1 // pred_fallthru
      _
    // Predicated region
    $region6: #{tpu_custom_call.1} parent=1 // pred_check
      _
    $region7: #{tpu_custom_call.1} parent=1 // pred_check_branch
      %19 = sbr.rel (0) target = $region9
    $region8: #{tpu_custom_call.1} parent=1 // pred_region
      %20 = dma.done [#allocation3], 128
    $region9: #{tpu_custom_call.1} parent=1 // pred_fallthru
      _
    %v21 = vld [vmem:[#allocation2] sm:$0xff]
    %22 = vst [vmem:[#allocation5] sm:$0xff] %v21
    // Predicated region
    $region10: #{tpu_custom_call.1} parent=1 // pred_check
      _
    $region11: #{tpu_custom_call.1} parent=1 // pred_check_branch
      %24 = sbr.rel (0) target = $region13
    $region12: #{tpu_custom_call.1} parent=1 // pred_region
      %s26 = ssub.s32 128, 128
      %27 = vsyncadd [#allocation4], %s26
      %s29 = sshll.u32 [#allocation5], 4
      %s30 = int_to_ptr.vmem [resolvable:$true] %s29
      %32 = dma.vmem_to_hbm [thread:$0]  %s30, 128, %s1, [#allocation4]
    $region13: #{tpu_custom_call.1} parent=1 // pred_fallthru
      _
    // Predicated region
    $region14: #{tpu_custom_call.1} parent=1 // pred_check
      _
    $region15: #{tpu_custom_call.1} parent=1 // pred_check_branch
      %34 = sbr.rel (0) target = $region17
    $region16: #{tpu_custom_call.1} parent=1 // pred_region
      %35 = dma.done [#allocation4], 128
    $region17: #{tpu_custom_call.1} parent=1 // pred_fallthru
      _
    %36 = vsyncpa [#allocation3], 1
    %37 = vsyncpa [#allocation4], 1

// kernel: fwd.13
$region0: #{fwd.13}
  #allocation0 [shape = 'u32[]', space=smem, size = 0x4, offset = 0x4, fixed_abs, tag = 'smem constant byte address 0x4 - core index']
  #allocation1 [shape = 'u32[144,128]{1,0:T(1,128)}', space=vmem, size = 0x12000, scoped, tag = 'internal scratch']
  %s0 = inlined_call_operand.vmem [shape: bf16[32,128], index: 0, kind: input, shape index: {}]
  %s1 = inlined_call_operand.vmem [shape: f32[1,128], index: 1, kind: input, shape index: {}]
  %s2 = inlined_call_operand.vmem [shape: f32[1,128], index: 2, kind: input, shape index: {}]
  %s3 = inlined_call_operand.vmem [shape: bf16[32,128], index: 3, kind: output, shape index: {}]
  %s4 = sld [smem:[#allocation0]]
  $region22: #{fwd.13} parent=0
    _
  %s6 = ssub.s32 1, %s4
  %s7 = scalar_select 0, %s6, %s4
  // Predicated region
  $region2: #{fwd.13} parent=0 // pred_check
    _
  $region3: #{fwd.13} parent=0 // pred_check_branch
    %9 = sbr.rel (0) target = $region5
  $region4: #{fwd.13} parent=0 // pred_region
    _
  $region5: #{fwd.13} parent=0 // pred_fallthru
    _
  // Predicated region
  $region6: #{fwd.13} parent=0 // pred_check
    _
  $region7: #{fwd.13} parent=0 // pred_check_branch
    %11 = sbr.rel (0) target = $region9
  $region8: #{fwd.13} parent=0 // pred_region
    _
  $region9: #{fwd.13} parent=0 // pred_fallthru
    _
  // Predicated region
  $region10: #{fwd.13} parent=0 // pred_check
    _
  $region11: #{fwd.13} parent=0 // pred_check_branch
    %13 = sbr.rel (0) target = $region13
  $region12: #{fwd.13} parent=0 // pred_region
    _
  $region13: #{fwd.13} parent=0 // pred_fallthru
    _
  %v14 = vld [vmem:[%s0] sm:$0xf]
  %v15 = vld [vmem:[%s0 + $0x4] sm:$0xf]
  %v16 = vld [vmem:[%s0 + $0x8] sm:$0xf]
  %v17 = vld [vmem:[%s0 + $0xc] sm:$0xf]
  %v18 = vunpack.c.l.bf16 %v14
  %v19 = vunpack.c.l.bf16 %v15
  %v20 = vunpack.c.l.bf16 %v16
  %v21 = vunpack.c.l.bf16 %v17
  %v22 = vld [vmem:[%s1] sm:$0x1]
  %v23 = vld [vmem:[%s2] sm:$0x1]
  %24 = vadd.xlane.f32.xlu0 %v18
  %v25 = vpop.xlane.xlu0 %24
  %26 = vadd.xlane.f32.xlu0 %v19
  %v27 = vpop.xlane.xlu0 %26
  %28 = vadd.xlane.f32.xlu0 %v20
  %v29 = vpop.xlane.xlu0 %28
  %30 = vadd.xlane.f32.xlu0 %v21
  %v31 = vpop.xlane.xlu0 %30
  %v32 = vrcp.pop 128.0
  %v33 = vmul.f32 %v25, %v32
  %v34 = vmul.f32 %v27, %v32
  %v35 = vmul.f32 %v29, %v32
  %v36 = vmul.f32 %v31, %v32
  %v37 = vsub.f32 %v18, %v33
  %v38 = vsub.f32 %v19, %v34
  %v39 = vsub.f32 %v20, %v35
  %v40 = vsub.f32 %v21, %v36
  %v41 = vmul.f32 %v37, %v37
  %v42 = vmul.f32 %v38, %v38
  %v43 = vmul.f32 %v39, %v39
  %v44 = vmul.f32 %v40, %v40
  %45 = vadd.xlane.f32.xlu0 %v41
  %v46 = vpop.xlane.xlu0 %45
  %47 = vadd.xlane.f32.xlu0 %v42
  %v48 = vpop.xlane.xlu0 %47
  %49 = vadd.xlane.f32.xlu0 %v43
  %v50 = vpop.xlane.xlu0 %49
  %51 = vadd.xlane.f32.xlu0 %v44
  %v52 = vpop.xlane.xlu0 %51
  %v53 = vmul.f32 %v46, %v32
  %v54 = vmul.f32 %v48, %v32
  %v55 = vmul.f32 %v50, %v32
  %v56 = vmul.f32 %v52, %v32
  %v57 = vadd.f32 %v53, 1e-12
  %v58 = vadd.f32 %v54, 1e-12
  %v59 = vadd.f32 %v55, 1e-12
  %v60 = vadd.f32 %v56, 1e-12
  %v61 = vrsqrt.pop %v57
  %v62 = vrsqrt.pop %v58
  %v63 = vrsqrt.pop %v59
  %v64 = vrsqrt.pop %v60
  %v65 = vmul.f32 %v37, %v61
  %v66 = vmul.f32 %v38, %v62
  %v67 = vmul.f32 %v39, %v63
  %v68 = vmul.f32 %v40, %v64
  %v70 = vlaneseq
  %v71 = vshrl.u32 %v70, 7
  %v72 = vsub.s32 0, %v71
  %v73 = vrot.slane %v22, %v72
  %v75 = vmul.f32 %v65, %v73
  %v76 = vmul.f32 %v66, %v73
  %v77 = vmul.f32 %v67, %v73
  %v78 = vmul.f32 %v68, %v73
  %v80 = vlaneseq
  %v81 = vshrl.u32 %v80, 7
  %v82 = vsub.s32 0, %v81
  %v83 = vrot.slane %v23, %v82
  %v85 = vadd.f32 %v75, %v83
  %v86 = vadd.f32 %v76, %v83
  %v87 = vadd.f32 %v77, %v83
  %v88 = vadd.f32 %v78, %v83
  %v89 = vpack.c.bf16 %v86, %v85
  %v90 = vpack.c.bf16 %v88, %v87
  %v93 = vunpack.c.l.b16 %v89
  %v94 = vunpack.c.h.b16 %v89
  %v95 = vunpack.c.l.b16 %v90
  %v96 = vunpack.c.h.b16 %v90
  %v97 = vpack.c.b16 %v93, %v93
  %v98 = vpack.c.b16 %v94, %v94
  %v99 = vpack.c.b16 %v95, %v95
  %v100 = vpack.c.b16 %v96, %v96
  %105 = vst [vmem:[%s3] sm:$0xf] %v97
  %106 = vst [vmem:[%s3 + $0x4] sm:$0xf] %v98
  %107 = vst [vmem:[%s3 + $0x8] sm:$0xf] %v99
  %108 = vst [vmem:[%s3 + $0xc] sm:$0xf] %v100
  // Predicated region
  $region14: #{fwd.13} parent=0 // pred_check
    _
  $region15: #{fwd.13} parent=0 // pred_check_branch
    %110 = sbr.rel (0) target = $region17
  $region16: #{fwd.13} parent=0 // pred_region
    _
  $region17: #{fwd.13} parent=0 // pred_fallthru
    _
  // Predicated region
  $region18: #{fwd.13} parent=0 // pred_check
    _
  $region19: #{fwd.13} parent=0 // pred_check_branch
    %112 = sbr.rel (0) target = $region21
  $region20: #{fwd.13} parent=0 // pred_region
    _
  $region21: #{fwd.13} parent=0 // pred_fallthru
    _

// kernel: fwd.14
$region0: #{fwd.14}
  #allocation0 [shape = 'u32[]', space=smem, size = 0x4, offset = 0x4, fixed_abs, tag = 'smem constant byte address 0x4 - core index']
  #allocation1 [shape = 'u32[144,128]{1,0:T(1,128)}', space=vmem, size = 0x12000, scoped, tag = 'internal scratch']
  %s0 = inlined_call_operand.vmem [shape: bf16[32,128], index: 0, kind: input, shape index: {}]
  %s1 = inlined_call_operand.vmem [shape: bf16[128,384], index: 1, kind: input, shape index: {}]
  %s2 = inlined_call_operand.vmem [shape: f32[1,384], index: 2, kind: input, shape index: {}]
  %s3 = inlined_call_operand.vmem [shape: bf16[32,384], index: 3, kind: output, shape index: {}]
  %s4 = sld [smem:[#allocation0]]
  $region22: #{fwd.14} parent=0
    _
  %s6 = ssub.s32 1, %s4
  %s7 = scalar_select 0, %s6, %s4
  // Predicated region
  $region2: #{fwd.14} parent=0 // pred_check
    _
  $region3: #{fwd.14} parent=0 // pred_check_branch
    %9 = sbr.rel (0) target = $region5
  $region4: #{fwd.14} parent=0 // pred_region
    _
  $region5: #{fwd.14} parent=0 // pred_fallthru
    _
  // Predicated region
  $region6: #{fwd.14} parent=0 // pred_check
    _
  $region7: #{fwd.14} parent=0 // pred_check_branch
    %11 = sbr.rel (0) target = $region9
  $region8: #{fwd.14} parent=0 // pred_region
    _
  $region9: #{fwd.14} parent=0 // pred_fallthru
    _
  // Predicated region
  $region10: #{fwd.14} parent=0 // pred_check
    _
  $region11: #{fwd.14} parent=0 // pred_check_branch
    %13 = sbr.rel (0) target = $region13
  $region12: #{fwd.14} parent=0 // pred_region
    _
  $region13: #{fwd.14} parent=0 // pred_fallthru
    _
  %v15 = vld [vmem:[%s0] sm:$0xf]
  %v16 = vld [vmem:[%s0 + $0x4] sm:$0xf]
  %v17 = vld [vmem:[%s0 + $0x8] sm:$0xf]
  %v18 = vld [vmem:[%s0 + $0xc] sm:$0xf]
  %v19 = vld [vmem:[%s1] sm:$0xff]
  %v20 = vld [vmem:[%s1 + $0x8] sm:$0xf]
  %v21 = vld [vmem:[%s1 + $0xc] sm:$0xff]
  %v22 = vld [vmem:[%s1 + $0x14] sm:$0xf]
  %v23 = vld [vmem:[%s1 + $0x18] sm:$0xff]
  %v24 = vld [vmem:[%s1 + $0x20] sm:$0xf]
  %v25 = vld [vmem:[%s1 + $0x24] sm:$0xff]
  %v26 = vld [vmem:[%s1 + $0x2c] sm:$0xf]
  %v27 = vld [vmem:[%s1 + $0x30] sm:$0xff]
  %v28 = vld [vmem:[%s1 + $0x38] sm:$0xf]
  %v29 = vld [vmem:[%s1 + $0x3c] sm:$0xff]
  %v30 = vld [vmem:[%s1 + $0x44] sm:$0xf]
  %v31 = vld [vmem:[%s1 + $0x48] sm:$0xff]
  %v32 = vld [vmem:[%s1 + $0x50] sm:$0xf]
  %v33 = vld [vmem:[%s1 + $0x54] sm:$0xff]
  %v34 = vld [vmem:[%s1 + $0x5c] sm:$0xf]
  %v35 = vld [vmem:[%s1 + $0x60] sm:$0xff]
  %v36 = vld [vmem:[%s1 + $0x68] sm:$0xf]
  %v37 = vld [vmem:[%s1 + $0x6c] sm:$0xff]
  %v38 = vld [vmem:[%s1 + $0x74] sm:$0xf]
  %v39 = vld [vmem:[%s1 + $0x78] sm:$0xff]
  %v40 = vld [vmem:[%s1 + $0x80] sm:$0xf]
  %v41 = vld [vmem:[%s1 + $0x84] sm:$0xff]
  %v42 = vld [vmem:[%s1 + $0x8c] sm:$0xf]
  %v43 = vld [vmem:[%s1 + $0x90] sm:$0xff]
  %v44 = vld [vmem:[%s1 + $0x98] sm:$0xf]
  %v45 = vld [vmem:[%s1 + $0x9c] sm:$0xff]
  %v46 = vld [vmem:[%s1 + $0xa4] sm:$0xf]
  %v47 = vld [vmem:[%s1 + $0xa8] sm:$0xff]
  %v48 = vld [vmem:[%s1 + $0xb0] sm:$0xf]
  %v49 = vld [vmem:[%s1 + $0xb4] sm:$0xff]
  %v50 = vld [vmem:[%s1 + $0xbc] sm:$0xf]
  %v51 = vld [vmem:[%s2] sm:$0x7]
  %v53 = vlaneseq
  %v54 = vshrl.u32 %v53, 7
  %v55 = vsub.s32 0, %v54
  %v56 = vrot.slane %v51, %v55
  %v57 = vlaneseq
  %v58 = vshrl.u32 %v57, 7
  %v59 = vsub.s32 1, %v58
  %v60 = vrot.slane %v51, %v59
  %v61 = vlaneseq
  %v62 = vshrl.u32 %v61, 7
  %v63 = vsub.s32 2, %v62
  %v64 = vrot.slane %v51, %v63
  %v72 = vunpack.c.l.b16 %v15
  %v73 = vunpack.c.l.b16 %v16
  %v74 = vunpack.c.l.b16 %v17
  %v75 = vunpack.c.l.b16 %v18
  %v76 = vpack.c.b16 %v73, %v72
  %v77 = vpack.c.b16 %v75, %v74
  %v112 = vunpack.c.l.b16 %v19
  %v113 = vunpack.c.h.b16 %v19
  %v114 = vunpack.c.l.b16 %v20
  %v115 = vunpack.c.l.b16 %v21
  %v116 = vunpack.c.h.b16 %v21
  %v117 = vunpack.c.l.b16 %v22
  %v118 = vunpack.c.l.b16 %v23
  %v119 = vunpack.c.h.b16 %v23
  %v120 = vunpack.c.l.b16 %v24
  %v121 = vunpack.c.l.b16 %v25
  %v122 = vunpack.c.h.b16 %v25
  %v123 = vunpack.c.l.b16 %v26
  %v124 = vunpack.c.l.b16 %v27
  %v125 = vunpack.c.h.b16 %v27
  %v126 = vunpack.c.l.b16 %v28
  %v127 = vunpack.c.l.b16 %v29
  %v128 = vunpack.c.h.b16 %v29
  %v129 = vunpack.c.l.b16 %v30
  %v130 = vunpack.c.l.b16 %v31
  %v131 = vunpack.c.h.b16 %v31
  %v132 = vunpack.c.l.b16 %v32
  %v133 = vunpack.c.l.b16 %v33
  %v134 = vunpack.c.h.b16 %v33
  %v135 = vunpack.c.l.b16 %v34
  %v136 = vunpack.c.l.b16 %v35
  %v137 = vunpack.c.h.b16 %v35
  %v138 = vunpack.c.l.b16 %v36
  %v139 = vunpack.c.l.b16 %v37
  %v140 = vunpack.c.h.b16 %v37
  %v141 = vunpack.c.l.b16 %v38
  %v142 = vunpack.c.l.b16 %v39
  %v143 = vunpack.c.h.b16 %v39
  %v144 = vunpack.c.l.b16 %v40
  %v145 = vunpack.c.l.b16 %v41
  %v146 = vunpack.c.h.b16 %v41
  %v147 = vunpack.c.l.b16 %v42
  %v148 = vunpack.c.l.b16 %v43
  %v149 = vunpack.c.h.b16 %v43
  %v150 = vunpack.c.l.b16 %v44
  %v151 = vunpack.c.l.b16 %v45
  %v152 = vunpack.c.h.b16 %v45
  %v153 = vunpack.c.l.b16 %v46
  %v154 = vunpack.c.l.b16 %v47
  %v155 = vunpack.c.h.b16 %v47
  %v156 = vunpack.c.l.b16 %v48
  %v157 = vunpack.c.l.b16 %v49
  %v158 = vunpack.c.h.b16 %v49
  %v159 = vunpack.c.l.b16 %v50
  %v160 = vpack.c.b16 %v115, %v112
  %v161 = vpack.c.b16 %v116, %v113
  %v162 = vpack.c.b16 %v117, %v114
  %v163 = vpack.c.b16 %v121, %v118
  %v164 = vpack.c.b16 %v122, %v119
  %v165 = vpack.c.b16 %v123, %v120
  %v166 = vpack.c.b16 %v127, %v124
  %v167 = vpack.c.b16 %v128, %v125
  %v168 = vpack.c.b16 %v129, %v126
  %v169 = vpack.c.b16 %v133, %v130
  %v170 = vpack.c.b16 %v134, %v131
  %v171 = vpack.c.b16 %v135, %v132
  %v172 = vpack.c.b16 %v139, %v136
  %v173 = vpack.c.b16 %v140, %v137
  %v174 = vpack.c.b16 %v141, %v138
  %v175 = vpack.c.b16 %v145, %v142
  %v176 = vpack.c.b16 %v146, %v143
  %v177 = vpack.c.b16 %v147, %v144
  %v178 = vpack.c.b16 %v151, %v148
  %v179 = vpack.c.b16 %v152, %v149
  %v180 = vpack.c.b16 %v153, %v150
  %v181 = vpack.c.b16 %v157, %v154
  %v182 = vpack.c.b16 %v158, %v155
  %v183 = vpack.c.b16 %v159, %v156
  %208 = vmatprep.subr.bf16.mxu0 %v161
  %209 = vmatpush1.bf16.msra.mxu0 %v160
  %210 = vmatprep.subr.bf16.mxu0 %v164
  %211 = vmatpush1.bf16.msra.mxu0 %v163
  %212 = vmatprep.subr.bf16.mxu0 %v167
  %213 = vmatpush1.bf16.msra.mxu0 %v166
  %214 = vmatprep.subr.bf16.mxu0 %v170
  %215 = vmatpush1.bf16.msra.mxu0 %v169
  %216 = vmatprep.subr.bf16.mxu0 %v173
  %217 = vmatpush1.bf16.msra.mxu0 %v172
  %218 = vmatprep.subr.bf16.mxu0 %v176
  %219 = vmatpush1.bf16.msra.mxu0 %v175
  %220 = vmatprep.subr.bf16.mxu0 %v179
  %221 = vmatpush1.bf16.msra.mxu0 %v178
  %222 = vmatprep.subr.bf16.mxu0 %v182
  %223 = vmatpush1.bf16.msra.mxu0 %v181
  %224 = vmatprep.subr.bf16.mxu0 0
  %225 = vmatpush1.bf16.msra.mxu0 0
  %226 = vmatprep.subr.bf16.mxu0 0
  %227 = vmatpush1.bf16.msra.mxu0 0
  %228 = vmatprep.subr.bf16.mxu0 0
  %229 = vmatpush1.bf16.msra.mxu0 0
  %230 = vmatprep.subr.bf16.mxu0 0
  %231 = vmatpush1.bf16.msra.mxu0 0
  %232 = vmatprep.subr.bf16.mxu0 0
  %233 = vmatpush1.bf16.msra.mxu0 0
  %234 = vmatprep.subr.bf16.mxu0 0
  %235 = vmatpush1.bf16.msra.mxu0 0
  %236 = vmatprep.subr.bf16.mxu0 0
  %237 = vmatpush1.bf16.msra.mxu0 0
  %238 = vmatprep.subr.bf16.mxu0 0
  %239 = vmatpush1.bf16.msra.mxu0 0
  %240 = vmatprep.mubr.bf16.mxu0 0
  %241 = vmatmul.mubr.bf16.gmra.mrb[0].mxu0 %v76
  %v242 = vpop.f32.mrb[0].mxu0
  %v243 = vadd.f32 %v56, %v242
  %v244 = vpop.f32.mrb[0].mxu0
  %v245 = vadd.f32 %v60, %v244
  %v246 = vpop.f32.mrb[0].mxu0
  %v247 = vadd.f32 %v56, %v246
  %v248 = vpop.f32.mrb[0].mxu0
  %v249 = vadd.f32 %v60, %v248
  %250 = vmatprep.mubr.bf16.mxu0 0
  %251 = vmatmul.mubr.bf16.gmra.mrb[0].mxu0 %v77
  %v252 = vpop.f32.mrb[0].mxu0
  %v253 = vadd.f32 %v56, %v252
  %v254 = vpop.f32.mrb[0].mxu0
  %v255 = vadd.f32 %v60, %v254
  %v256 = vpop.f32.mrb[0].mxu0
  %v257 = vadd.f32 %v56, %v256
  %v258 = vpop.f32.mrb[0].mxu0
  %v259 = vadd.f32 %v60, %v258
  %260 = vdwg.mxu0
  %261 = vmatprep.subr.bf16.mxu0 0
  %262 = vmatpush1.bf16.msra.mxu0 %v162
  %263 = vmatprep.subr.bf16.mxu0 0
  %264 = vmatpush1.bf16.msra.mxu0 %v165
  %265 = vmatprep.subr.bf16.mxu0 0
  %266 = vmatpush1.bf16.msra.mxu0 %v168
  %267 = vmatprep.subr.bf16.mxu0 0
  %268 = vmatpush1.bf16.msra.mxu0 %v171
  %269 = vmatprep.subr.bf16.mxu0 0
  %270 = vmatpush1.bf16.msra.mxu0 %v174
  %271 = vmatprep.subr.bf16.mxu0 0
  %272 = vmatpush1.bf16.msra.mxu0 %v177
  %273 = vmatprep.subr.bf16.mxu0 0
  %274 = vmatpush1.bf16.msra.mxu0 %v180
  %275 = vmatprep.subr.bf16.mxu0 0
  %276 = vmatpush1.bf16.msra.mxu0 %v183
  %277 = vmatprep.subr.bf16.mxu0 0
  %278 = vmatpush1.bf16.msra.mxu0 0
  %279 = vmatprep.subr.bf16.mxu0 0
  %280 = vmatpush1.bf16.msra.mxu0 0
  %281 = vmatprep.subr.bf16.mxu0 0
  %282 = vmatpush1.bf16.msra.mxu0 0
  %283 = vmatprep.subr.bf16.mxu0 0
  %284 = vmatpush1.bf16.msra.mxu0 0
  %285 = vmatprep.subr.bf16.mxu0 0
  %286 = vmatpush1.bf16.msra.mxu0 0
  %287 = vmatprep.subr.bf16.mxu0 0
  %288 = vmatpush1.bf16.msra.mxu0 0
  %289 = vmatprep.subr.bf16.mxu0 0
  %290 = vmatpush1.bf16.msra.mxu0 0
  %291 = vmatprep.subr.bf16.mxu0 0
  %292 = vmatpush1.bf16.msra.mxu0 0
  %293 = vmatprep.mubr.bf16.mxu0 0
  %294 = vmatmul.mubr.bf16.gmra.mrb[0].mxu0 %v76
  %v295 = vpop.f32.mrb[0].mxu0
  %v296 = vadd.f32 %v64, %v295
  %v297 = vpop.f32.mrb[0].mxu0
  %v298 = vpop.f32.mrb[0].mxu0
  %v299 = vadd.f32 %v64, %v298
  %v300 = vpop.f32.mrb[0].mxu0
  %301 = vmatprep.mubr.bf16.mxu0 0
  %302 = vmatmul.mubr.bf16.gmra.mrb[0].mxu0 %v77
  %v303 = vpop.f32.mrb[0].mxu0
  %v304 = vadd.f32 %v64, %v303
  %v305 = vpop.f32.mrb[0].mxu0
  %v306 = vpop.f32.mrb[0].mxu0
  %v307 = vadd.f32 %v64, %v306
  %v308 = vpop.f32.mrb[0].mxu0
  %309 = vdwg.mxu0
  %v310 = vpack.c.bf16 %v247, %v243
  %v311 = vpack.c.bf16 %v249, %v245
  %v312 = vpack.c.bf16 %v299, %v296
  %v313 = vpack.c.bf16 %v257, %v253
  %v314 = vpack.c.bf16 %v259, %v255
  %v315 = vpack.c.bf16 %v307, %v304
  %v322 = vunpack.c.l.b16 %v310
  %v323 = vunpack.c.l.b16 %v311
  %v324 = vunpack.c.l.b16 %v312
  %v325 = vunpack.c.h.b16 %v310
  %v326 = vunpack.c.h.b16 %v311
  %v327 = vunpack.c.h.b16 %v312
  %v328 = vunpack.c.l.b16 %v313
  %v329 = vunpack.c.l.b16 %v314
  %v330 = vunpack.c.l.b16 %v315
  %v331 = vunpack.c.h.b16 %v313
  %v332 = vunpack.c.h.b16 %v314
  %v333 = vunpack.c.h.b16 %v315
  %v334 = vpack.c.b16 %v323, %v322
  %v335 = vpack.c.b16 %v324, %v324
  %v336 = vpack.c.b16 %v326, %v325
  %v337 = vpack.c.b16 %v327, %v327
  %v338 = vpack.c.b16 %v329, %v328
  %v339 = vpack.c.b16 %v330, %v330
  %v340 = vpack.c.b16 %v332, %v331
  %v341 = vpack.c.b16 %v333, %v333
  %350 = vst [vmem:[%s3] sm:$0xff] %v334
  %351 = vst [vmem:[%s3 + $0x8] sm:$0xf] %v335
  %352 = vst [vmem:[%s3 + $0xc] sm:$0xff] %v336
  %353 = vst [vmem:[%s3 + $0x14] sm:$0xf] %v337
  %354 = vst [vmem:[%s3 + $0x18] sm:$0xff] %v338
  %355 = vst [vmem:[%s3 + $0x20] sm:$0xf] %v339
  %356 = vst [vmem:[%s3 + $0x24] sm:$0xff] %v340
  %357 = vst [vmem:[%s3 + $0x2c] sm:$0xf] %v341
  // Predicated region
  $region14: #{fwd.14} parent=0 // pred_check
    _
  $region15: #{fwd.14} parent=0 // pred_check_branch
    %359 = sbr.rel (0) target = $region17
  $region16: #{fwd.14} parent=0 // pred_region
    _
  $region17: #{fwd.14} parent=0 // pred_fallthru
    _
  // Predicated region
  $region18: #{fwd.14} parent=0 // pred_check
    _
  $region19: #{fwd.14} parent=0 // pred_check_branch
    %361 = sbr.rel (0) target = $region21
  $region20: #{fwd.14} parent=0 // pred_region
    _
  $region21: #{fwd.14} parent=0 // pred_fallthru
    _

// kernel: fwd.15
$region0: #{fwd.15}
  #allocation0 [shape = 'u32[]', space=smem, size = 0x4, offset = 0x4, fixed_abs, tag = 'smem constant byte address 0x4 - core index']
  #allocation1 [shape = 'u32[144,128]{1,0:T(1,128)}', space=vmem, size = 0x12000, scoped, tag = 'internal scratch']
  %s0 = inlined_call_operand.vmem [shape: bf16[2,16,384], index: 0, kind: input, shape index: {}, may-alias: {0,1,2}]
  %s1 = inlined_call_operand.vmem [shape: bf16[2,16,384], index: 1, kind: input, shape index: {}, may-alias: {0,1,2}]
  %s2 = inlined_call_operand.vmem [shape: bf16[2,16,384], index: 2, kind: input, shape index: {}, may-alias: {0,1,2}]
  %s3 = inlined_call_operand.vmem [shape: f32[2,1,16], index: 3, kind: input, shape index: {}]
  %s4 = inlined_call_operand.vmem [shape: bf16[2,16,128], index: 4, kind: output, shape index: {}]
  %s5 = sld [smem:[#allocation0]]
  $region172: #{fwd.15} parent=0
    _
  %s7 = ssub.s32 1, %s5
  %s8 = scalar_select 0, %s7, %s5
  $region1: #{fwd.15} parent=0
    #allocation2 [shape = 'u8[8192]{0}', space=vmem, size = 0x2000, scoped, tag = 'input window, operand 0']
    #allocation3 [shape = 'u8[8192]{0}', space=vmem, size = 0x2000, scoped, tag = 'input window, operand 1']
    #allocation4 [shape = 'u8[8192]{0}', space=vmem, size = 0x2000, scoped, tag = 'input window, operand 2']
    loop: start=0, step=1, limit=4
    $region2: #{fwd.15} parent=1 // loop_pre_header
      _
    $region3: #{fwd.15} parent=1 // loop_header
      %s10 = sphi 0, %s14
      %p11 = scmp.ge.s32.totalorder %s10, 4
      %s17 = sphi 0, %s29
      %s18 = sphi 0, %s25
      %s19 = sphi 0, %s17
      %s20 = sphi 0, %s18
      %s21 = sphi 0, %s19
      %s22 = sphi 0, %s20
      %s34 = sphi 0, %s36
      %s37 = sphi 0, %s34
      %s38 = sphi 0, %s37
      %s54 = sphi 0, %s38
      %s64 = sphi 0, %s66
      %s67 = sphi 0, %s64
      %s68 = sphi 0, %s67
      %s84 = sphi 0, %s68
      %s94 = sphi 0, %s96
      %s97 = sphi 0, %s94
      %s98 = sphi 0, %s97
      %s114 = sphi 0, %s98
      %s120 = sphi 0, %s122
      %s123 = sphi 0, %s120
      %s124 = sphi 0, %s123
      %s140 = sphi 0, %s124
      %s148 = sphi 0, %s150
      %s151 = sphi 0, %s148
      %s152 = sphi 0, %s151
      %s168 = sphi 0, %s152
    $region4: #{fwd.15} parent=1 // loop_header_branch
      %13 = sbr.rel (%p11) target = $region8
    $region5: #{fwd.15} parent=1 // loop_body
      %s15 = ssub.s32 %s10, 1
      %s16 = ssub.s32 %s10, 2
      %s23 = sadd.s32 1, %s18
      %p24 = scmp.ge.s32.totalorder %s23, 1
      %s25 = scalar_select %p24, 0, %s23
      %s26 = sadd.s32 1, %s17
      %s27 = scalar_select %p24, %s26, %s17
      %p28 = scmp.ge.s32.totalorder %s27, 2
      %s29 = scalar_select %p28, 0, %s27
      %s30 = ssub.s32 %s17, %s29
      %s31 = ssub.s32 %s18, %s25
      %s32 = sor.u32 %s30, %s31
      %p33 = scmp.eq.s32.totalorder %s32, 0
      %s35 = sadd.s32 %s34, 1
      %s36 = scalar_select %p33, %s34, %s35
      %p39 = pneg %p33
      %p40 = scmp.eq.s32.totalorder %s10, 1
      %p41 = por %p39, %p40
      %p42 = scmp.ne.s32.totalorder %s34, %s37
      %p43 = scmp.eq.s32.totalorder %s10, 0
      %p44 = por %p42, %p43
      %p45 = scmp.ne.s32.totalorder %s34, %s37
      %p46 = scmp.eq.s32.totalorder %s15, 1
      %p47 = por %p45, %p46
      %p48 = scmp.ne.s32.totalorder %s37, %s38
      %p49 = scmp.eq.s32.totalorder %s15, 0
      %p50 = por %p48, %p49
      %p51 = scmp.ne.s32.totalorder %s37, %s38
      %p52 = scmp.eq.s32.totalorder %s16, 1
      %p53 = por %p51, %p52
      %p55 = scmp.ne.s32.totalorder %s38, %s54
      %p56 = scmp.eq.s32.totalorder %s16, 0
      %p57 = por %p55, %p56
      %s58 = sadd.s32 %s18, 1
      %s59 = sadd.s32 %s25, 1
      %s60 = ssub.s32 %s17, %s29
      %s61 = ssub.s32 %s58, %s59
      %s62 = sor.u32 %s60, %s61
      %p63 = scmp.eq.s32.totalorder %s62, 0
      %s65 = sadd.s32 %s64, 1
      %s66 = scalar_select %p63, %s64, %s65
      %p69 = pneg %p63
      %p70 = scmp.eq.s32.totalorder %s10, 1
      %p71 = por %p69, %p70
      %p72 = scmp.ne.s32.totalorder %s64, %s67
      %p73 = scmp.eq.s32.totalorder %s10, 0
      %p74 = por %p72, %p73
      %p75 = scmp.ne.s32.totalorder %s64, %s67
      %p76 = scmp.eq.s32.totalorder %s15, 1
      %p77 = por %p75, %p76
      %p78 = scmp.ne.s32.totalorder %s67, %s68
      %p79 = scmp.eq.s32.totalorder %s15, 0
      %p80 = por %p78, %p79
      %p81 = scmp.ne.s32.totalorder %s67, %s68
      %p82 = scmp.eq.s32.totalorder %s16, 1
      %p83 = por %p81, %p82
      %p85 = scmp.ne.s32.totalorder %s68, %s84
      %p86 = scmp.eq.s32.totalorder %s16, 0
      %p87 = por %p85, %p86
      %s88 = sadd.s32 %s18, 2
      %s89 = sadd.s32 %s25, 2
      %s90 = ssub.s32 %s17, %s29
      %s91 = ssub.s32 %s88, %s89
      %s92 = sor.u32 %s90, %s91
      %p93 = scmp.eq.s32.totalorder %s92, 0
      %s95 = sadd.s32 %s94, 1
      %s96 = scalar_select %p93, %s94, %s95
      %p99 = pneg %p93
      %p100 = scmp.eq.s32.totalorder %s10, 1
      %p101 = por %p99, %p100
      %p102 = scmp.ne.s32.totalorder %s94, %s97
      %p103 = scmp.eq.s32.totalorder %s10, 0
      %p104 = por %p102, %p103
      %p105 = scmp.ne.s32.totalorder %s94, %s97
      %p106 = scmp.eq.s32.totalorder %s15, 1
      %p107 = por %p105, %p106
      %p108 = scmp.ne.s32.totalorder %s97, %s98
      %p109 = scmp.eq.s32.totalorder %s15, 0
      %p110 = por %p108, %p109
      %p111 = scmp.ne.s32.totalorder %s97, %s98
      %p112 = scmp.eq.s32.totalorder %s16, 1
      %p113 = por %p111, %p112
      %p115 = scmp.ne.s32.totalorder %s98, %s114
      %p116 = scmp.eq.s32.totalorder %s16, 0
      %p117 = por %p115, %p116
      %s118 = ssub.s32 %s17, %s29
      %p119 = scmp.eq.s32.totalorder %s118, 0
      %s121 = sadd.s32 %s120, 1
      %s122 = scalar_select %p119, %s120, %s121
      %p125 = pneg %p119
      %p126 = scmp.eq.s32.totalorder %s10, 1
      %p127 = por %p125, %p126
      %p128 = scmp.ne.s32.totalorder %s120, %s123
      %p129 = scmp.eq.s32.totalorder %s10, 0
      %p130 = por %p128, %p129
      %p131 = scmp.ne.s32.totalorder %s120, %s123
      %p132 = scmp.eq.s32.totalorder %s15, 1
      %p133 = por %p131, %p132
      %p134 = scmp.ne.s32.totalorder %s123, %s124
      %p135 = scmp.eq.s32.totalorder %s15, 0
      %p136 = por %p134, %p135
      %p137 = scmp.ne.s32.totalorder %s123, %s124
      %p138 = scmp.eq.s32.totalorder %s16, 1
      %p139 = por %p137, %p138
      %p141 = scmp.ne.s32.totalorder %s124, %s140
      %p142 = scmp.eq.s32.totalorder %s16, 0
      %p143 = por %p141, %p142
      %s144 = ssub.s32 %s17, %s29
      %s145 = ssub.s32 %s18, %s25
      %s146 = sor.u32 %s144, %s145
      %p147 = scmp.eq.s32.totalorder %s146, 0
      %s149 = sadd.s32 %s148, 1
      %s150 = scalar_select %p147, %s148, %s149
      %p153 = pneg %p147
      %p154 = scmp.eq.s32.totalorder %s10, 1
      %p155 = por %p153, %p154
      %p156 = scmp.ne.s32.totalorder %s148, %s151
      %p157 = scmp.eq.s32.totalorder %s10, 0
      %p158 = por %p156, %p157
      %p159 = scmp.ne.s32.totalorder %s148, %s151
      %p160 = scmp.eq.s32.totalorder %s15, 1
      %p161 = por %p159, %p160
      %p162 = scmp.ne.s32.totalorder %s151, %s152
      %p163 = scmp.eq.s32.totalorder %s15, 0
      %p164 = por %p162, %p163
      %p165 = scmp.ne.s32.totalorder %s151, %s152
      %p166 = scmp.eq.s32.totalorder %s16, 1
      %p167 = por %p165, %p166
      %p169 = scmp.ne.s32.totalorder %s152, %s168
      %p170 = scmp.eq.s32.totalorder %s16, 0
      %p171 = por %p169, %p170
      %p172 = scmp.le.s32.totalorder 1, %s10
      %p173 = scmp.lt.s32.totalorder %s10, 3
      %p174 = pnand %p172, %p173
      %p175 = pneg %p174
      // Predicated region
      $region9: #{fwd.15} parent=5 // pred_check
        _
      $region10: #{fwd.15} parent=5 // pred_check_branch
        %177 = sbr.rel (%p174) target = $region12
      $region11: #{fwd.15} parent=5 // pred_region
        %s178 = ssub.s32 %s10, 1
      $region12: #{fwd.15} parent=5 // pred_fallthru
        _
      %p179 = scmp.lt.s32.totalorder %s10, 2
      // Predicated region
      $region13: #{fwd.15} parent=5 // pred_check
        %p180 = pneg %p179
      $region14: #{fwd.15} parent=5 // pred_check_branch
        %182 = sbr.rel (%p180) target = $region16
      $region15: #{fwd.15} parent=5 // pred_region
        // Predicated region
        $region17: #{fwd.15} parent=15 // pred_check
          %p183 = pneg %p44
        $region18: #{fwd.15} parent=15 // pred_check_branch
          %185 = sbr.rel (%p183) target = $region20
        $region19: #{fwd.15} parent=15 // pred_region
          %s186 = sand.u32 %s34, 1
          %s187 = sand.u32 %s34, 1
          %s188 = smul.addr %s187, 8
          %s189 = scalar_lea.vmem [#allocation2], %s188
          %s190 = smul.addr %s17, 6
          %s191 = sadd.s32 %s18, %s190
          %s192 = smul.addr %s191, 4
          %s193 = scalar_lea.vmem %s0, %s192
          // Predicated region
          $region21: #{fwd.15} parent=19 // pred_check
            _
          $region22: #{fwd.15} parent=19 // pred_check_branch
            %195 = sbr.rel (0) target = $region24
          $region23: #{fwd.15} parent=19 // pred_region
            // Predicated region
            $region25: #{fwd.15} parent=23 // pred_check
              _
            $region26: #{fwd.15} parent=23 // pred_check_branch
              %197 = sbr.rel target = $region28
            $region27: #{fwd.15} parent=23 // pred_region
              // Predicated region
              $region40: #{fwd.15} parent=27 // pred_check
                _
              $region41: #{fwd.15} parent=27 // pred_check_branch
                %214 = sbr.rel (0) target = $region43
              $region42: #{fwd.15} parent=27 // pred_region
                loop: start=0, step=1, limit=1
                $region44: #{fwd.15} parent=42 // loop_pre_header
                  _
                $region45: #{fwd.15} parent=42 // loop_header
                  %s216 = sphi 0, %s220
                  %p217 = scmp.ge.s32.totalorder %s216, 1
                  %s221 = sphi %s193, %s193
                  %s222 = sphi %s189, %s189
                $region46: #{fwd.15} parent=42 // loop_header_branch
                  %219 = sbr.rel (%p217) target = $region50
                $region47: #{fwd.15} parent=42 // loop_body
                  _
                $region48: #{fwd.15} parent=42 // loop_footer
                  %s220 = sadd.s32 1, %s216
                $region49: #{fwd.15} parent=42 // loop_footer_branch
                  %215 = sbr.rel target = $region45
                $region50: #{fwd.15} parent=42 // loop_exit
                  _
                loop: start=0, step=1, limit=1
                $region51: #{fwd.15} parent=42 // loop_pre_header
                  _
                $region52: #{fwd.15} parent=42 // loop_header
                  %s225 = sphi 0, %s229
                  %p226 = scmp.ge.s32.totalorder %s225, 1
                  %s230 = sphi %s193, %s193
                  %s231 = sphi %s189, %s189
                $region53: #{fwd.15} parent=42 // loop_header_branch
                  %228 = sbr.rel (%p226) target = $region57
                $region54: #{fwd.15} parent=42 // loop_body
                  %v232 = vld [vmem:[%s230] sm:$0xf]
                  %233 = vst [vmem:[%s231] sm:$0xf] %v232
                  %v234 = vld [vmem:[%s230 + $0xc] sm:$0xf]
                  %235 = vst [vmem:[%s231 + $0x4] sm:$0xf] %v234
                $region55: #{fwd.15} parent=42 // loop_footer
                  %s229 = sadd.s32 1, %s225
                $region56: #{fwd.15} parent=42 // loop_footer_branch
                  %224 = sbr.rel target = $region52
                $region57: #{fwd.15} parent=42 // loop_exit
                  _
              $region43: #{fwd.15} parent=27 // pred_fallthru
                _
            $region28: #{fwd.15} parent=23 // pred_fallthru
              _
            // Predicated region
            $region29: #{fwd.15} parent=23 // pred_check
              _
            $region30: #{fwd.15} parent=23 // pred_check_branch
              %199 = sbr.rel (0) target = $region32
            $region31: #{fwd.15} parent=23 // pred_region
              loop: start=0, step=1, limit=1
              $region33: #{fwd.15} parent=31 // loop_pre_header
                _
              $region34: #{fwd.15} parent=31 // loop_header
                %s202 = sphi 0, %s206
                %p203 = scmp.ge.s32.totalorder %s202, 1
                %s207 = sphi %s193, %s193
                %s208 = sphi %s189, %s189
              $region35: #{fwd.15} parent=31 // loop_header_branch
                %205 = sbr.rel (%p203) target = $region39
              $region36: #{fwd.15} parent=31 // loop_body
                %v209 = vld [vmem:[%s207] sm:$0xf]
                %210 = vst [vmem:[%s208] sm:$0xf] %v209
                %v211 = vld [vmem:[%s207 + $0xc] sm:$0xf]
                %212 = vst [vmem:[%s208 + $0x4] sm:$0xf] %v211
              $region37: #{fwd.15} parent=31 // loop_footer
                %s206 = sadd.s32 1, %s202
              $region38: #{fwd.15} parent=31 // loop_footer_branch
                %201 = sbr.rel target = $region34
              $region39: #{fwd.15} parent=31 // loop_exit
                _
            $region32: #{fwd.15} parent=23 // pred_fallthru
              _
          $region24: #{fwd.15} parent=19 // pred_fallthru
            _
          %236 = vnop
        $region20: #{fwd.15} parent=15 // pred_fallthru
          _
        // Predicated region
        $region58: #{fwd.15} parent=15 // pred_check
          %p237 = pneg %p74
        $region59: #{fwd.15} parent=15 // pred_check_branch
          %239 = sbr.rel (%p237) target = $region61
        $region60: #{fwd.15} parent=15 // pred_region
          %s240 = sand.u32 %s64, 1
          %s241 = sand.u32 %s64, 1
          %s242 = smul.addr %s241, 8
          %s243 = scalar_lea.vmem [#allocation3], %s242
          %s244 = sadd.s32 %s18, 1
          %s245 = smul.addr %s17, 6
          %s246 = sadd.s32 %s244, %s245
          %s247 = smul.addr %s246, 4
          %s248 = scalar_lea.vmem %s1, %s247
          // Predicated region
          $region62: #{fwd.15} parent=60 // pred_check
            _
          $region63: #{fwd.15} parent=60 // pred_check_branch
            %250 = sbr.rel (0) target = $region65
          $region64: #{fwd.15} parent=60 // pred_region
            // Predicated region
            $region66: #{fwd.15} parent=64 // pred_check
              _
            $region67: #{fwd.15} parent=64 // pred_check_branch
              %252 = sbr.rel target = $region69
            $region68: #{fwd.15} parent=64 // pred_region
              // Predicated region
              $region81: #{fwd.15} parent=68 // pred_check
                _
              $region82: #{fwd.15} parent=68 // pred_check_branch
                %269 = sbr.rel (0) target = $region84
              $region83: #{fwd.15} parent=68 // pred_region
                loop: start=0, step=1, limit=1
                $region85: #{fwd.15} parent=83 // loop_pre_header
                  _
                $region86: #{fwd.15} parent=83 // loop_header
                  %s271 = sphi 0, %s275
                  %p272 = scmp.ge.s32.totalorder %s271, 1
                  %s276 = sphi %s248, %s248
                  %s277 = sphi %s243, %s243
                $region87: #{fwd.15} parent=83 // loop_header_branch
                  %274 = sbr.rel (%p272) target = $region91
                $region88: #{fwd.15} parent=83 // loop_body
                  _
                $region89: #{fwd.15} parent=83 // loop_footer
                  %s275 = sadd.s32 1, %s271
                $region90: #{fwd.15} parent=83 // loop_footer_branch
                  %270 = sbr.rel target = $region86
                $region91: #{fwd.15} parent=83 // loop_exit
                  _
                loop: start=0, step=1, limit=1
                $region92: #{fwd.15} parent=83 // loop_pre_header
                  _
                $region93: #{fwd.15} parent=83 // loop_header
                  %s280 = sphi 0, %s284
                  %p281 = scmp.ge.s32.totalorder %s280, 1
                  %s285 = sphi %s248, %s248
                  %s286 = sphi %s243, %s243
                $region94: #{fwd.15} parent=83 // loop_header_branch
                  %283 = sbr.rel (%p281) target = $region98
                $region95: #{fwd.15} parent=83 // loop_body
                  %v287 = vld [vmem:[%s285] sm:$0xf]
                  %288 = vst [vmem:[%s286] sm:$0xf] %v287
                  %v289 = vld [vmem:[%s285 + $0xc] sm:$0xf]
                  %290 = vst [vmem:[%s286 + $0x4] sm:$0xf] %v289
                $region96: #{fwd.15} parent=83 // loop_footer
                  %s284 = sadd.s32 1, %s280
                $region97: #{fwd.15} parent=83 // loop_footer_branch
                  %279 = sbr.rel target = $region93
                $region98: #{fwd.15} parent=83 // loop_exit
                  _
              $region84: #{fwd.15} parent=68 // pred_fallthru
                _
            $region69: #{fwd.15} parent=64 // pred_fallthru
              _
            // Predicated region
            $region70: #{fwd.15} parent=64 // pred_check
              _
            $region71: #{fwd.15} parent=64 // pred_check_branch
              %254 = sbr.rel (0) target = $region73
            $region72: #{fwd.15} parent=64 // pred_region
              loop: start=0, step=1, limit=1
              $region74: #{fwd.15} parent=72 // loop_pre_header
                _
              $region75: #{fwd.15} parent=72 // loop_header
                %s257 = sphi 0, %s261
                %p258 = scmp.ge.s32.totalorder %s257, 1
                %s262 = sphi %s248, %s248
                %s263 = sphi %s243, %s243
              $region76: #{fwd.15} parent=72 // loop_header_branch
                %260 = sbr.rel (%p258) target = $region80
              $region77: #{fwd.15} parent=72 // loop_body
                %v264 = vld [vmem:[%s262] sm:$0xf]
                %265 = vst [vmem:[%s263] sm:$0xf] %v264
                %v266 = vld [vmem:[%s262 + $0xc] sm:$0xf]
                %267 = vst [vmem:[%s263 + $0x4] sm:$0xf] %v266
              $region78: #{fwd.15} parent=72 // loop_footer
                %s261 = sadd.s32 1, %s257
              $region79: #{fwd.15} parent=72 // loop_footer_branch
                %256 = sbr.rel target = $region75
              $region80: #{fwd.15} parent=72 // loop_exit
                _
            $region73: #{fwd.15} parent=64 // pred_fallthru
              _
          $region65: #{fwd.15} parent=60 // pred_fallthru
            _
          %291 = vnop
        $region61: #{fwd.15} parent=15 // pred_fallthru
          _
        // Predicated region
        $region99: #{fwd.15} parent=15 // pred_check
          %p292 = pneg %p104
        $region100: #{fwd.15} parent=15 // pred_check_branch
          %294 = sbr.rel (%p292) target = $region102
        $region101: #{fwd.15} parent=15 // pred_region
          %s295 = sand.u32 %s94, 1
          %s296 = sand.u32 %s94, 1
          %s297 = smul.addr %s296, 8
          %s298 = scalar_lea.vmem [#allocation4], %s297
          %s299 = sadd.s32 %s18, 2
          %s300 = smul.addr %s17, 6
          %s301 = sadd.s32 %s299, %s300
          %s302 = smul.addr %s301, 4
          %s303 = scalar_lea.vmem %s2, %s302
          // Predicated region
          $region103: #{fwd.15} parent=101 // pred_check
            _
          $region104: #{fwd.15} parent=101 // pred_check_branch
            %305 = sbr.rel (0) target = $region106
          $region105: #{fwd.15} parent=101 // pred_region
            // Predicated region
            $region107: #{fwd.15} parent=105 // pred_check
              _
            $region108: #{fwd.15} parent=105 // pred_check_branch
              %307 = sbr.rel target = $region110
            $region109: #{fwd.15} parent=105 // pred_region
              // Predicated region
              $region122: #{fwd.15} parent=109 // pred_check
                _
              $region123: #{fwd.15} parent=109 // pred_check_branch
                %324 = sbr.rel (0) target = $region125
              $region124: #{fwd.15} parent=109 // pred_region
                loop: start=0, step=1, limit=1
                $region126: #{fwd.15} parent=124 // loop_pre_header
                  _
                $region127: #{fwd.15} parent=124 // loop_header
                  %s326 = sphi 0, %s330
                  %p327 = scmp.ge.s32.totalorder %s326, 1
                  %s331 = sphi %s303, %s303
                  %s332 = sphi %s298, %s298
                $region128: #{fwd.15} parent=124 // loop_header_branch
                  %329 = sbr.rel (%p327) target = $region132
                $region129: #{fwd.15} parent=124 // loop_body
                  _
                $region130: #{fwd.15} parent=124 // loop_footer
                  %s330 = sadd.s32 1, %s326
                $region131: #{fwd.15} parent=124 // loop_footer_branch
                  %325 = sbr.rel target = $region127
                $region132: #{fwd.15} parent=124 // loop_exit
                  _
                loop: start=0, step=1, limit=1
                $region133: #{fwd.15} parent=124 // loop_pre_header
                  _
                $region134: #{fwd.15} parent=124 // loop_header
                  %s335 = sphi 0, %s339
                  %p336 = scmp.ge.s32.totalorder %s335, 1
                  %s340 = sphi %s303, %s303
                  %s341 = sphi %s298, %s298
                $region135: #{fwd.15} parent=124 // loop_header_branch
                  %338 = sbr.rel (%p336) target = $region139
                $region136: #{fwd.15} parent=124 // loop_body
                  %v342 = vld [vmem:[%s340] sm:$0xf]
                  %343 = vst [vmem:[%s341] sm:$0xf] %v342
                  %v344 = vld [vmem:[%s340 + $0xc] sm:$0xf]
                  %345 = vst [vmem:[%s341 + $0x4] sm:$0xf] %v344
                $region137: #{fwd.15} parent=124 // loop_footer
                  %s339 = sadd.s32 1, %s335
                $region138: #{fwd.15} parent=124 // loop_footer_branch
                  %334 = sbr.rel target = $region134
                $region139: #{fwd.15} parent=124 // loop_exit
                  _
              $region125: #{fwd.15} parent=109 // pred_fallthru
                _
            $region110: #{fwd.15} parent=105 // pred_fallthru
              _
            // Predicated region
            $region111: #{fwd.15} parent=105 // pred_check
              _
            $region112: #{fwd.15} parent=105 // pred_check_branch
              %309 = sbr.rel (0) target = $region114
            $region113: #{fwd.15} parent=105 // pred_region
              loop: start=0, step=1, limit=1
              $region115: #{fwd.15} parent=113 // loop_pre_header
                _
              $region116: #{fwd.15} parent=113 // loop_header
                %s312 = sphi 0, %s316
                %p313 = scmp.ge.s32.totalorder %s312, 1
                %s317 = sphi %s303, %s303
                %s318 = sphi %s298, %s298
              $region117: #{fwd.15} parent=113 // loop_header_branch
                %315 = sbr.rel (%p313) target = $region121
              $region118: #{fwd.15} parent=113 // loop_body
                %v319 = vld [vmem:[%s317] sm:$0xf]
                %320 = vst [vmem:[%s318] sm:$0xf] %v319
                %v321 = vld [vmem:[%s317 + $0xc] sm:$0xf]
                %322 = vst [vmem:[%s318 + $0x4] sm:$0xf] %v321
              $region119: #{fwd.15} parent=113 // loop_footer
                %s316 = sadd.s32 1, %s312
              $region120: #{fwd.15} parent=113 // loop_footer_branch
                %311 = sbr.rel target = $region116
              $region121: #{fwd.15} parent=113 // loop_exit
                _
            $region114: #{fwd.15} parent=105 // pred_fallthru
              _
          $region106: #{fwd.15} parent=101 // pred_fallthru
            _
          %346 = vnop
        $region102: #{fwd.15} parent=15 // pred_fallthru
          _
        // Predicated region
        $region140: #{fwd.15} parent=15 // pred_check
          %p347 = pneg %p130
        $region141: #{fwd.15} parent=15 // pred_check_branch
          %349 = sbr.rel (%p347) target = $region143
        $region142: #{fwd.15} parent=15 // pred_region
          %p350 = scmp.lt.s32.totalorder %s17, 1
          %s351 = scalar_select %p350, %s17, 1
          %s352 = scalar_lea.vmem %s3, %s351
        $region143: #{fwd.15} parent=15 // pred_fallthru
          _
      $region16: #{fwd.15} parent=5 // pred_fallthru
        _
      %p353 = scmp.le.s32.totalorder 1, %s10
      %p354 = scmp.lt.s32.totalorder %s10, 3
      %p355 = pnand %p353, %p354
      %p356 = pneg %p355
      // Predicated region
      $region144: #{fwd.15} parent=5 // pred_check
        _
      $region145: #{fwd.15} parent=5 // pred_check_branch
        %358 = sbr.rel (%p355) target = $region147
      $region146: #{fwd.15} parent=5 // pred_region
        %s359 = ssub.s32 %s10, 1
        %s360 = sand.u32 %s37, 1
        %s361 = sand.u32 %s37, 1
        %s362 = smul.addr %s361, 8
        %s363 = scalar_lea.vmem [#allocation2], %s362
        // Predicated region
        $region148: #{fwd.15} parent=146 // pred_check
          %p364 = pneg %p50
        $region149: #{fwd.15} parent=146 // pred_check_branch
          %366 = sbr.rel (%p364) target = $region151
        $region150: #{fwd.15} parent=146 // pred_region
          _
        $region151: #{fwd.15} parent=146 // pred_fallthru
          _
        %s367 = sand.u32 %s67, 1
        %s368 = sand.u32 %s67, 1
        %s369 = smul.addr %s368, 8
        %s370 = scalar_lea.vmem [#allocation3], %s369
        // Predicated region
        $region152: #{fwd.15} parent=146 // pred_check
          %p371 = pneg %p80
        $region153: #{fwd.15} parent=146 // pred_check_branch
          %373 = sbr.rel (%p371) target = $region155
        $region154: #{fwd.15} parent=146 // pred_region
          _
        $region155: #{fwd.15} parent=146 // pred_fallthru
          _
        %s374 = sand.u32 %s97, 1
        %s375 = sand.u32 %s97, 1
        %s376 = smul.addr %s375, 8
        %s377 = scalar_lea.vmem [#allocation4], %s376
        // Predicated region
        $region156: #{fwd.15} parent=146 // pred_check
          %p378 = pneg %p110
        $region157: #{fwd.15} parent=146 // pred_check_branch
          %380 = sbr.rel (%p378) target = $region159
        $region158: #{fwd.15} parent=146 // pred_region
          _
        $region159: #{fwd.15} parent=146 // pred_fallthru
          _
        %s381 = sand.u32 %s37, 1
        %s382 = sand.u32 %s37, 1
        %s383 = smul.addr %s382, 8
        %s384 = scalar_lea.vmem [#allocation2], %s383
        %p385 = pneg %p50
        %p386 = pneg %p47
        %s387 = sand.u32 %s67, 1
        %s388 = sand.u32 %s67, 1
        %s389 = smul.addr %s388, 8
        %s390 = scalar_lea.vmem [#allocation3], %s389
        %p391 = pneg %p80
        %p392 = pneg %p77
        %s393 = sand.u32 %s97, 1
        %s394 = sand.u32 %s97, 1
        %s395 = smul.addr %s394, 8
        %s396 = scalar_lea.vmem [#allocation4], %s395
        %p397 = pneg %p110
        %p398 = pneg %p107
        %p399 = scmp.lt.s32.totalorder %s19, 1
        %s400 = scalar_select %p399, %s19, 1
        %s401 = scalar_lea.vmem %s3, %s400
        %p402 = pneg %p136
        %p403 = pneg %p133
        %p404 = pneg %p164
        %p405 = pneg %p161
        %p406 = scmp.lt.s32.totalorder %s19, 1
        %s407 = scalar_select %p406, %s19, 1
        %p408 = scmp.lt.s32.totalorder %s20, 0
        %s409 = scalar_select %p408, %s20, 0
        %s410 = smul.addr %s407, 2
        %s411 = sadd.s32 %s409, %s410
        %s412 = smul.addr %s411, 4
        %s413 = scalar_lea.vmem %s4, %s412
        %s414 = sadd.s32 %s20, 1
        %s415 = sadd.s32 %s20, 2
        %p416 = scmp.lt.s32.totalorder %s19, 1
        %s417 = scalar_select %p416, %s19, 1
        %s418 = scalar_lea.vmem %s3, %s417
        %p419 = scmp.lt.s32.totalorder %s19, 1
        %s420 = scalar_select %p419, %s19, 1
        %p421 = scmp.lt.s32.totalorder %s20, 0
        %s422 = scalar_select %p421, %s20, 0
        %s423 = smul.addr %s420, 2
        %s424 = sadd.s32 %s422, %s423
        %s425 = smul.addr %s424, 4
        %s426 = scalar_lea.vmem %s4, %s425
        %v428 = vld [vmem:[%s363] sm:$0xf]
        %v429 = vld [vmem:[%s363 + $0x4] sm:$0xf]
        %v430 = vld [vmem:[%s370] sm:$0xf]
        %v431 = vld [vmem:[%s370 + $0x4] sm:$0xf]
        %v432 = vld [vmem:[%s377] sm:$0xf]
        %v433 = vld [vmem:[%s377 + $0x4] sm:$0xf]
        %v434 = vld [vmem:[%s418] sm:$0x1]
        %v436 = vlaneseq
        %v437 = vshrl.u32 %v436, 7
        %v438 = vsub.s32 0, %v437
        %v439 = vrot.slane %v434, %v438
        %v443 = vunpack.c.l.b16 %v428
        %v444 = vunpack.c.l.b16 %v429
        %v445 = vpack.c.b16 %v444, %v443
        %v448 = vunpack.c.l.b16 %v430
        %v449 = vunpack.c.l.b16 %v431
        %v450 = vpack.c.b16 %v449, %v448
        %vm451 = vcmask 523264
        %v453 = vsel %vm451, %v445, 0
        %v456 = vsel %vm451, %v450, 0
        %458 = vmatprep.subr.bf16.mxu0 0
        %459 = vmatpush1.bf16.xpose.msra.mxu0 %v456
        %460 = vmatprep.subr.bf16.mxu0 0
        %461 = vmatpush1.bf16.xpose.msra.mxu0 0
        %462 = vmatprep.subr.bf16.mxu0 0
        %463 = vmatpush1.bf16.xpose.msra.mxu0 0
        %464 = vmatprep.subr.bf16.mxu0 0
        %465 = vmatpush1.bf16.xpose.msra.mxu0 0
        %466 = vmatprep.subr.bf16.mxu0 0
        %467 = vmatpush1.bf16.xpose.msra.mxu0 0
        %468 = vmatprep.subr.bf16.mxu0 0
        %469 = vmatpush1.bf16.xpose.msra.mxu0 0
        %470 = vmatprep.subr.bf16.mxu0 0
        %471 = vmatpush1.bf16.xpose.msra.mxu0 0
        %472 = vmatprep.subr.bf16.mxu0 0
        %473 = vmatpush1.bf16.xpose.msra.mxu0 0
        %474 = vmatprep.subr.bf16.mxu0 0
        %475 = vmatpush1.bf16.xpose.msra.mxu0 0
        %476 = vmatprep.subr.bf16.mxu0 0
        %477 = vmatpush1.bf16.xpose.msra.mxu0 0
        %478 = vmatprep.subr.bf16.mxu0 0
        %479 = vmatpush1.bf16.xpose.msra.mxu0 0
        %480 = vmatprep.subr.bf16.mxu0 0
        %481 = vmatpush1.bf16.xpose.msra.mxu0 0
        %482 = vmatprep.subr.bf16.mxu0 0
        %483 = vmatpush1.bf16.xpose.msra.mxu0 0
        %484 = vmatprep.subr.bf16.mxu0 0
        %485 = vmatpush1.bf16.xpose.msra.mxu0 0
        %486 = vmatprep.subr.bf16.mxu0 0
        %487 = vmatpush1.bf16.xpose.msra.mxu0 0
        %488 = vmatprep.subr.bf16.mxu0 0
        %489 = vmatpush1.bf16.xpose.msra.mxu0 0
        %490 = vmatprep.mubr.bf16.mxu0 0
        %491 = vmatmul.mubr.bf16.gmra.mrb[0].mxu0 %v453
        %v492 = vpop.f32.mrb[0].mxu0
        %v493 = vadd.f32 %v439, %v492
        %v494 = vpop.f32.mrb[0].mxu0
        %v495 = vpop.f32.mrb[0].mxu0
        %v496 = vadd.f32 %v439, %v495
        %v497 = vpop.f32.mrb[0].mxu0
        %498 = vdwg.mxu0
        %vm499 = vcmask 130048
        %v500 = vsel %vm499, %v493, -inf
        %501 = vmax.xlane.f32.xlu0 %v500
        %v502 = vpop.xlane.xlu0 %501
        %v503 = vsel %vm499, %v496, -inf
        %504 = vmax.xlane.f32.xlu0 %v503
        %v505 = vpop.xlane.xlu0 %504
        %v506 = vsub.f32 %v493, %v502
        %v507 = vsub.f32 %v496, %v505
        %v508 = vmul.f32 %v506, 1.442695
        %v509 = vpow.pop %v508
        %v510 = vmul.f32 %v507, 1.442695
        %v511 = vpow.pop %v510
        %v512 = vsel %vm499, %v509, 0.0
        %513 = vadd.xlane.f32.xlu0 %v512
        %v514 = vpop.xlane.xlu0 %513
        %v515 = vsel %vm499, %v511, 0.0
        %516 = vadd.xlane.f32.xlu0 %v515
        %v517 = vpop.xlane.xlu0 %516
        %v518 = vrcp.pop %v514
        %v519 = vrcp.pop %v517
        %v520 = vmul.f32 %v509, %v518
        %v521 = vmul.f32 %v511, %v519
        %v522 = vpack.c.bf16 %v521, %v520
        %v525 = vunpack.c.l.b16 %v432
        %v526 = vunpack.c.l.b16 %v433
        %v527 = vpack.c.b16 %v526, %v525
        %v530 = vsel %vm499, %v522, 0
        %532 = vmatprep.subr.bf16.mxu0 0
        %533 = vmatpush1.bf16.msra.mxu0 %v527
        %534 = vmatprep.subr.bf16.mxu0 0
        %535 = vmatpush1.bf16.msra.mxu0 0
        %536 = vmatprep.subr.bf16.mxu0 0
        %537 = vmatpush1.bf16.msra.mxu0 0
        %538 = vmatprep.subr.bf16.mxu0 0
        %539 = vmatpush1.bf16.msra.mxu0 0
        %540 = vmatprep.subr.bf16.mxu0 0
        %541 = vmatpush1.bf16.msra.mxu0 0
        %542 = vmatprep.subr.bf16.mxu0 0
        %543 = vmatpush1.bf16.msra.mxu0 0
        %544 = vmatprep.subr.bf16.mxu0 0
        %545 = vmatpush1.bf16.msra.mxu0 0
        %546 = vmatprep.subr.bf16.mxu0 0
        %547 = vmatpush1.bf16.msra.mxu0 0
        %548 = vmatprep.subr.bf16.mxu0 0
        %549 = vmatpush1.bf16.msra.mxu0 0
        %550 = vmatprep.subr.bf16.mxu0 0
        %551 = vmatpush1.bf16.msra.mxu0 0
        %552 = vmatprep.subr.bf16.mxu0 0
        %553 = vmatpush1.bf16.msra.mxu0 0
        %554 = vmatprep.subr.bf16.mxu0 0
        %555 = vmatpush1.bf16.msra.mxu0 0
        %556 = vmatprep.subr.bf16.mxu0 0
        %557 = vmatpush1.bf16.msra.mxu0 0
        %558 = vmatprep.subr.bf16.mxu0 0
        %559 = vmatpush1.bf16.msra.mxu0 0
        %560 = vmatprep.subr.bf16.mxu0 0
        %561 = vmatpush1.bf16.msra.mxu0 0
        %562 = vmatprep.subr.bf16.mxu0 0
        %563 = vmatpush1.bf16.msra.mxu0 0
        %564 = vmatprep.mubr.bf16.mxu0 0
        %565 = vmatmul.mubr.bf16.gmra.mrb[0].mxu0 %v530
        %v566 = vpop.f32.mrb[0].mxu0
        %v567 = vadd.f32 0.0, %v566
        %v568 = vpop.f32.mrb[0].mxu0
        %v569 = vpop.f32.mrb[0].mxu0
        %v570 = vadd.f32 0.0, %v569
        %v571 = vpop.f32.mrb[0].mxu0
        %572 = vdwg.mxu0
        %573 = vrot.lane.b32.xlu0 %v445, 64
        %v574 = vpop.permute.xlu0 %573
        %575 = vrot.lane.b32.xlu0 %v450, 64
        %v576 = vpop.permute.xlu0 %575
        %v578 = vsel %vm451, %v574, 0
        %v581 = vsel %vm451, %v576, 0
        %583 = vmatprep.subr.bf16.mxu0 0
        %584 = vmatpush1.bf16.xpose.msra.mxu0 %v581
        %585 = vmatprep.subr.bf16.mxu0 0
        %586 = vmatpush1.bf16.xpose.msra.mxu0 0
        %587 = vmatprep.subr.bf16.mxu0 0
        %588 = vmatpush1.bf16.xpose.msra.mxu0 0
        %589 = vmatprep.subr.bf16.mxu0 0
        %590 = vmatpush1.bf16.xpose.msra.mxu0 0
        %591 = vmatprep.subr.bf16.mxu0 0
        %592 = vmatpush1.bf16.xpose.msra.mxu0 0
        %593 = vmatprep.subr.bf16.mxu0 0
        %594 = vmatpush1.bf16.xpose.msra.mxu0 0
        %595 = vmatprep.subr.bf16.mxu0 0
        %596 = vmatpush1.bf16.xpose.msra.mxu0 0
        %597 = vmatprep.subr.bf16.mxu0 0
        %598 = vmatpush1.bf16.xpose.msra.mxu0 0
        %599 = vmatprep.subr.bf16.mxu0 0
        %600 = vmatpush1.bf16.xpose.msra.mxu0 0
        %601 = vmatprep.subr.bf16.mxu0 0
        %602 = vmatpush1.bf16.xpose.msra.mxu0 0
        %603 = vmatprep.subr.bf16.mxu0 0
        %604 = vmatpush1.bf16.xpose.msra.mxu0 0
        %605 = vmatprep.subr.bf16.mxu0 0
        %606 = vmatpush1.bf16.xpose.msra.mxu0 0
        %607 = vmatprep.subr.bf16.mxu0 0
        %608 = vmatpush1.bf16.xpose.msra.mxu0 0
        %609 = vmatprep.subr.bf16.mxu0 0
        %610 = vmatpush1.bf16.xpose.msra.mxu0 0
        %611 = vmatprep.subr.bf16.mxu0 0
        %612 = vmatpush1.bf16.xpose.msra.mxu0 0
        %613 = vmatprep.subr.bf16.mxu0 0
        %614 = vmatpush1.bf16.xpose.msra.mxu0 0
        %615 = vmatprep.mubr.bf16.mxu0 0
        %616 = vmatmul.mubr.bf16.gmra.mrb[0].mxu0 %v578
        %v617 = vpop.f32.mrb[0].mxu0
        %v618 = vadd.f32 %v439, %v617
        %v619 = vpop.f32.mrb[0].mxu0
        %v620 = vpop.f32.mrb[0].mxu0
        %v621 = vadd.f32 %v439, %v620
        %v622 = vpop.f32.mrb[0].mxu0
        %623 = vdwg.mxu0
        %v624 = vsel %vm499, %v618, -inf
        %625 = vmax.xlane.f32.xlu0 %v624
        %v626 = vpop.xlane.xlu0 %625
        %v627 = vsel %vm499, %v621, -inf
        %628 = vmax.xlane.f32.xlu0 %v627
        %v629 = vpop.xlane.xlu0 %628
        %v630 = vsub.f32 %v618, %v626
        %v631 = vsub.f32 %v621, %v629
        %v632 = vmul.f32 %v630, 1.442695
        %v633 = vpow.pop %v632
        %v634 = vmul.f32 %v631, 1.442695
        %v635 = vpow.pop %v634
        %v636 = vsel %vm499, %v633, 0.0
        %637 = vadd.xlane.f32.xlu0 %v636
        %v638 = vpop.xlane.xlu0 %637
        %v639 = vsel %vm499, %v635, 0.0
        %640 = vadd.xlane.f32.xlu0 %v639
        %v641 = vpop.xlane.xlu0 %640
        %v642 = vrcp.pop %v638
        %v643 = vrcp.pop %v641
        %v644 = vmul.f32 %v633, %v642
        %v645 = vmul.f32 %v635, %v643
        %v646 = vpack.c.bf16 %v645, %v644
        %647 = vrot.lane.b32.xlu0 %v527, 64
        %v648 = vpop.permute.xlu0 %647
        %v651 = vsel %vm499, %v646, 0
        %653 = vmatprep.subr.bf16.mxu0 0
        %654 = vmatpush1.bf16.msra.mxu0 %v648
        %655 = vmatprep.subr.bf16.mxu0 0
        %656 = vmatpush1.bf16.msra.mxu0 0
        %657 = vmatprep.subr.bf16.mxu0 0
        %658 = vmatpush1.bf16.msra.mxu0 0
        %659 = vmatprep.subr.bf16.mxu0 0
        %660 = vmatpush1.bf16.msra.mxu0 0
        %661 = vmatprep.subr.bf16.mxu0 0
        %662 = vmatpush1.bf16.msra.mxu0 0
        %663 = vmatprep.subr.bf16.mxu0 0
        %664 = vmatpush1.bf16.msra.mxu0 0
        %665 = vmatprep.subr.bf16.mxu0 0
        %666 = vmatpush1.bf16.msra.mxu0 0
        %667 = vmatprep.subr.bf16.mxu0 0
        %668 = vmatpush1.bf16.msra.mxu0 0
        %669 = vmatprep.subr.bf16.mxu0 0
        %670 = vmatpush1.bf16.msra.mxu0 0
        %671 = vmatprep.subr.bf16.mxu0 0
        %672 = vmatpush1.bf16.msra.mxu0 0
        %673 = vmatprep.subr.bf16.mxu0 0
        %674 = vmatpush1.bf16.msra.mxu0 0
        %675 = vmatprep.subr.bf16.mxu0 0
        %676 = vmatpush1.bf16.msra.mxu0 0
        %677 = vmatprep.subr.bf16.mxu0 0
        %678 = vmatpush1.bf16.msra.mxu0 0
        %679 = vmatprep.subr.bf16.mxu0 0
        %680 = vmatpush1.bf16.msra.mxu0 0
        %681 = vmatprep.subr.bf16.mxu0 0
        %682 = vmatpush1.bf16.msra.mxu0 0
        %683 = vmatprep.subr.bf16.mxu0 0
        %684 = vmatpush1.bf16.msra.mxu0 0
        %685 = vmatprep.mubr.bf16.mxu0 0
        %686 = vmatmul.mubr.bf16.gmra.mrb[0].mxu0 %v651
        %v687 = vpop.f32.mrb[0].mxu0
        %v688 = vadd.f32 0.0, %v687
        %v689 = vpop.f32.mrb[0].mxu0
        %v690 = vpop.f32.mrb[0].mxu0
        %v691 = vadd.f32 0.0, %v690
        %v692 = vpop.f32.mrb[0].mxu0
        %693 = vdwg.mxu0
        %696 = vrot.lane.b32.xlu0 %v688, 64
        %v697 = vpop.permute.xlu0 %696
        %698 = vrot.lane.b32.xlu0 %v691, 64
        %v699 = vpop.permute.xlu0 %698
        %v702 = vsel %vm451, %v567, %v697
        %v703 = vsel %vm451, %v570, %v699
        %v704 = vpack.c.bf16 %v703, %v702
        %v706 = vunpack.c.l.b16 %v704
        %v707 = vunpack.c.h.b16 %v704
        %v708 = vpack.c.b16 %v706, %v706
        %v709 = vpack.c.b16 %v707, %v707
        %712 = vst [vmem:[%s426] sm:$0xf] %v708
        %713 = vst [vmem:[%s426 + $0x4] sm:$0xf] %v709
        %p714 = scmp.lt.s32.totalorder %s19, 1
        %s715 = scalar_select %p714, %s19, 1
        %p716 = scmp.lt.s32.totalorder %s20, 0
        %s717 = scalar_select %p716, %s20, 0
        %s718 = smul.addr %s715, 2
        %s719 = sadd.s32 %s717, %s718
        %s720 = smul.addr %s719, 4
        %s721 = scalar_lea.vmem %s4, %s720
        // Predicated region
        $region160: #{fwd.15} parent=146 // pred_check
          %p722 = pneg %p161
        $region161: #{fwd.15} parent=146 // pred_check_branch
          %724 = sbr.rel (%p722) target = $region163
        $region162: #{fwd.15} parent=146 // pred_region
          _
        $region163: #{fwd.15} parent=146 // pred_fallthru
          _
      $region147: #{fwd.15} parent=5 // pred_fallthru
        _
      %p725 = scmp.le.s32.totalorder 2, %s10
      // Predicated region
      $region164: #{fwd.15} parent=5 // pred_check
        %p726 = pneg %p725
      $region165: #{fwd.15} parent=5 // pred_check_branch
        %728 = sbr.rel (%p726) target = $region167
      $region166: #{fwd.15} parent=5 // pred_region
        %s729 = ssub.s32 %s10, 2
        // Predicated region
        $region168: #{fwd.15} parent=166 // pred_check
          %p730 = pneg %p167
        $region169: #{fwd.15} parent=166 // pred_check_branch
          %732 = sbr.rel (%p730) target = $region171
        $region170: #{fwd.15} parent=166 // pred_region
          %p733 = scmp.lt.s32.totalorder %s21, 1
          %s734 = scalar_select %p733, %s21, 1
          %p735 = scmp.lt.s32.totalorder %s22, 0
          %s736 = scalar_select %p735, %s22, 0
          %s737 = smul.addr %s734, 2
          %s738 = sadd.s32 %s736, %s737
          %s739 = smul.addr %s738, 4
          %s740 = scalar_lea.vmem %s4, %s739
        $region171: #{fwd.15} parent=166 // pred_fallthru
          _
      $region167: #{fwd.15} parent=5 // pred_fallthru
        _
    $region6: #{fwd.15} parent=1 // loop_footer
      %s14 = sadd.s32 1, %s10
    $region7: #{fwd.15} parent=1 // loop_footer_branch
      %9 = sbr.rel target = $region3
    $region8: #{fwd.15} parent=1 // loop_exit
      _

// kernel: fwd.16
$region0: #{fwd.16}
  #allocation0 [shape = 'u32[]', space=smem, size = 0x4, offset = 0x4, fixed_abs, tag = 'smem constant byte address 0x4 - core index']
  #allocation1 [shape = 'u32[144,128]{1,0:T(1,128)}', space=vmem, size = 0x12000, scoped, tag = 'internal scratch']
  %s0 = inlined_call_operand.vmem [shape: bf16[32,128], index: 0, kind: input, shape index: {}]
  %s1 = inlined_call_operand.vmem [shape: bf16[128,128], index: 1, kind: input, shape index: {}]
  %s2 = inlined_call_operand.vmem [shape: f32[1,128], index: 2, kind: input, shape index: {}]
  %s3 = inlined_call_operand.vmem [shape: bf16[32,128], index: 3, kind: input, shape index: {}]
  %s4 = inlined_call_operand.vmem [shape: f32[1,128], index: 4, kind: input, shape index: {}]
  %s5 = inlined_call_operand.vmem [shape: f32[1,128], index: 5, kind: input, shape index: {}]
  %s6 = inlined_call_operand.vmem [shape: bf16[32,128], index: 6, kind: output, shape index: {}]
  %s7 = sld [smem:[#allocation0]]
  $region34: #{fwd.16} parent=0
    _
  %s9 = ssub.s32 1, %s7
  %s10 = scalar_select 0, %s9, %s7
  // Predicated region
  $region2: #{fwd.16} parent=0 // pred_check
    _
  $region3: #{fwd.16} parent=0 // pred_check_branch
    %12 = sbr.rel (0) target = $region5
  $region4: #{fwd.16} parent=0 // pred_region
    _
  $region5: #{fwd.16} parent=0 // pred_fallthru
    _
  // Predicated region
  $region6: #{fwd.16} parent=0 // pred_check
    _
  $region7: #{fwd.16} parent=0 // pred_check_branch
    %14 = sbr.rel (0) target = $region9
  $region8: #{fwd.16} parent=0 // pred_region
    _
  $region9: #{fwd.16} parent=0 // pred_fallthru
    _
  // Predicated region
  $region10: #{fwd.16} parent=0 // pred_check
    _
  $region11: #{fwd.16} parent=0 // pred_check_branch
    %16 = sbr.rel (0) target = $region13
  $region12: #{fwd.16} parent=0 // pred_region
    _
  $region13: #{fwd.16} parent=0 // pred_fallthru
    _
  // Predicated region
  $region14: #{fwd.16} parent=0 // pred_check
    _
  $region15: #{fwd.16} parent=0 // pred_check_branch
    %18 = sbr.rel (0) target = $region17
  $region16: #{fwd.16} parent=0 // pred_region
    _
  $region17: #{fwd.16} parent=0 // pred_fallthru
    _
  // Predicated region
  $region18: #{fwd.16} parent=0 // pred_check
    _
  $region19: #{fwd.16} parent=0 // pred_check_branch
    %20 = sbr.rel (0) target = $region21
  $region20: #{fwd.16} parent=0 // pred_region
    _
  $region21: #{fwd.16} parent=0 // pred_fallthru
    _
  // Predicated region
  $region22: #{fwd.16} parent=0 // pred_check
    _
  $region23: #{fwd.16} parent=0 // pred_check_branch
    %22 = sbr.rel (0) target = $region25
  $region24: #{fwd.16} parent=0 // pred_region
    _
  $region25: #{fwd.16} parent=0 // pred_fallthru
    _
  %v24 = vld [vmem:[%s0] sm:$0xf]
  %v25 = vld [vmem:[%s0 + $0x4] sm:$0xf]
  %v26 = vld [vmem:[%s0 + $0x8] sm:$0xf]
  %v27 = vld [vmem:[%s0 + $0xc] sm:$0xf]
  %v28 = vld [vmem:[%s1] sm:$0xf]
  %v29 = vld [vmem:[%s1 + $0x4] sm:$0xf]
  %v30 = vld [vmem:[%s1 + $0x8] sm:$0xf]
  %v31 = vld [vmem:[%s1 + $0xc] sm:$0xf]
  %v32 = vld [vmem:[%s1 + $0x10] sm:$0xf]
  %v33 = vld [vmem:[%s1 + $0x14] sm:$0xf]
  %v34 = vld [vmem:[%s1 + $0x18] sm:$0xf]
  %v35 = vld [vmem:[%s1 + $0x1c] sm:$0xf]
  %v36 = vld [vmem:[%s1 + $0x20] sm:$0xf]
  %v37 = vld [vmem:[%s1 + $0x24] sm:$0xf]
  %v38 = vld [vmem:[%s1 + $0x28] sm:$0xf]
  %v39 = vld [vmem:[%s1 + $0x2c] sm:$0xf]
  %v40 = vld [vmem:[%s1 + $0x30] sm:$0xf]
  %v41 = vld [vmem:[%s1 + $0x34] sm:$0xf]
  %v42 = vld [vmem:[%s1 + $0x38] sm:$0xf]
  %v43 = vld [vmem:[%s1 + $0x3c] sm:$0xf]
  %v44 = vld [vmem:[%s2] sm:$0x1]
  %v46 = vlaneseq
  %v47 = vshrl.u32 %v46, 7
  %v48 = vsub.s32 0, %v47
  %v49 = vrot.slane %v44, %v48
  %v55 = vunpack.c.l.b16 %v24
  %v56 = vunpack.c.l.b16 %v25
  %v57 = vunpack.c.l.b16 %v26
  %v58 = vunpack.c.l.b16 %v27
  %v59 = vpack.c.b16 %v56, %v55
  %v60 = vpack.c.b16 %v58, %v57
  %v79 = vunpack.c.l.b16 %v28
  %v80 = vunpack.c.l.b16 %v29
  %v81 = vunpack.c.l.b16 %v30
  %v82 = vunpack.c.l.b16 %v31
  %v83 = vunpack.c.l.b16 %v32
  %v84 = vunpack.c.l.b16 %v33
  %v85 = vunpack.c.l.b16 %v34
  %v86 = vunpack.c.l.b16 %v35
  %v87 = vunpack.c.l.b16 %v36
  %v88 = vunpack.c.l.b16 %v37
  %v89 = vunpack.c.l.b16 %v38
  %v90 = vunpack.c.l.b16 %v39
  %v91 = vunpack.c.l.b16 %v40
  %v92 = vunpack.c.l.b16 %v41
  %v93 = vunpack.c.l.b16 %v42
  %v94 = vunpack.c.l.b16 %v43
  %v95 = vpack.c.b16 %v80, %v79
  %v96 = vpack.c.b16 %v82, %v81
  %v97 = vpack.c.b16 %v84, %v83
  %v98 = vpack.c.b16 %v86, %v85
  %v99 = vpack.c.b16 %v88, %v87
  %v100 = vpack.c.b16 %v90, %v89
  %v101 = vpack.c.b16 %v92, %v91
  %v102 = vpack.c.b16 %v94, %v93
  %111 = vmatprep.subr.bf16.mxu0 0
  %112 = vmatpush1.bf16.msra.mxu0 %v95
  %113 = vmatprep.subr.bf16.mxu0 0
  %114 = vmatpush1.bf16.msra.mxu0 %v96
  %115 = vmatprep.subr.bf16.mxu0 0
  %116 = vmatpush1.bf16.msra.mxu0 %v97
  %117 = vmatprep.subr.bf16.mxu0 0
  %118 = vmatpush1.bf16.msra.mxu0 %v98
  %119 = vmatprep.subr.bf16.mxu0 0
  %120 = vmatpush1.bf16.msra.mxu0 %v99
  %121 = vmatprep.subr.bf16.mxu0 0
  %122 = vmatpush1.bf16.msra.mxu0 %v100
  %123 = vmatprep.subr.bf16.mxu0 0
  %124 = vmatpush1.bf16.msra.mxu0 %v101
  %125 = vmatprep.subr.bf16.mxu0 0
  %126 = vmatpush1.bf16.msra.mxu0 %v102
  %127 = vmatprep.subr.bf16.mxu0 0
  %128 = vmatpush1.bf16.msra.mxu0 0
  %129 = vmatprep.subr.bf16.mxu0 0
  %130 = vmatpush1.bf16.msra.mxu0 0
  %131 = vmatprep.subr.bf16.mxu0 0
  %132 = vmatpush1.bf16.msra.mxu0 0
  %133 = vmatprep.subr.bf16.mxu0 0
  %134 = vmatpush1.bf16.msra.mxu0 0
  %135 = vmatprep.subr.bf16.mxu0 0
  %136 = vmatpush1.bf16.msra.mxu0 0
  %137 = vmatprep.subr.bf16.mxu0 0
  %138 = vmatpush1.bf16.msra.mxu0 0
  %139 = vmatprep.subr.bf16.mxu0 0
  %140 = vmatpush1.bf16.msra.mxu0 0
  %141 = vmatprep.subr.bf16.mxu0 0
  %142 = vmatpush1.bf16.msra.mxu0 0
  %143 = vmatprep.mubr.bf16.mxu0 0
  %144 = vmatmul.mubr.bf16.gmra.mrb[0].mxu0 %v59
  %v145 = vpop.f32.mrb[0].mxu0
  %v146 = vadd.f32 %v49, %v145
  %v147 = vpop.f32.mrb[0].mxu0
  %v148 = vpop.f32.mrb[0].mxu0
  %v149 = vadd.f32 %v49, %v148
  %v150 = vpop.f32.mrb[0].mxu0
  %151 = vmatprep.mubr.bf16.mxu0 0
  %152 = vmatmul.mubr.bf16.gmra.mrb[0].mxu0 %v60
  %v153 = vpop.f32.mrb[0].mxu0
  %v154 = vadd.f32 %v49, %v153
  %v155 = vpop.f32.mrb[0].mxu0
  %v156 = vpop.f32.mrb[0].mxu0
  %v157 = vadd.f32 %v49, %v156
  %v158 = vpop.f32.mrb[0].mxu0
  %159 = vdwg.mxu0
  %v160 = vld [vmem:[%s3] sm:$0xf]
  %v161 = vld [vmem:[%s3 + $0x4] sm:$0xf]
  %v162 = vld [vmem:[%s3 + $0x8] sm:$0xf]
  %v163 = vld [vmem:[%s3 + $0xc] sm:$0xf]
  %v164 = vunpack.c.l.bf16 %v160
  %v165 = vunpack.c.l.bf16 %v161
  %v166 = vunpack.c.l.bf16 %v162
  %v167 = vunpack.c.l.bf16 %v163
  %v168 = vadd.f32 %v146, %v164
  %v169 = vadd.f32 %v149, %v165
  %v170 = vadd.f32 %v154, %v166
  %v171 = vadd.f32 %v157, %v167
  %v172 = vld [vmem:[%s4] sm:$0x1]
  %v173 = vld [vmem:[%s5] sm:$0x1]
  %174 = vadd.xlane.f32.xlu0 %v168
  %v175 = vpop.xlane.xlu0 %174
  %176 = vadd.xlane.f32.xlu0 %v169
  %v177 = vpop.xlane.xlu0 %176
  %178 = vadd.xlane.f32.xlu0 %v170
  %v179 = vpop.xlane.xlu0 %178
  %180 = vadd.xlane.f32.xlu0 %v171
  %v181 = vpop.xlane.xlu0 %180
  %v182 = vrcp.pop 128.0
  %v183 = vmul.f32 %v175, %v182
  %v184 = vmul.f32 %v177, %v182
  %v185 = vmul.f32 %v179, %v182
  %v186 = vmul.f32 %v181, %v182
  %v187 = vsub.f32 %v168, %v183
  %v188 = vsub.f32 %v169, %v184
  %v189 = vsub.f32 %v170, %v185
  %v190 = vsub.f32 %v171, %v186
  %v191 = vmul.f32 %v187, %v187
  %v192 = vmul.f32 %v188, %v188
  %v193 = vmul.f32 %v189, %v189
  %v194 = vmul.f32 %v190, %v190
  %195 = vadd.xlane.f32.xlu0 %v191
  %v196 = vpop.xlane.xlu0 %195
  %197 = vadd.xlane.f32.xlu0 %v192
  %v198 = vpop.xlane.xlu0 %197
  %199 = vadd.xlane.f32.xlu0 %v193
  %v200 = vpop.xlane.xlu0 %199
  %201 = vadd.xlane.f32.xlu0 %v194
  %v202 = vpop.xlane.xlu0 %201
  %v203 = vmul.f32 %v196, %v182
  %v204 = vmul.f32 %v198, %v182
  %v205 = vmul.f32 %v200, %v182
  %v206 = vmul.f32 %v202, %v182
  %v207 = vadd.f32 %v203, 1e-12
  %v208 = vadd.f32 %v204, 1e-12
  %v209 = vadd.f32 %v205, 1e-12
  %v210 = vadd.f32 %v206, 1e-12
  %v211 = vrsqrt.pop %v207
  %v212 = vrsqrt.pop %v208
  %v213 = vrsqrt.pop %v209
  %v214 = vrsqrt.pop %v210
  %v215 = vmul.f32 %v187, %v211
  %v216 = vmul.f32 %v188, %v212
  %v217 = vmul.f32 %v189, %v213
  %v218 = vmul.f32 %v190, %v214
  %v220 = vlaneseq
  %v221 = vshrl.u32 %v220, 7
  %v222 = vsub.s32 0, %v221
  %v223 = vrot.slane %v172, %v222
  %v225 = vmul.f32 %v215, %v223
  %v226 = vmul.f32 %v216, %v223
  %v227 = vmul.f32 %v217, %v223
  %v228 = vmul.f32 %v218, %v223
  %v230 = vlaneseq
  %v231 = vshrl.u32 %v230, 7
  %v232 = vsub.s32 0, %v231
  %v233 = vrot.slane %v173, %v232
  %v235 = vadd.f32 %v225, %v233
  %v236 = vadd.f32 %v226, %v233
  %v237 = vadd.f32 %v227, %v233
  %v238 = vadd.f32 %v228, %v233
  %v239 = vpack.c.bf16 %v236, %v235
  %v240 = vpack.c.bf16 %v238, %v237
  %v243 = vunpack.c.l.b16 %v239
  %v244 = vunpack.c.h.b16 %v239
  %v245 = vunpack.c.l.b16 %v240
  %v246 = vunpack.c.h.b16 %v240
  %v247 = vpack.c.b16 %v243, %v243
  %v248 = vpack.c.b16 %v244, %v244
  %v249 = vpack.c.b16 %v245, %v245
  %v250 = vpack.c.b16 %v246, %v246
  %255 = vst [vmem:[%s6] sm:$0xf] %v247
  %256 = vst [vmem:[%s6 + $0x4] sm:$0xf] %v248
  %257 = vst [vmem:[%s6 + $0x8] sm:$0xf] %v249
  %258 = vst [vmem:[%s6 + $0xc] sm:$0xf] %v250
  // Predicated region
  $region26: #{fwd.16} parent=0 // pred_check
    _
  $region27: #{fwd.16} parent=0 // pred_check_branch
    %260 = sbr.rel (0) target = $region29
  $region28: #{fwd.16} parent=0 // pred_region
    _
  $region29: #{fwd.16} parent=0 // pred_fallthru
    _
  // Predicated region
  $region30: #{fwd.16} parent=0 // pred_check
    _
  $region31: #{fwd.16} parent=0 // pred_check_branch
    %262 = sbr.rel (0) target = $region33
  $region32: #{fwd.16} parent=0 // pred_region
    _
  $region33: #{fwd.16} parent=0 // pred_fallthru
    _

// kernel: fwd.17
$region0: #{fwd.17}
  #allocation0 [shape = 'u32[]', space=smem, size = 0x4, offset = 0x4, fixed_abs, tag = 'smem constant byte address 0x4 - core index']
  #allocation1 [shape = 'u32[144,128]{1,0:T(1,128)}', space=vmem, size = 0x12000, scoped, tag = 'internal scratch']
  %s0 = inlined_call_operand.vmem [shape: bf16[32,128], index: 0, kind: input, shape index: {}]
  %s1 = inlined_call_operand.vmem [shape: bf16[128,512], index: 1, kind: input, shape index: {}]
  %s2 = inlined_call_operand.vmem [shape: f32[1,512], index: 2, kind: input, shape index: {}]
  %s3 = inlined_call_operand.vmem [shape: bf16[32,512], index: 3, kind: output, shape index: {}]
  %s4 = sld [smem:[#allocation0]]
  $region22: #{fwd.17} parent=0
    _
  %s6 = ssub.s32 1, %s4
  %s7 = scalar_select 0, %s6, %s4
  // Predicated region
  $region2: #{fwd.17} parent=0 // pred_check
    _
  $region3: #{fwd.17} parent=0 // pred_check_branch
    %9 = sbr.rel (0) target = $region5
  $region4: #{fwd.17} parent=0 // pred_region
    _
  $region5: #{fwd.17} parent=0 // pred_fallthru
    _
  // Predicated region
  $region6: #{fwd.17} parent=0 // pred_check
    _
  $region7: #{fwd.17} parent=0 // pred_check_branch
    %11 = sbr.rel (0) target = $region9
  $region8: #{fwd.17} parent=0 // pred_region
    _
  $region9: #{fwd.17} parent=0 // pred_fallthru
    _
  // Predicated region
  $region10: #{fwd.17} parent=0 // pred_check
    _
  $region11: #{fwd.17} parent=0 // pred_check_branch
    %13 = sbr.rel (0) target = $region13
  $region12: #{fwd.17} parent=0 // pred_region
    _
  $region13: #{fwd.17} parent=0 // pred_fallthru
    _
  %v15 = vld [vmem:[%s0] sm:$0xf]
  %v16 = vld [vmem:[%s0 + $0x4] sm:$0xf]
  %v17 = vld [vmem:[%s0 + $0x8] sm:$0xf]
  %v18 = vld [vmem:[%s0 + $0xc] sm:$0xf]
  %v19 = vld [vmem:[%s1] sm:$0xff]
  %v20 = vld [vmem:[%s1 + $0x8] sm:$0xff]
  %v21 = vld [vmem:[%s1 + $0x10] sm:$0xff]
  %v22 = vld [vmem:[%s1 + $0x18] sm:$0xff]
  %v23 = vld [vmem:[%s1 + $0x20] sm:$0xff]
  %v24 = vld [vmem:[%s1 + $0x28] sm:$0xff]
  %v25 = vld [vmem:[%s1 + $0x30] sm:$0xff]
  %v26 = vld [vmem:[%s1 + $0x38] sm:$0xff]
  %v27 = vld [vmem:[%s1 + $0x40] sm:$0xff]
  %v28 = vld [vmem:[%s1 + $0x48] sm:$0xff]
  %v29 = vld [vmem:[%s1 + $0x50] sm:$0xff]
  %v30 = vld [vmem:[%s1 + $0x58] sm:$0xff]
  %v31 = vld [vmem:[%s1 + $0x60] sm:$0xff]
  %v32 = vld [vmem:[%s1 + $0x68] sm:$0xff]
  %v33 = vld [vmem:[%s1 + $0x70] sm:$0xff]
  %v34 = vld [vmem:[%s1 + $0x78] sm:$0xff]
  %v35 = vld [vmem:[%s1 + $0x80] sm:$0xff]
  %v36 = vld [vmem:[%s1 + $0x88] sm:$0xff]
  %v37 = vld [vmem:[%s1 + $0x90] sm:$0xff]
  %v38 = vld [vmem:[%s1 + $0x98] sm:$0xff]
  %v39 = vld [vmem:[%s1 + $0xa0] sm:$0xff]
  %v40 = vld [vmem:[%s1 + $0xa8] sm:$0xff]
  %v41 = vld [vmem:[%s1 + $0xb0] sm:$0xff]
  %v42 = vld [vmem:[%s1 + $0xb8] sm:$0xff]
  %v43 = vld [vmem:[%s1 + $0xc0] sm:$0xff]
  %v44 = vld [vmem:[%s1 + $0xc8] sm:$0xff]
  %v45 = vld [vmem:[%s1 + $0xd0] sm:$0xff]
  %v46 = vld [vmem:[%s1 + $0xd8] sm:$0xff]
  %v47 = vld [vmem:[%s1 + $0xe0] sm:$0xff]
  %v48 = vld [vmem:[%s1 + $0xe8] sm:$0xff]
  %v49 = vld [vmem:[%s1 + $0xf0] sm:$0xff]
  %v50 = vld [vmem:[%s1 + $0xf8] sm:$0xff]
  %v51 = vld [vmem:[%s2] sm:$0xf]
  %v53 = vlaneseq
  %v54 = vshrl.u32 %v53, 7
  %v55 = vsub.s32 0, %v54
  %v56 = vrot.slane %v51, %v55
  %v57 = vlaneseq
  %v58 = vshrl.u32 %v57, 7
  %v59 = vsub.s32 1, %v58
  %v60 = vrot.slane %v51, %v59
  %v61 = vlaneseq
  %v62 = vshrl.u32 %v61, 7
  %v63 = vsub.s32 2, %v62
  %v64 = vrot.slane %v51, %v63
  %v65 = vlaneseq
  %v66 = vshrl.u32 %v65, 7
  %v67 = vsub.s32 3, %v66
  %v68 = vrot.slane %v51, %v67
  %v77 = vunpack.c.l.b16 %v15
  %v78 = vunpack.c.l.b16 %v16
  %v79 = vunpack.c.l.b16 %v17
  %v80 = vunpack.c.l.b16 %v18
  %v81 = vpack.c.b16 %v78, %v77
  %v82 = vpack.c.b16 %v80, %v79
  %v117 = vunpack.c.l.b16 %v19
  %v118 = vunpack.c.h.b16 %v19
  %v119 = vunpack.c.l.b16 %v20
  %v120 = vunpack.c.h.b16 %v20
  %v121 = vunpack.c.l.b16 %v21
  %v122 = vunpack.c.h.b16 %v21
  %v123 = vunpack.c.l.b16 %v22
  %v124 = vunpack.c.h.b16 %v22
  %v125 = vunpack.c.l.b16 %v23
  %v126 = vunpack.c.h.b16 %v23
  %v127 = vunpack.c.l.b16 %v24
  %v128 = vunpack.c.h.b16 %v24
  %v129 = vunpack.c.l.b16 %v25
  %v130 = vunpack.c.h.b16 %v25
  %v131 = vunpack.c.l.b16 %v26
  %v132 = vunpack.c.h.b16 %v26
  %v133 = vunpack.c.l.b16 %v27
  %v134 = vunpack.c.h.b16 %v27
  %v135 = vunpack.c.l.b16 %v28
  %v136 = vunpack.c.h.b16 %v28
  %v137 = vunpack.c.l.b16 %v29
  %v138 = vunpack.c.h.b16 %v29
  %v139 = vunpack.c.l.b16 %v30
  %v140 = vunpack.c.h.b16 %v30
  %v141 = vunpack.c.l.b16 %v31
  %v142 = vunpack.c.h.b16 %v31
  %v143 = vunpack.c.l.b16 %v32
  %v144 = vunpack.c.h.b16 %v32
  %v145 = vunpack.c.l.b16 %v33
  %v146 = vunpack.c.h.b16 %v33
  %v147 = vunpack.c.l.b16 %v34
  %v148 = vunpack.c.h.b16 %v34
  %v149 = vunpack.c.l.b16 %v35
  %v150 = vunpack.c.h.b16 %v35
  %v151 = vunpack.c.l.b16 %v36
  %v152 = vunpack.c.h.b16 %v36
  %v153 = vunpack.c.l.b16 %v37
  %v154 = vunpack.c.h.b16 %v37
  %v155 = vunpack.c.l.b16 %v38
  %v156 = vunpack.c.h.b16 %v38
  %v157 = vunpack.c.l.b16 %v39
  %v158 = vunpack.c.h.b16 %v39
  %v159 = vunpack.c.l.b16 %v40
  %v160 = vunpack.c.h.b16 %v40
  %v161 = vunpack.c.l.b16 %v41
  %v162 = vunpack.c.h.b16 %v41
  %v163 = vunpack.c.l.b16 %v42
  %v164 = vunpack.c.h.b16 %v42
  %v165 = vunpack.c.l.b16 %v43
  %v166 = vunpack.c.h.b16 %v43
  %v167 = vunpack.c.l.b16 %v44
  %v168 = vunpack.c.h.b16 %v44
  %v169 = vunpack.c.l.b16 %v45
  %v170 = vunpack.c.h.b16 %v45
  %v171 = vunpack.c.l.b16 %v46
  %v172 = vunpack.c.h.b16 %v46
  %v173 = vunpack.c.l.b16 %v47
  %v174 = vunpack.c.h.b16 %v47
  %v175 = vunpack.c.l.b16 %v48
  %v176 = vunpack.c.h.b16 %v48
  %v177 = vunpack.c.l.b16 %v49
  %v178 = vunpack.c.h.b16 %v49
  %v179 = vunpack.c.l.b16 %v50
  %v180 = vunpack.c.h.b16 %v50
  %v181 = vpack.c.b16 %v121, %v117
  %v182 = vpack.c.b16 %v122, %v118
  %v183 = vpack.c.b16 %v123, %v119
  %v184 = vpack.c.b16 %v124, %v120
  %v185 = vpack.c.b16 %v129, %v125
  %v186 = vpack.c.b16 %v130, %v126
  %v187 = vpack.c.b16 %v131, %v127
  %v188 = vpack.c.b16 %v132, %v128
  %v189 = vpack.c.b16 %v137, %v133
  %v190 = vpack.c.b16 %v138, %v134
  %v191 = vpack.c.b16 %v139, %v135
  %v192 = vpack.c.b16 %v140, %v136
  %v193 = vpack.c.b16 %v145, %v141
  %v194 = vpack.c.b16 %v146, %v142
  %v195 = vpack.c.b16 %v147, %v143
  %v196 = vpack.c.b16 %v148, %v144
  %v197 = vpack.c.b16 %v153, %v149
  %v198 = vpack.c.b16 %v154, %v150
  %v199 = vpack.c.b16 %v155, %v151
  %v200 = vpack.c.b16 %v156, %v152
  %v201 = vpack.c.b16 %v161, %v157
  %v202 = vpack.c.b16 %v162, %v158
  %v203 = vpack.c.b16 %v163, %v159
  %v204 = vpack.c.b16 %v164, %v160
  %v205 = vpack.c.b16 %v169, %v165
  %v206 = vpack.c.b16 %v170, %v166
  %v207 = vpack.c.b16 %v171, %v167
  %v208 = vpack.c.b16 %v172, %v168
  %v209 = vpack.c.b16 %v177, %v173
  %v210 = vpack.c.b16 %v178, %v174
  %v211 = vpack.c.b16 %v179, %v175
  %v212 = vpack.c.b16 %v180, %v176
  %245 = vmatprep.subr.bf16.mxu0 %v182
  %246 = vmatpush1.bf16.msra.mxu0 %v181
  %247 = vmatprep.subr.bf16.mxu0 %v186
  %248 = vmatpush1.bf16.msra.mxu0 %v185
  %249 = vmatprep.subr.bf16.mxu0 %v190
  %250 = vmatpush1.bf16.msra.mxu0 %v189
  %251 = vmatprep.subr.bf16.mxu0 %v194
  %252 = vmatpush1.bf16.msra.mxu0 %v193
  %253 = vmatprep.subr.bf16.mxu0 %v198
  %254 = vmatpush1.bf16.msra.mxu0 %v197
  %255 = vmatprep.subr.bf16.mxu0 %v202
  %256 = vmatpush1.bf16.msra.mxu0 %v201
  %257 = vmatprep.subr.bf16.mxu0 %v206
  %258 = vmatpush1.bf16.msra.mxu0 %v205
  %259 = vmatprep.subr.bf16.mxu0 %v210
  %260 = vmatpush1.bf16.msra.mxu0 %v209
  %261 = vmatprep.subr.bf16.mxu0 0
  %262 = vmatpush1.bf16.msra.mxu0 0
  %263 = vmatprep.subr.bf16.mxu0 0
  %264 = vmatpush1.bf16.msra.mxu0 0
  %265 = vmatprep.subr.bf16.mxu0 0
  %266 = vmatpush1.bf16.msra.mxu0 0
  %267 = vmatprep.subr.bf16.mxu0 0
  %268 = vmatpush1.bf16.msra.mxu0 0
  %269 = vmatprep.subr.bf16.mxu0 0
  %270 = vmatpush1.bf16.msra.mxu0 0
  %271 = vmatprep.subr.bf16.mxu0 0
  %272 = vmatpush1.bf16.msra.mxu0 0
  %273 = vmatprep.subr.bf16.mxu0 0
  %274 = vmatpush1.bf16.msra.mxu0 0
  %275 = vmatprep.subr.bf16.mxu0 0
  %276 = vmatpush1.bf16.msra.mxu0 0
  %277 = vmatprep.mubr.bf16.mxu0 0
  %278 = vmatmul.mubr.bf16.gmra.mrb[0].mxu0 %v81
  %v279 = vpop.f32.mrb[0].mxu0
  %v280 = vadd.f32 %v56, %v279
  %v281 = vpop.f32.mrb[0].mxu0
  %v282 = vadd.f32 %v60, %v281
  %v283 = vpop.f32.mrb[0].mxu0
  %v284 = vadd.f32 %v56, %v283
  %v285 = vpop.f32.mrb[0].mxu0
  %v286 = vadd.f32 %v60, %v285
  %287 = vmatprep.mubr.bf16.mxu0 0
  %288 = vmatmul.mubr.bf16.gmra.mrb[0].mxu0 %v82
  %v289 = vpop.f32.mrb[0].mxu0
  %v290 = vadd.f32 %v56, %v289
  %v291 = vpop.f32.mrb[0].mxu0
  %v292 = vadd.f32 %v60, %v291
  %v293 = vpop.f32.mrb[0].mxu0
  %v294 = vadd.f32 %v56, %v293
  %v295 = vpop.f32.mrb[0].mxu0
  %v296 = vadd.f32 %v60, %v295
  %297 = vdwg.mxu0
  %298 = vmatprep.subr.bf16.mxu0 %v184
  %299 = vmatpush1.bf16.msra.mxu0 %v183
  %300 = vmatprep.subr.bf16.mxu0 %v188
  %301 = vmatpush1.bf16.msra.mxu0 %v187
  %302 = vmatprep.subr.bf16.mxu0 %v192
  %303 = vmatpush1.bf16.msra.mxu0 %v191
  %304 = vmatprep.subr.bf16.mxu0 %v196
  %305 = vmatpush1.bf16.msra.mxu0 %v195
  %306 = vmatprep.subr.bf16.mxu0 %v200
  %307 = vmatpush1.bf16.msra.mxu0 %v199
  %308 = vmatprep.subr.bf16.mxu0 %v204
  %309 = vmatpush1.bf16.msra.mxu0 %v203
  %310 = vmatprep.subr.bf16.mxu0 %v208
  %311 = vmatpush1.bf16.msra.mxu0 %v207
  %312 = vmatprep.subr.bf16.mxu0 %v212
  %313 = vmatpush1.bf16.msra.mxu0 %v211
  %314 = vmatprep.subr.bf16.mxu0 0
  %315 = vmatpush1.bf16.msra.mxu0 0
  %316 = vmatprep.subr.bf16.mxu0 0
  %317 = vmatpush1.bf16.msra.mxu0 0
  %318 = vmatprep.subr.bf16.mxu0 0
  %319 = vmatpush1.bf16.msra.mxu0 0
  %320 = vmatprep.subr.bf16.mxu0 0
  %321 = vmatpush1.bf16.msra.mxu0 0
  %322 = vmatprep.subr.bf16.mxu0 0
  %323 = vmatpush1.bf16.msra.mxu0 0
  %324 = vmatprep.subr.bf16.mxu0 0
  %325 = vmatpush1.bf16.msra.mxu0 0
  %326 = vmatprep.subr.bf16.mxu0 0
  %327 = vmatpush1.bf16.msra.mxu0 0
  %328 = vmatprep.subr.bf16.mxu0 0
  %329 = vmatpush1.bf16.msra.mxu0 0
  %330 = vmatprep.mubr.bf16.mxu0 0
  %331 = vmatmul.mubr.bf16.gmra.mrb[0].mxu0 %v81
  %v332 = vpop.f32.mrb[0].mxu0
  %v333 = vadd.f32 %v64, %v332
  %v334 = vpop.f32.mrb[0].mxu0
  %v335 = vadd.f32 %v68, %v334
  %v336 = vpop.f32.mrb[0].mxu0
  %v337 = vadd.f32 %v64, %v336
  %v338 = vpop.f32.mrb[0].mxu0
  %v339 = vadd.f32 %v68, %v338
  %340 = vmatprep.mubr.bf16.mxu0 0
  %341 = vmatmul.mubr.bf16.gmra.mrb[0].mxu0 %v82
  %v342 = vpop.f32.mrb[0].mxu0
  %v343 = vadd.f32 %v64, %v342
  %v344 = vpop.f32.mrb[0].mxu0
  %v345 = vadd.f32 %v68, %v344
  %v346 = vpop.f32.mrb[0].mxu0
  %v347 = vadd.f32 %v64, %v346
  %v348 = vpop.f32.mrb[0].mxu0
  %v349 = vadd.f32 %v68, %v348
  %350 = vdwg.mxu0
  %v351 = vmul.f32 %v280, 0.5
  %v352 = vmul.f32 %v282, 0.5
  %v353 = vmul.f32 %v333, 0.5
  %v354 = vmul.f32 %v335, 0.5
  %v355 = vmul.f32 %v284, 0.5
  %v356 = vmul.f32 %v286, 0.5
  %v357 = vmul.f32 %v337, 0.5
  %v358 = vmul.f32 %v339, 0.5
  %v359 = vmul.f32 %v290, 0.5
  %v360 = vmul.f32 %v292, 0.5
  %v361 = vmul.f32 %v343, 0.5
  %v362 = vmul.f32 %v345, 0.5
  %v363 = vmul.f32 %v294, 0.5
  %v364 = vmul.f32 %v296, 0.5
  %v365 = vmul.f32 %v347, 0.5
  %v366 = vmul.f32 %v349, 0.5
  %v367 = vmul.f32 %v280, 0.044715
  %v368 = vmul.f32 %v282, 0.044715
  %v369 = vmul.f32 %v333, 0.044715
  %v370 = vmul.f32 %v335, 0.044715
  %v371 = vmul.f32 %v284, 0.044715
  %v372 = vmul.f32 %v286, 0.044715
  %v373 = vmul.f32 %v337, 0.044715
  %v374 = vmul.f32 %v339, 0.044715
  %v375 = vmul.f32 %v290, 0.044715
  %v376 = vmul.f32 %v292, 0.044715
  %v377 = vmul.f32 %v343, 0.044715
  %v378 = vmul.f32 %v345, 0.044715
  %v379 = vmul.f32 %v294, 0.044715
  %v380 = vmul.f32 %v296, 0.044715
  %v381 = vmul.f32 %v347, 0.044715
  %v382 = vmul.f32 %v349, 0.044715
  %v383 = vmul.f32 %v367, %v280
  %v384 = vmul.f32 %v368, %v282
  %v385 = vmul.f32 %v369, %v333
  %v386 = vmul.f32 %v370, %v335
  %v387 = vmul.f32 %v371, %v284
  %v388 = vmul.f32 %v372, %v286
  %v389 = vmul.f32 %v373, %v337
  %v390 = vmul.f32 %v374, %v339
  %v391 = vmul.f32 %v375, %v290
  %v392 = vmul.f32 %v376, %v292
  %v393 = vmul.f32 %v377, %v343
  %v394 = vmul.f32 %v378, %v345
  %v395 = vmul.f32 %v379, %v294
  %v396 = vmul.f32 %v380, %v296
  %v397 = vmul.f32 %v381, %v347
  %v398 = vmul.f32 %v382, %v349
  %v399 = vmul.f32 %v383, %v280
  %v400 = vmul.f32 %v384, %v282
  %v401 = vmul.f32 %v385, %v333
  %v402 = vmul.f32 %v386, %v335
  %v403 = vmul.f32 %v387, %v284
  %v404 = vmul.f32 %v388, %v286
  %v405 = vmul.f32 %v389, %v337
  %v406 = vmul.f32 %v390, %v339
  %v407 = vmul.f32 %v391, %v290
  %v408 = vmul.f32 %v392, %v292
  %v409 = vmul.f32 %v393, %v343
  %v410 = vmul.f32 %v394, %v345
  %v411 = vmul.f32 %v395, %v294
  %v412 = vmul.f32 %v396, %v296
  %v413 = vmul.f32 %v397, %v347
  %v414 = vmul.f32 %v398, %v349
  %v415 = vadd.f32 %v280, %v399
  %v416 = vadd.f32 %v282, %v400
  %v417 = vadd.f32 %v333, %v401
  %v418 = vadd.f32 %v335, %v402
  %v419 = vadd.f32 %v284, %v403
  %v420 = vadd.f32 %v286, %v404
  %v421 = vadd.f32 %v337, %v405
  %v422 = vadd.f32 %v339, %v406
  %v423 = vadd.f32 %v290, %v407
  %v424 = vadd.f32 %v292, %v408
  %v425 = vadd.f32 %v343, %v409
  %v426 = vadd.f32 %v345, %v410
  %v427 = vadd.f32 %v294, %v411
  %v428 = vadd.f32 %v296, %v412
  %v429 = vadd.f32 %v347, %v413
  %v430 = vadd.f32 %v349, %v414
  %v431 = vmul.f32 %v415, 0.7978846
  %v432 = vmul.f32 %v416, 0.7978846
  %v433 = vmul.f32 %v417, 0.7978846
  %v434 = vmul.f32 %v418, 0.7978846
  %v435 = vmul.f32 %v419, 0.7978846
  %v436 = vmul.f32 %v420, 0.7978846
  %v437 = vmul.f32 %v421, 0.7978846
  %v438 = vmul.f32 %v422, 0.7978846
  %v439 = vmul.f32 %v423, 0.7978846
  %v440 = vmul.f32 %v424, 0.7978846
  %v441 = vmul.f32 %v425, 0.7978846
  %v442 = vmul.f32 %v426, 0.7978846
  %v443 = vmul.f32 %v427, 0.7978846
  %v444 = vmul.f32 %v428, 0.7978846
  %v445 = vmul.f32 %v429, 0.7978846
  %v446 = vmul.f32 %v430, 0.7978846
  %v447 = vtanh.pop %v431
  %v448 = vtanh.pop %v432
  %v449 = vtanh.pop %v433
  %v450 = vtanh.pop %v434
  %v451 = vtanh.pop %v435
  %v452 = vtanh.pop %v436
  %v453 = vtanh.pop %v437
  %v454 = vtanh.pop %v438
  %v455 = vtanh.pop %v439
  %v456 = vtanh.pop %v440
  %v457 = vtanh.pop %v441
  %v458 = vtanh.pop %v442
  %v459 = vtanh.pop %v443
  %v460 = vtanh.pop %v444
  %v461 = vtanh.pop %v445
  %v462 = vtanh.pop %v446
  %v463 = vadd.f32 %v447, 1.0
  %v464 = vadd.f32 %v448, 1.0
  %v465 = vadd.f32 %v449, 1.0
  %v466 = vadd.f32 %v450, 1.0
  %v467 = vadd.f32 %v451, 1.0
  %v468 = vadd.f32 %v452, 1.0
  %v469 = vadd.f32 %v453, 1.0
  %v470 = vadd.f32 %v454, 1.0
  %v471 = vadd.f32 %v455, 1.0
  %v472 = vadd.f32 %v456, 1.0
  %v473 = vadd.f32 %v457, 1.0
  %v474 = vadd.f32 %v458, 1.0
  %v475 = vadd.f32 %v459, 1.0
  %v476 = vadd.f32 %v460, 1.0
  %v477 = vadd.f32 %v461, 1.0
  %v478 = vadd.f32 %v462, 1.0
  %v479 = vmul.f32 %v351, %v463
  %v480 = vmul.f32 %v352, %v464
  %v481 = vmul.f32 %v353, %v465
  %v482 = vmul.f32 %v354, %v466
  %v483 = vmul.f32 %v355, %v467
  %v484 = vmul.f32 %v356, %v468
  %v485 = vmul.f32 %v357, %v469
  %v486 = vmul.f32 %v358, %v470
  %v487 = vmul.f32 %v359, %v471
  %v488 = vmul.f32 %v360, %v472
  %v489 = vmul.f32 %v361, %v473
  %v490 = vmul.f32 %v362, %v474
  %v491 = vmul.f32 %v363, %v475
  %v492 = vmul.f32 %v364, %v476
  %v493 = vmul.f32 %v365, %v477
  %v494 = vmul.f32 %v366, %v478
  %v495 = vpack.c.bf16 %v483, %v479
  %v496 = vpack.c.bf16 %v484, %v480
  %v497 = vpack.c.bf16 %v485, %v481
  %v498 = vpack.c.bf16 %v486, %v482
  %v499 = vpack.c.bf16 %v491, %v487
  %v500 = vpack.c.bf16 %v492, %v488
  %v501 = vpack.c.bf16 %v493, %v489
  %v502 = vpack.c.bf16 %v494, %v490
  %v511 = vunpack.c.l.b16 %v495
  %v512 = vunpack.c.l.b16 %v496
  %v513 = vunpack.c.l.b16 %v497
  %v514 = vunpack.c.l.b16 %v498
  %v515 = vunpack.c.h.b16 %v495
  %v516 = vunpack.c.h.b16 %v496
  %v517 = vunpack.c.h.b16 %v497
  %v518 = vunpack.c.h.b16 %v498
  %v519 = vunpack.c.l.b16 %v499
  %v520 = vunpack.c.l.b16 %v500
  %v521 = vunpack.c.l.b16 %v501
  %v522 = vunpack.c.l.b16 %v502
  %v523 = vunpack.c.h.b16 %v499
  %v524 = vunpack.c.h.b16 %v500
  %v525 = vunpack.c.h.b16 %v501
  %v526 = vunpack.c.h.b16 %v502
  %v527 = vpack.c.b16 %v512, %v511
  %v528 = vpack.c.b16 %v514, %v513
  %v529 = vpack.c.b16 %v516, %v515
  %v530 = vpack.c.b16 %v518, %v517
  %v531 = vpack.c.b16 %v520, %v519
  %v532 = vpack.c.b16 %v522, %v521
  %v533 = vpack.c.b16 %v524, %v523
  %v534 = vpack.c.b16 %v526, %v525
  %543 = vst [vmem:[%s3] sm:$0xff] %v527
  %544 = vst [vmem:[%s3 + $0x8] sm:$0xff] %v528
  %545 = vst [vmem:[%s3 + $0x10] sm:$0xff] %v529
  %546 = vst [vmem:[%s3 + $0x18] sm:$0xff] %v530
  %547 = vst [vmem:[%s3 + $0x20] sm:$0xff] %v531
  %548 = vst [vmem:[%s3 + $0x28] sm:$0xff] %v532
  %549 = vst [vmem:[%s3 + $0x30] sm:$0xff] %v533
  %550 = vst [vmem:[%s3 + $0x38] sm:$0xff] %v534
  // Predicated region
  $region14: #{fwd.17} parent=0 // pred_check
    _
  $region15: #{fwd.17} parent=0 // pred_check_branch
    %552 = sbr.rel (0) target = $region17
  $region16: #{fwd.17} parent=0 // pred_region
    _
  $region17: #{fwd.17} parent=0 // pred_fallthru
    _
  // Predicated region
  $region18: #{fwd.17} parent=0 // pred_check
    _
  $region19: #{fwd.17} parent=0 // pred_check_branch
    %554 = sbr.rel (0) target = $region21
  $region20: #{fwd.17} parent=0 // pred_region
    _
  $region21: #{fwd.17} parent=0 // pred_fallthru
    _

// kernel: fwd.18
$region0: #{fwd.18}
  #allocation0 [shape = 'u32[]', space=smem, size = 0x4, offset = 0x4, fixed_abs, tag = 'smem constant byte address 0x4 - core index']
  #allocation1 [shape = 'u32[144,128]{1,0:T(1,128)}', space=vmem, size = 0x12000, scoped, tag = 'internal scratch']
  %s0 = inlined_call_operand.vmem [shape: bf16[32,512], index: 0, kind: input, shape index: {}]
  %s1 = inlined_call_operand.vmem [shape: bf16[512,128], index: 1, kind: input, shape index: {}]
  %s2 = inlined_call_operand.vmem [shape: f32[1,128], index: 2, kind: input, shape index: {}]
  %s3 = inlined_call_operand.vmem [shape: bf16[32,128], index: 3, kind: input, shape index: {}]
  %s4 = inlined_call_operand.vmem [shape: f32[1,128], index: 4, kind: input, shape index: {}]
  %s5 = inlined_call_operand.vmem [shape: f32[1,128], index: 5, kind: input, shape index: {}]
  %s6 = inlined_call_operand.vmem [shape: bf16[32,128], index: 6, kind: output, shape index: {}]
  %s7 = sld [smem:[#allocation0]]
  $region34: #{fwd.18} parent=0
    _
  %s9 = ssub.s32 1, %s7
  %s10 = scalar_select 0, %s9, %s7
  // Predicated region
  $region2: #{fwd.18} parent=0 // pred_check
    _
  $region3: #{fwd.18} parent=0 // pred_check_branch
    %12 = sbr.rel (0) target = $region5
  $region4: #{fwd.18} parent=0 // pred_region
    _
  $region5: #{fwd.18} parent=0 // pred_fallthru
    _
  // Predicated region
  $region6: #{fwd.18} parent=0 // pred_check
    _
  $region7: #{fwd.18} parent=0 // pred_check_branch
    %14 = sbr.rel (0) target = $region9
  $region8: #{fwd.18} parent=0 // pred_region
    _
  $region9: #{fwd.18} parent=0 // pred_fallthru
    _
  // Predicated region
  $region10: #{fwd.18} parent=0 // pred_check
    _
  $region11: #{fwd.18} parent=0 // pred_check_branch
    %16 = sbr.rel (0) target = $region13
  $region12: #{fwd.18} parent=0 // pred_region
    _
  $region13: #{fwd.18} parent=0 // pred_fallthru
    _
  // Predicated region
  $region14: #{fwd.18} parent=0 // pred_check
    _
  $region15: #{fwd.18} parent=0 // pred_check_branch
    %18 = sbr.rel (0) target = $region17
  $region16: #{fwd.18} parent=0 // pred_region
    _
  $region17: #{fwd.18} parent=0 // pred_fallthru
    _
  // Predicated region
  $region18: #{fwd.18} parent=0 // pred_check
    _
  $region19: #{fwd.18} parent=0 // pred_check_branch
    %20 = sbr.rel (0) target = $region21
  $region20: #{fwd.18} parent=0 // pred_region
    _
  $region21: #{fwd.18} parent=0 // pred_fallthru
    _
  // Predicated region
  $region22: #{fwd.18} parent=0 // pred_check
    _
  $region23: #{fwd.18} parent=0 // pred_check_branch
    %22 = sbr.rel (0) target = $region25
  $region24: #{fwd.18} parent=0 // pred_region
    _
  $region25: #{fwd.18} parent=0 // pred_fallthru
    _
  %v24 = vld [vmem:[%s0] sm:$0xff]
  %v25 = vld [vmem:[%s0 + $0x8] sm:$0xff]
  %v26 = vld [vmem:[%s0 + $0x10] sm:$0xff]
  %v27 = vld [vmem:[%s0 + $0x18] sm:$0xff]
  %v28 = vld [vmem:[%s0 + $0x20] sm:$0xff]
  %v29 = vld [vmem:[%s0 + $0x28] sm:$0xff]
  %v30 = vld [vmem:[%s0 + $0x30] sm:$0xff]
  %v31 = vld [vmem:[%s0 + $0x38] sm:$0xff]
  %v32 = vld [vmem:[%s1] sm:$0xf]
  %v33 = vld [vmem:[%s1 + $0x4] sm:$0xf]
  %v34 = vld [vmem:[%s1 + $0x8] sm:$0xf]
  %v35 = vld [vmem:[%s1 + $0xc] sm:$0xf]
  %v36 = vld [vmem:[%s1 + $0x10] sm:$0xf]
  %v37 = vld [vmem:[%s1 + $0x14] sm:$0xf]
  %v38 = vld [vmem:[%s1 + $0x18] sm:$0xf]
  %v39 = vld [vmem:[%s1 + $0x1c] sm:$0xf]
  %v40 = vld [vmem:[%s1 + $0x20] sm:$0xf]
  %v41 = vld [vmem:[%s1 + $0x24] sm:$0xf]
  %v42 = vld [vmem:[%s1 + $0x28] sm:$0xf]
  %v43 = vld [vmem:[%s1 + $0x2c] sm:$0xf]
  %v44 = vld [vmem:[%s1 + $0x30] sm:$0xf]
  %v45 = vld [vmem:[%s1 + $0x34] sm:$0xf]
  %v46 = vld [vmem:[%s1 + $0x38] sm:$0xf]
  %v47 = vld [vmem:[%s1 + $0x3c] sm:$0xf]
  %v48 = vld [vmem:[%s1 + $0x40] sm:$0xf]
  %v49 = vld [vmem:[%s1 + $0x44] sm:$0xf]
  %v50 = vld [vmem:[%s1 + $0x48] sm:$0xf]
  %v51 = vld [vmem:[%s1 + $0x4c] sm:$0xf]
  %v52 = vld [vmem:[%s1 + $0x50] sm:$0xf]
  %v53 = vld [vmem:[%s1 + $0x54] sm:$0xf]
  %v54 = vld [vmem:[%s1 + $0x58] sm:$0xf]
  %v55 = vld [vmem:[%s1 + $0x5c] sm:$0xf]
  %v56 = vld [vmem:[%s1 + $0x60] sm:$0xf]
  %v57 = vld [vmem:[%s1 + $0x64] sm:$0xf]
  %v58 = vld [vmem:[%s1 + $0x68] sm:$0xf]
  %v59 = vld [vmem:[%s1 + $0x6c] sm:$0xf]
  %v60 = vld [vmem:[%s1 + $0x70] sm:$0xf]
  %v61 = vld [vmem:[%s1 + $0x74] sm:$0xf]
  %v62 = vld [vmem:[%s1 + $0x78] sm:$0xf]
  %v63 = vld [vmem:[%s1 + $0x7c] sm:$0xf]
  %v64 = vld [vmem:[%s1 + $0x80] sm:$0xf]
  %v65 = vld [vmem:[%s1 + $0x84] sm:$0xf]
  %v66 = vld [vmem:[%s1 + $0x88] sm:$0xf]
  %v67 = vld [vmem:[%s1 + $0x8c] sm:$0xf]
  %v68 = vld [vmem:[%s1 + $0x90] sm:$0xf]
  %v69 = vld [vmem:[%s1 + $0x94] sm:$0xf]
  %v70 = vld [vmem:[%s1 + $0x98] sm:$0xf]
  %v71 = vld [vmem:[%s1 + $0x9c] sm:$0xf]
  %v72 = vld [vmem:[%s1 + $0xa0] sm:$0xf]
  %v73 = vld [vmem:[%s1 + $0xa4] sm:$0xf]
  %v74 = vld [vmem:[%s1 + $0xa8] sm:$0xf]
  %v75 = vld [vmem:[%s1 + $0xac] sm:$0xf]
  %v76 = vld [vmem:[%s1 + $0xb0] sm:$0xf]
  %v77 = vld [vmem:[%s1 + $0xb4] sm:$0xf]
  %v78 = vld [vmem:[%s1 + $0xb8] sm:$0xf]
  %v79 = vld [vmem:[%s1 + $0xbc] sm:$0xf]
  %v80 = vld [vmem:[%s1 + $0xc0] sm:$0xf]
  %v81 = vld [vmem:[%s1 + $0xc4] sm:$0xf]
  %v82 = vld [vmem:[%s1 + $0xc8] sm:$0xf]
  %v83 = vld [vmem:[%s1 + $0xcc] sm:$0xf]
  %v84 = vld [vmem:[%s1 + $0xd0] sm:$0xf]
  %v85 = vld [vmem:[%s1 + $0xd4] sm:$0xf]
  %v86 = vld [vmem:[%s1 + $0xd8] sm:$0xf]
  %v87 = vld [vmem:[%s1 + $0xdc] sm:$0xf]
  %v88 = vld [vmem:[%s1 + $0xe0] sm:$0xf]
  %v89 = vld [vmem:[%s1 + $0xe4] sm:$0xf]
  %v90 = vld [vmem:[%s1 + $0xe8] sm:$0xf]
  %v91 = vld [vmem:[%s1 + $0xec] sm:$0xf]
  %v92 = vld [vmem:[%s1 + $0xf0] sm:$0xf]
  %v93 = vld [vmem:[%s1 + $0xf4] sm:$0xf]
  %v94 = vld [vmem:[%s1 + $0xf8] sm:$0xf]
  %v95 = vld [vmem:[%s1 + $0xfc] sm:$0xf]
  %v96 = vld [vmem:[%s2] sm:$0x1]
  %v98 = vlaneseq
  %v99 = vshrl.u32 %v98, 7
  %v100 = vsub.s32 0, %v99
  %v101 = vrot.slane %v96, %v100
  %v111 = vunpack.c.l.b16 %v24
  %v112 = vunpack.c.h.b16 %v24
  %v113 = vunpack.c.l.b16 %v25
  %v114 = vunpack.c.h.b16 %v25
  %v115 = vunpack.c.l.b16 %v26
  %v116 = vunpack.c.h.b16 %v26
  %v117 = vunpack.c.l.b16 %v27
  %v118 = vunpack.c.h.b16 %v27
  %v119 = vunpack.c.l.b16 %v28
  %v120 = vunpack.c.h.b16 %v28
  %v121 = vunpack.c.l.b16 %v29
  %v122 = vunpack.c.h.b16 %v29
  %v123 = vunpack.c.l.b16 %v30
  %v124 = vunpack.c.h.b16 %v30
  %v125 = vunpack.c.l.b16 %v31
  %v126 = vunpack.c.h.b16 %v31
  %v127 = vpack.c.b16 %v115, %v111
  %v128 = vpack.c.b16 %v116, %v112
  %v129 = vpack.c.b16 %v117, %v113
  %v130 = vpack.c.b16 %v118, %v114
  %v131 = vpack.c.b16 %v123, %v119
  %v132 = vpack.c.b16 %v124, %v120
  %v133 = vpack.c.b16 %v125, %v121
  %v134 = vpack.c.b16 %v126, %v122
  %v207 = vunpack.c.l.b16 %v32
  %v208 = vunpack.c.l.b16 %v33
  %v209 = vunpack.c.l.b16 %v34
  %v210 = vunpack.c.l.b16 %v35
  %v211 = vunpack.c.l.b16 %v36
  %v212 = vunpack.c.l.b16 %v37
  %v213 = vunpack.c.l.b16 %v38
  %v214 = vunpack.c.l.b16 %v39
  %v215 = vunpack.c.l.b16 %v40
  %v216 = vunpack.c.l.b16 %v41
  %v217 = vunpack.c.l.b16 %v42
  %v218 = vunpack.c.l.b16 %v43
  %v219 = vunpack.c.l.b16 %v44
  %v220 = vunpack.c.l.b16 %v45
  %v221 = vunpack.c.l.b16 %v46
  %v222 = vunpack.c.l.b16 %v47
  %v223 = vunpack.c.l.b16 %v48
  %v224 = vunpack.c.l.b16 %v49
  %v225 = vunpack.c.l.b16 %v50
  %v226 = vunpack.c.l.b16 %v51
  %v227 = vunpack.c.l.b16 %v52
  %v228 = vunpack.c.l.b16 %v53
  %v229 = vunpack.c.l.b16 %v54
  %v230 = vunpack.c.l.b16 %v55
  %v231 = vunpack.c.l.b16 %v56
  %v232 = vunpack.c.l.b16 %v57
  %v233 = vunpack.c.l.b16 %v58
  %v234 = vunpack.c.l.b16 %v59
  %v235 = vunpack.c.l.b16 %v60
  %v236 = vunpack.c.l.b16 %v61
  %v237 = vunpack.c.l.b16 %v62
  %v238 = vunpack.c.l.b16 %v63
  %v239 = vunpack.c.l.b16 %v64
  %v240 = vunpack.c.l.b16 %v65
  %v241 = vunpack.c.l.b16 %v66
  %v242 = vunpack.c.l.b16 %v67
  %v243 = vunpack.c.l.b16 %v68
  %v244 = vunpack.c.l.b16 %v69
  %v245 = vunpack.c.l.b16 %v70
  %v246 = vunpack.c.l.b16 %v71
  %v247 = vunpack.c.l.b16 %v72
  %v248 = vunpack.c.l.b16 %v73
  %v249 = vunpack.c.l.b16 %v74
  %v250 = vunpack.c.l.b16 %v75
  %v251 = vunpack.c.l.b16 %v76
  %v252 = vunpack.c.l.b16 %v77
  %v253 = vunpack.c.l.b16 %v78
  %v254 = vunpack.c.l.b16 %v79
  %v255 = vunpack.c.l.b16 %v80
  %v256 = vunpack.c.l.b16 %v81
  %v257 = vunpack.c.l.b16 %v82
  %v258 = vunpack.c.l.b16 %v83
  %v259 = vunpack.c.l.b16 %v84
  %v260 = vunpack.c.l.b16 %v85
  %v261 = vunpack.c.l.b16 %v86
  %v262 = vunpack.c.l.b16 %v87
  %v263 = vunpack.c.l.b16 %v88
  %v264 = vunpack.c.l.b16 %v89
  %v265 = vunpack.c.l.b16 %v90
  %v266 = vunpack.c.l.b16 %v91
  %v267 = vunpack.c.l.b16 %v92
  %v268 = vunpack.c.l.b16 %v93
  %v269 = vunpack.c.l.b16 %v94
  %v270 = vunpack.c.l.b16 %v95
  %v271 = vpack.c.b16 %v208, %v207
  %v272 = vpack.c.b16 %v210, %v209
  %v273 = vpack.c.b16 %v212, %v211
  %v274 = vpack.c.b16 %v214, %v213
  %v275 = vpack.c.b16 %v216, %v215
  %v276 = vpack.c.b16 %v218, %v217
  %v277 = vpack.c.b16 %v220, %v219
  %v278 = vpack.c.b16 %v222, %v221
  %v279 = vpack.c.b16 %v224, %v223
  %v280 = vpack.c.b16 %v226, %v225
  %v281 = vpack.c.b16 %v228, %v227
  %v282 = vpack.c.b16 %v230, %v229
  %v283 = vpack.c.b16 %v232, %v231
  %v284 = vpack.c.b16 %v234, %v233
  %v285 = vpack.c.b16 %v236, %v235
  %v286 = vpack.c.b16 %v238, %v237
  %v287 = vpack.c.b16 %v240, %v239
  %v288 = vpack.c.b16 %v242, %v241
  %v289 = vpack.c.b16 %v244, %v243
  %v290 = vpack.c.b16 %v246, %v245
  %v291 = vpack.c.b16 %v248, %v247
  %v292 = vpack.c.b16 %v250, %v249
  %v293 = vpack.c.b16 %v252, %v251
  %v294 = vpack.c.b16 %v254, %v253
  %v295 = vpack.c.b16 %v256, %v255
  %v296 = vpack.c.b16 %v258, %v257
  %v297 = vpack.c.b16 %v260, %v259
  %v298 = vpack.c.b16 %v262, %v261
  %v299 = vpack.c.b16 %v264, %v263
  %v300 = vpack.c.b16 %v266, %v265
  %v301 = vpack.c.b16 %v268, %v267
  %v302 = vpack.c.b16 %v270, %v269
  %335 = vmatprep.subr.bf16.mxu0 0
  %336 = vmatpush1.bf16.msra.mxu0 %v271
  %337 = vmatprep.subr.bf16.mxu0 0
  %338 = vmatpush1.bf16.msra.mxu0 %v272
  %339 = vmatprep.subr.bf16.mxu0 0
  %340 = vmatpush1.bf16.msra.mxu0 %v273
  %341 = vmatprep.subr.bf16.mxu0 0
  %342 = vmatpush1.bf16.msra.mxu0 %v274
  %343 = vmatprep.subr.bf16.mxu0 0
  %344 = vmatpush1.bf16.msra.mxu0 %v275
  %345 = vmatprep.subr.bf16.mxu0 0
  %346 = vmatpush1.bf16.msra.mxu0 %v276
  %347 = vmatprep.subr.bf16.mxu0 0
  %348 = vmatpush1.bf16.msra.mxu0 %v277
  %349 = vmatprep.subr.bf16.mxu0 0
  %350 = vmatpush1.bf16.msra.mxu0 %v278
  %351 = vmatprep.subr.bf16.mxu0 0
  %352 = vmatpush1.bf16.msra.mxu0 %v279
  %353 = vmatprep.subr.bf16.mxu0 0
  %354 = vmatpush1.bf16.msra.mxu0 %v280
  %355 = vmatprep.subr.bf16.mxu0 0
  %356 = vmatpush1.bf16.msra.mxu0 %v281
  %357 = vmatprep.subr.bf16.mxu0 0
  %358 = vmatpush1.bf16.msra.mxu0 %v282
  %359 = vmatprep.subr.bf16.mxu0 0
  %360 = vmatpush1.bf16.msra.mxu0 %v283
  %361 = vmatprep.subr.bf16.mxu0 0
  %362 = vmatpush1.bf16.msra.mxu0 %v284
  %363 = vmatprep.subr.bf16.mxu0 0
  %364 = vmatpush1.bf16.msra.mxu0 %v285
  %365 = vmatprep.subr.bf16.mxu0 0
  %366 = vmatpush1.bf16.msra.mxu0 %v286
  %367 = vmatprep.mubr.bf16.mxu0 %v128
  %368 = vmatmul.mubr.bf16.gmra.mrb[0].mxu0 %v127
  %v369 = vpop.f32.mrb[0].mxu0
  %v370 = vadd.f32 %v101, %v369
  %v371 = vpop.f32.mrb[0].mxu0
  %v372 = vpop.f32.mrb[0].mxu0
  %v373 = vadd.f32 %v101, %v372
  %v374 = vpop.f32.mrb[0].mxu0
  %375 = vmatprep.mubr.bf16.mxu0 %v132
  %376 = vmatmul.mubr.bf16.gmra.mrb[0].mxu0 %v131
  %v377 = vpop.f32.mrb[0].mxu0
  %v378 = vadd.f32 %v101, %v377
  %v379 = vpop.f32.mrb[0].mxu0
  %v380 = vpop.f32.mrb[0].mxu0
  %v381 = vadd.f32 %v101, %v380
  %v382 = vpop.f32.mrb[0].mxu0
  %383 = vdwg.mxu0
  %384 = vmatprep.subr.bf16.mxu0 0
  %385 = vmatpush1.bf16.msra.mxu0 %v287
  %386 = vmatprep.subr.bf16.mxu0 0
  %387 = vmatpush1.bf16.msra.mxu0 %v288
  %388 = vmatprep.subr.bf16.mxu0 0
  %389 = vmatpush1.bf16.msra.mxu0 %v289
  %390 = vmatprep.subr.bf16.mxu0 0
  %391 = vmatpush1.bf16.msra.mxu0 %v290
  %392 = vmatprep.subr.bf16.mxu0 0
  %393 = vmatpush1.bf16.msra.mxu0 %v291
  %394 = vmatprep.subr.bf16.mxu0 0
  %395 = vmatpush1.bf16.msra.mxu0 %v292
  %396 = vmatprep.subr.bf16.mxu0 0
  %397 = vmatpush1.bf16.msra.mxu0 %v293
  %398 = vmatprep.subr.bf16.mxu0 0
  %399 = vmatpush1.bf16.msra.mxu0 %v294
  %400 = vmatprep.subr.bf16.mxu0 0
  %401 = vmatpush1.bf16.msra.mxu0 %v295
  %402 = vmatprep.subr.bf16.mxu0 0
  %403 = vmatpush1.bf16.msra.mxu0 %v296
  %404 = vmatprep.subr.bf16.mxu0 0
  %405 = vmatpush1.bf16.msra.mxu0 %v297
  %406 = vmatprep.subr.bf16.mxu0 0
  %407 = vmatpush1.bf16.msra.mxu0 %v298
  %408 = vmatprep.subr.bf16.mxu0 0
  %409 = vmatpush1.bf16.msra.mxu0 %v299
  %410 = vmatprep.subr.bf16.mxu0 0
  %411 = vmatpush1.bf16.msra.mxu0 %v300
  %412 = vmatprep.subr.bf16.mxu0 0
  %413 = vmatpush1.bf16.msra.mxu0 %v301
  %414 = vmatprep.subr.bf16.mxu0 0
  %415 = vmatpush1.bf16.msra.mxu0 %v302
  %416 = vmatprep.mubr.bf16.mxu0 %v130
  %417 = vmatmul.mubr.bf16.gmra.mrb[0].mxu0 %v129
  %v418 = vpop.f32.mrb[0].mxu0
  %v419 = vadd.f32 %v370, %v418
  %v420 = vpop.f32.mrb[0].mxu0
  %v421 = vpop.f32.mrb[0].mxu0
  %v422 = vadd.f32 %v373, %v421
  %v423 = vpop.f32.mrb[0].mxu0
  %424 = vmatprep.mubr.bf16.mxu0 %v134
  %425 = vmatmul.mubr.bf16.gmra.mrb[0].mxu0 %v133
  %v426 = vpop.f32.mrb[0].mxu0
  %v427 = vadd.f32 %v378, %v426
  %v428 = vpop.f32.mrb[0].mxu0
  %v429 = vpop.f32.mrb[0].mxu0
  %v430 = vadd.f32 %v381, %v429
  %v431 = vpop.f32.mrb[0].mxu0
  %432 = vdwg.mxu0
  %v433 = vld [vmem:[%s3] sm:$0xf]
  %v434 = vld [vmem:[%s3 + $0x4] sm:$0xf]
  %v435 = vld [vmem:[%s3 + $0x8] sm:$0xf]
  %v436 = vld [vmem:[%s3 + $0xc] sm:$0xf]
  %v437 = vunpack.c.l.bf16 %v433
  %v438 = vunpack.c.l.bf16 %v434
  %v439 = vunpack.c.l.bf16 %v435
  %v440 = vunpack.c.l.bf16 %v436
  %v441 = vadd.f32 %v419, %v437
  %v442 = vadd.f32 %v422, %v438
  %v443 = vadd.f32 %v427, %v439
  %v444 = vadd.f32 %v430, %v440
  %v445 = vld [vmem:[%s4] sm:$0x1]
  %v446 = vld [vmem:[%s5] sm:$0x1]
  %447 = vadd.xlane.f32.xlu0 %v441
  %v448 = vpop.xlane.xlu0 %447
  %449 = vadd.xlane.f32.xlu0 %v442
  %v450 = vpop.xlane.xlu0 %449
  %451 = vadd.xlane.f32.xlu0 %v443
  %v452 = vpop.xlane.xlu0 %451
  %453 = vadd.xlane.f32.xlu0 %v444
  %v454 = vpop.xlane.xlu0 %453
  %v455 = vrcp.pop 128.0
  %v456 = vmul.f32 %v448, %v455
  %v457 = vmul.f32 %v450, %v455
  %v458 = vmul.f32 %v452, %v455
  %v459 = vmul.f32 %v454, %v455
  %v460 = vsub.f32 %v441, %v456
  %v461 = vsub.f32 %v442, %v457
  %v462 = vsub.f32 %v443, %v458
  %v463 = vsub.f32 %v444, %v459
  %v464 = vmul.f32 %v460, %v460
  %v465 = vmul.f32 %v461, %v461
  %v466 = vmul.f32 %v462, %v462
  %v467 = vmul.f32 %v463, %v463
  %468 = vadd.xlane.f32.xlu0 %v464
  %v469 = vpop.xlane.xlu0 %468
  %470 = vadd.xlane.f32.xlu0 %v465
  %v471 = vpop.xlane.xlu0 %470
  %472 = vadd.xlane.f32.xlu0 %v466
  %v473 = vpop.xlane.xlu0 %472
  %474 = vadd.xlane.f32.xlu0 %v467
  %v475 = vpop.xlane.xlu0 %474
  %v476 = vmul.f32 %v469, %v455
  %v477 = vmul.f32 %v471, %v455
  %v478 = vmul.f32 %v473, %v455
  %v479 = vmul.f32 %v475, %v455
  %v480 = vadd.f32 %v476, 1e-12
  %v481 = vadd.f32 %v477, 1e-12
  %v482 = vadd.f32 %v478, 1e-12
  %v483 = vadd.f32 %v479, 1e-12
  %v484 = vrsqrt.pop %v480
  %v485 = vrsqrt.pop %v481
  %v486 = vrsqrt.pop %v482
  %v487 = vrsqrt.pop %v483
  %v488 = vmul.f32 %v460, %v484
  %v489 = vmul.f32 %v461, %v485
  %v490 = vmul.f32 %v462, %v486
  %v491 = vmul.f32 %v463, %v487
  %v493 = vlaneseq
  %v494 = vshrl.u32 %v493, 7
  %v495 = vsub.s32 0, %v494
  %v496 = vrot.slane %v445, %v495
  %v498 = vmul.f32 %v488, %v496
  %v499 = vmul.f32 %v489, %v496
  %v500 = vmul.f32 %v490, %v496
  %v501 = vmul.f32 %v491, %v496
  %v503 = vlaneseq
  %v504 = vshrl.u32 %v503, 7
  %v505 = vsub.s32 0, %v504
  %v506 = vrot.slane %v446, %v505
  %v508 = vadd.f32 %v498, %v506
  %v509 = vadd.f32 %v499, %v506
  %v510 = vadd.f32 %v500, %v506
  %v511 = vadd.f32 %v501, %v506
  %v512 = vpack.c.bf16 %v509, %v508
  %v513 = vpack.c.bf16 %v511, %v510
  %v516 = vunpack.c.l.b16 %v512
  %v517 = vunpack.c.h.b16 %v512
  %v518 = vunpack.c.l.b16 %v513
  %v519 = vunpack.c.h.b16 %v513
  %v520 = vpack.c.b16 %v516, %v516
  %v521 = vpack.c.b16 %v517, %v517
  %v522 = vpack.c.b16 %v518, %v518
  %v523 = vpack.c.b16 %v519, %v519
  %528 = vst [vmem:[%s6] sm:$0xf] %v520
  %529 = vst [vmem:[%s6 + $0x4] sm:$0xf] %v521
  %530 = vst [vmem:[%s6 + $0x8] sm:$0xf] %v522
  %531 = vst [vmem:[%s6 + $0xc] sm:$0xf] %v523
  // Predicated region
  $region26: #{fwd.18} parent=0 // pred_check
    _
  $region27: #{fwd.18} parent=0 // pred_check_branch
    %533 = sbr.rel (0) target = $region29
  $region28: #{fwd.18} parent=0 // pred_region
    _
  $region29: #{fwd.18} parent=0 // pred_fallthru
    _
  // Predicated region
  $region30: #{fwd.18} parent=0 // pred_check
    _
  $region31: #{fwd.18} parent=0 // pred_check_branch
    %535 = sbr.rel (0) target = $region33
  $region32: #{fwd.18} parent=0 // pred_region
    _
  $region33: #{fwd.18} parent=0 // pred_fallthru
    _

// kernel: fwd.25
$region0: #{fwd.25}
  #allocation0 [shape = 'u32[]', space=smem, size = 0x4, offset = 0x4, fixed_abs, tag = 'smem constant byte address 0x4 - core index']
  #allocation1 [shape = 'u32[144,128]{1,0:T(1,128)}', space=vmem, size = 0x12000, scoped, tag = 'internal scratch']
  %s0 = inlined_call_operand.vmem [shape: bf16[32,128], index: 0, kind: input, shape index: {}]
  %s1 = inlined_call_operand.vmem [shape: bf16[128,512], index: 1, kind: input, shape index: {}]
  %s2 = inlined_call_operand.vmem [shape: f32[1,512], index: 2, kind: input, shape index: {}]
  %s3 = inlined_call_operand.hbm [shape: f32[32,512], index: 3, kind: output, shape index: {}]
  %s4 = sld [smem:[#allocation0]]
  $region22: #{fwd.25} parent=0
    _
  %s6 = ssub.s32 1, %s4
  %s7 = scalar_select 0, %s6, %s4
  $region1: #{fwd.25} parent=0
    #allocation2 [shape = 'u8[65536]{0}', space=vmem, size = 0x10000, scoped, tag = 'output window, operand 0, single buffered']
    #allocation3 [shape = 's32[1]{0}', space=sflag, size = 0x4, scoped, tag = 'scoped memory for fwd.25']
    %8 = vsyncpa [#allocation3], 0
    // Predicated region
    $region2: #{fwd.25} parent=1 // pred_check
      _
    $region3: #{fwd.25} parent=1 // pred_check_branch
      %10 = sbr.rel (0) target = $region5
    $region4: #{fwd.25} parent=1 // pred_region
      _
    $region5: #{fwd.25} parent=1 // pred_fallthru
      _
    // Predicated region
    $region6: #{fwd.25} parent=1 // pred_check
      _
    $region7: #{fwd.25} parent=1 // pred_check_branch
      %12 = sbr.rel (0) target = $region9
    $region8: #{fwd.25} parent=1 // pred_region
      _
    $region9: #{fwd.25} parent=1 // pred_fallthru
      _
    // Predicated region
    $region10: #{fwd.25} parent=1 // pred_check
      _
    $region11: #{fwd.25} parent=1 // pred_check_branch
      %14 = sbr.rel (0) target = $region13
    $region12: #{fwd.25} parent=1 // pred_region
      _
    $region13: #{fwd.25} parent=1 // pred_fallthru
      _
    %v16 = vld [vmem:[%s0] sm:$0xf]
    %v17 = vld [vmem:[%s0 + $0x4] sm:$0xf]
    %v18 = vld [vmem:[%s0 + $0x8] sm:$0xf]
    %v19 = vld [vmem:[%s0 + $0xc] sm:$0xf]
    %v20 = vld [vmem:[%s1] sm:$0xff]
    %v21 = vld [vmem:[%s1 + $0x8] sm:$0xff]
    %v22 = vld [vmem:[%s1 + $0x10] sm:$0xff]
    %v23 = vld [vmem:[%s1 + $0x18] sm:$0xff]
    %v24 = vld [vmem:[%s1 + $0x20] sm:$0xff]
    %v25 = vld [vmem:[%s1 + $0x28] sm:$0xff]
    %v26 = vld [vmem:[%s1 + $0x30] sm:$0xff]
    %v27 = vld [vmem:[%s1 + $0x38] sm:$0xff]
    %v28 = vld [vmem:[%s1 + $0x40] sm:$0xff]
    %v29 = vld [vmem:[%s1 + $0x48] sm:$0xff]
    %v30 = vld [vmem:[%s1 + $0x50] sm:$0xff]
    %v31 = vld [vmem:[%s1 + $0x58] sm:$0xff]
    %v32 = vld [vmem:[%s1 + $0x60] sm:$0xff]
    %v33 = vld [vmem:[%s1 + $0x68] sm:$0xff]
    %v34 = vld [vmem:[%s1 + $0x70] sm:$0xff]
    %v35 = vld [vmem:[%s1 + $0x78] sm:$0xff]
    %v36 = vld [vmem:[%s1 + $0x80] sm:$0xff]
    %v37 = vld [vmem:[%s1 + $0x88] sm:$0xff]
    %v38 = vld [vmem:[%s1 + $0x90] sm:$0xff]
    %v39 = vld [vmem:[%s1 + $0x98] sm:$0xff]
    %v40 = vld [vmem:[%s1 + $0xa0] sm:$0xff]
    %v41 = vld [vmem:[%s1 + $0xa8] sm:$0xff]
    %v42 = vld [vmem:[%s1 + $0xb0] sm:$0xff]
    %v43 = vld [vmem:[%s1 + $0xb8] sm:$0xff]
    %v44 = vld [vmem:[%s1 + $0xc0] sm:$0xff]
    %v45 = vld [vmem:[%s1 + $0xc8] sm:$0xff]
    %v46 = vld [vmem:[%s1 + $0xd0] sm:$0xff]
    %v47 = vld [vmem:[%s1 + $0xd8] sm:$0xff]
    %v48 = vld [vmem:[%s1 + $0xe0] sm:$0xff]
    %v49 = vld [vmem:[%s1 + $0xe8] sm:$0xff]
    %v50 = vld [vmem:[%s1 + $0xf0] sm:$0xff]
    %v51 = vld [vmem:[%s1 + $0xf8] sm:$0xff]
    %v52 = vld [vmem:[%s2] sm:$0xf]
    %v54 = vlaneseq
    %v55 = vshrl.u32 %v54, 7
    %v56 = vsub.s32 0, %v55
    %v57 = vrot.slane %v52, %v56
    %v58 = vlaneseq
    %v59 = vshrl.u32 %v58, 7
    %v60 = vsub.s32 1, %v59
    %v61 = vrot.slane %v52, %v60
    %v62 = vlaneseq
    %v63 = vshrl.u32 %v62, 7
    %v64 = vsub.s32 2, %v63
    %v65 = vrot.slane %v52, %v64
    %v66 = vlaneseq
    %v67 = vshrl.u32 %v66, 7
    %v68 = vsub.s32 3, %v67
    %v69 = vrot.slane %v52, %v68
    %v78 = vunpack.c.l.b16 %v16
    %v79 = vunpack.c.l.b16 %v17
    %v80 = vunpack.c.l.b16 %v18
    %v81 = vunpack.c.l.b16 %v19
    %v82 = vpack.c.b16 %v79, %v78
    %v83 = vpack.c.b16 %v81, %v80
    %v118 = vunpack.c.l.b16 %v20
    %v119 = vunpack.c.h.b16 %v20
    %v120 = vunpack.c.l.b16 %v21
    %v121 = vunpack.c.h.b16 %v21
    %v122 = vunpack.c.l.b16 %v22
    %v123 = vunpack.c.h.b16 %v22
    %v124 = vunpack.c.l.b16 %v23
    %v125 = vunpack.c.h.b16 %v23
    %v126 = vunpack.c.l.b16 %v24
    %v127 = vunpack.c.h.b16 %v24
    %v128 = vunpack.c.l.b16 %v25
    %v129 = vunpack.c.h.b16 %v25
    %v130 = vunpack.c.l.b16 %v26
    %v131 = vunpack.c.h.b16 %v26
    %v132 = vunpack.c.l.b16 %v27
    %v133 = vunpack.c.h.b16 %v27
    %v134 = vunpack.c.l.b16 %v28
    %v135 = vunpack.c.h.b16 %v28
    %v136 = vunpack.c.l.b16 %v29
    %v137 = vunpack.c.h.b16 %v29
    %v138 = vunpack.c.l.b16 %v30
    %v139 = vunpack.c.h.b16 %v30
    %v140 = vunpack.c.l.b16 %v31
    %v141 = vunpack.c.h.b16 %v31
    %v142 = vunpack.c.l.b16 %v32
    %v143 = vunpack.c.h.b16 %v32
    %v144 = vunpack.c.l.b16 %v33
    %v145 = vunpack.c.h.b16 %v33
    %v146 = vunpack.c.l.b16 %v34
    %v147 = vunpack.c.h.b16 %v34
    %v148 = vunpack.c.l.b16 %v35
    %v149 = vunpack.c.h.b16 %v35
    %v150 = vunpack.c.l.b16 %v36
    %v151 = vunpack.c.h.b16 %v36
    %v152 = vunpack.c.l.b16 %v37
    %v153 = vunpack.c.h.b16 %v37
    %v154 = vunpack.c.l.b16 %v38
    %v155 = vunpack.c.h.b16 %v38
    %v156 = vunpack.c.l.b16 %v39
    %v157 = vunpack.c.h.b16 %v39
    %v158 = vunpack.c.l.b16 %v40
    %v159 = vunpack.c.h.b16 %v40
    %v160 = vunpack.c.l.b16 %v41
    %v161 = vunpack.c.h.b16 %v41
    %v162 = vunpack.c.l.b16 %v42
    %v163 = vunpack.c.h.b16 %v42
    %v164 = vunpack.c.l.b16 %v43
    %v165 = vunpack.c.h.b16 %v43
    %v166 = vunpack.c.l.b16 %v44
    %v167 = vunpack.c.h.b16 %v44
    %v168 = vunpack.c.l.b16 %v45
    %v169 = vunpack.c.h.b16 %v45
    %v170 = vunpack.c.l.b16 %v46
    %v171 = vunpack.c.h.b16 %v46
    %v172 = vunpack.c.l.b16 %v47
    %v173 = vunpack.c.h.b16 %v47
    %v174 = vunpack.c.l.b16 %v48
    %v175 = vunpack.c.h.b16 %v48
    %v176 = vunpack.c.l.b16 %v49
    %v177 = vunpack.c.h.b16 %v49
    %v178 = vunpack.c.l.b16 %v50
    %v179 = vunpack.c.h.b16 %v50
    %v180 = vunpack.c.l.b16 %v51
    %v181 = vunpack.c.h.b16 %v51
    %v182 = vpack.c.b16 %v122, %v118
    %v183 = vpack.c.b16 %v123, %v119
    %v184 = vpack.c.b16 %v124, %v120
    %v185 = vpack.c.b16 %v125, %v121
    %v186 = vpack.c.b16 %v130, %v126
    %v187 = vpack.c.b16 %v131, %v127
    %v188 = vpack.c.b16 %v132, %v128
    %v189 = vpack.c.b16 %v133, %v129
    %v190 = vpack.c.b16 %v138, %v134
    %v191 = vpack.c.b16 %v139, %v135
    %v192 = vpack.c.b16 %v140, %v136
    %v193 = vpack.c.b16 %v141, %v137
    %v194 = vpack.c.b16 %v146, %v142
    %v195 = vpack.c.b16 %v147, %v143
    %v196 = vpack.c.b16 %v148, %v144
    %v197 = vpack.c.b16 %v149, %v145
    %v198 = vpack.c.b16 %v154, %v150
    %v199 = vpack.c.b16 %v155, %v151
    %v200 = vpack.c.b16 %v156, %v152
    %v201 = vpack.c.b16 %v157, %v153
    %v202 = vpack.c.b16 %v162, %v158
    %v203 = vpack.c.b16 %v163, %v159
    %v204 = vpack.c.b16 %v164, %v160
    %v205 = vpack.c.b16 %v165, %v161
    %v206 = vpack.c.b16 %v170, %v166
    %v207 = vpack.c.b16 %v171, %v167
    %v208 = vpack.c.b16 %v172, %v168
    %v209 = vpack.c.b16 %v173, %v169
    %v210 = vpack.c.b16 %v178, %v174
    %v211 = vpack.c.b16 %v179, %v175
    %v212 = vpack.c.b16 %v180, %v176
    %v213 = vpack.c.b16 %v181, %v177
    %246 = vmatprep.subr.bf16.mxu0 %v183
    %247 = vmatpush1.bf16.msra.mxu0 %v182
    %248 = vmatprep.subr.bf16.mxu0 %v187
    %249 = vmatpush1.bf16.msra.mxu0 %v186
    %250 = vmatprep.subr.bf16.mxu0 %v191
    %251 = vmatpush1.bf16.msra.mxu0 %v190
    %252 = vmatprep.subr.bf16.mxu0 %v195
    %253 = vmatpush1.bf16.msra.mxu0 %v194
    %254 = vmatprep.subr.bf16.mxu0 %v199
    %255 = vmatpush1.bf16.msra.mxu0 %v198
    %256 = vmatprep.subr.bf16.mxu0 %v203
    %257 = vmatpush1.bf16.msra.mxu0 %v202
    %258 = vmatprep.subr.bf16.mxu0 %v207
    %259 = vmatpush1.bf16.msra.mxu0 %v206
    %260 = vmatprep.subr.bf16.mxu0 %v211
    %261 = vmatpush1.bf16.msra.mxu0 %v210
    %262 = vmatprep.subr.bf16.mxu0 0
    %263 = vmatpush1.bf16.msra.mxu0 0
    %264 = vmatprep.subr.bf16.mxu0 0
    %265 = vmatpush1.bf16.msra.mxu0 0
    %266 = vmatprep.subr.bf16.mxu0 0
    %267 = vmatpush1.bf16.msra.mxu0 0
    %268 = vmatprep.subr.bf16.mxu0 0
    %269 = vmatpush1.bf16.msra.mxu0 0
    %270 = vmatprep.subr.bf16.mxu0 0
    %271 = vmatpush1.bf16.msra.mxu0 0
    %272 = vmatprep.subr.bf16.mxu0 0
    %273 = vmatpush1.bf16.msra.mxu0 0
    %274 = vmatprep.subr.bf16.mxu0 0
    %275 = vmatpush1.bf16.msra.mxu0 0
    %276 = vmatprep.subr.bf16.mxu0 0
    %277 = vmatpush1.bf16.msra.mxu0 0
    %278 = vmatprep.mubr.bf16.mxu0 0
    %279 = vmatmul.mubr.bf16.gmra.mrb[0].mxu0 %v82
    %v280 = vpop.f32.mrb[0].mxu0
    %v281 = vadd.f32 %v57, %v280
    %v282 = vpop.f32.mrb[0].mxu0
    %v283 = vadd.f32 %v61, %v282
    %v284 = vpop.f32.mrb[0].mxu0
    %v285 = vadd.f32 %v57, %v284
    %v286 = vpop.f32.mrb[0].mxu0
    %v287 = vadd.f32 %v61, %v286
    %288 = vmatprep.mubr.bf16.mxu0 0
    %289 = vmatmul.mubr.bf16.gmra.mrb[0].mxu0 %v83
    %v290 = vpop.f32.mrb[0].mxu0
    %v291 = vadd.f32 %v57, %v290
    %v292 = vpop.f32.mrb[0].mxu0
    %v293 = vadd.f32 %v61, %v292
    %v294 = vpop.f32.mrb[0].mxu0
    %v295 = vadd.f32 %v57, %v294
    %v296 = vpop.f32.mrb[0].mxu0
    %v297 = vadd.f32 %v61, %v296
    %298 = vdwg.mxu0
    %299 = vmatprep.subr.bf16.mxu0 %v185
    %300 = vmatpush1.bf16.msra.mxu0 %v184
    %301 = vmatprep.subr.bf16.mxu0 %v189
    %302 = vmatpush1.bf16.msra.mxu0 %v188
    %303 = vmatprep.subr.bf16.mxu0 %v193
    %304 = vmatpush1.bf16.msra.mxu0 %v192
    %305 = vmatprep.subr.bf16.mxu0 %v197
    %306 = vmatpush1.bf16.msra.mxu0 %v196
    %307 = vmatprep.subr.bf16.mxu0 %v201
    %308 = vmatpush1.bf16.msra.mxu0 %v200
    %309 = vmatprep.subr.bf16.mxu0 %v205
    %310 = vmatpush1.bf16.msra.mxu0 %v204
    %311 = vmatprep.subr.bf16.mxu0 %v209
    %312 = vmatpush1.bf16.msra.mxu0 %v208
    %313 = vmatprep.subr.bf16.mxu0 %v213
    %314 = vmatpush1.bf16.msra.mxu0 %v212
    %315 = vmatprep.subr.bf16.mxu0 0
    %316 = vmatpush1.bf16.msra.mxu0 0
    %317 = vmatprep.subr.bf16.mxu0 0
    %318 = vmatpush1.bf16.msra.mxu0 0
    %319 = vmatprep.subr.bf16.mxu0 0
    %320 = vmatpush1.bf16.msra.mxu0 0
    %321 = vmatprep.subr.bf16.mxu0 0
    %322 = vmatpush1.bf16.msra.mxu0 0
    %323 = vmatprep.subr.bf16.mxu0 0
    %324 = vmatpush1.bf16.msra.mxu0 0
    %325 = vmatprep.subr.bf16.mxu0 0
    %326 = vmatpush1.bf16.msra.mxu0 0
    %327 = vmatprep.subr.bf16.mxu0 0
    %328 = vmatpush1.bf16.msra.mxu0 0
    %329 = vmatprep.subr.bf16.mxu0 0
    %330 = vmatpush1.bf16.msra.mxu0 0
    %331 = vmatprep.mubr.bf16.mxu0 0
    %332 = vmatmul.mubr.bf16.gmra.mrb[0].mxu0 %v82
    %v333 = vpop.f32.mrb[0].mxu0
    %v334 = vadd.f32 %v65, %v333
    %v335 = vpop.f32.mrb[0].mxu0
    %v336 = vadd.f32 %v69, %v335
    %v337 = vpop.f32.mrb[0].mxu0
    %v338 = vadd.f32 %v65, %v337
    %v339 = vpop.f32.mrb[0].mxu0
    %v340 = vadd.f32 %v69, %v339
    %341 = vmatprep.mubr.bf16.mxu0 0
    %342 = vmatmul.mubr.bf16.gmra.mrb[0].mxu0 %v83
    %v343 = vpop.f32.mrb[0].mxu0
    %v344 = vadd.f32 %v65, %v343
    %v345 = vpop.f32.mrb[0].mxu0
    %v346 = vadd.f32 %v69, %v345
    %v347 = vpop.f32.mrb[0].mxu0
    %v348 = vadd.f32 %v65, %v347
    %v349 = vpop.f32.mrb[0].mxu0
    %v350 = vadd.f32 %v69, %v349
    %351 = vdwg.mxu0
    %352 = vst [vmem:[#allocation2] sm:$0xff] %v281
    %353 = vst [vmem:[#allocation2 + $0x8] sm:$0xff] %v283
    %354 = vst [vmem:[#allocation2 + $0x10] sm:$0xff] %v334
    %355 = vst [vmem:[#allocation2 + $0x18] sm:$0xff] %v336
    %356 = vst [vmem:[#allocation2 + $0x20] sm:$0xff] %v285
    %357 = vst [vmem:[#allocation2 + $0x28] sm:$0xff] %v287
    %358 = vst [vmem:[#allocation2 + $0x30] sm:$0xff] %v338
    %359 = vst [vmem:[#allocation2 + $0x38] sm:$0xff] %v340
    %360 = vst [vmem:[#allocation2 + $0x40] sm:$0xff] %v291
    %361 = vst [vmem:[#allocation2 + $0x48] sm:$0xff] %v293
    %362 = vst [vmem:[#allocation2 + $0x50] sm:$0xff] %v344
    %363 = vst [vmem:[#allocation2 + $0x58] sm:$0xff] %v346
    %364 = vst [vmem:[#allocation2 + $0x60] sm:$0xff] %v295
    %365 = vst [vmem:[#allocation2 + $0x68] sm:$0xff] %v297
    %366 = vst [vmem:[#allocation2 + $0x70] sm:$0xff] %v348
    %367 = vst [vmem:[#allocation2 + $0x78] sm:$0xff] %v350
    // Predicated region
    $region14: #{fwd.25} parent=1 // pred_check
      _
    $region15: #{fwd.25} parent=1 // pred_check_branch
      %369 = sbr.rel (0) target = $region17
    $region16: #{fwd.25} parent=1 // pred_region
      %s371 = ssub.s32 2048, 2048
      %372 = vsyncadd [#allocation3], %s371
      %s373 = sshll.u32 [#allocation2], 4
      %s374 = int_to_ptr.vmem [resolvable:$true] %s373
      %379 = dma.vmem_to_hbm [thread:$0]  %s374, 2048, %s3, [#allocation3], 512, 512, 32
    $region17: #{fwd.25} parent=1 // pred_fallthru
      _
    // Predicated region
    $region18: #{fwd.25} parent=1 // pred_check
      _
    $region19: #{fwd.25} parent=1 // pred_check_branch
      %381 = sbr.rel (0) target = $region21
    $region20: #{fwd.25} parent=1 // pred_region
      %382 = dma.done [#allocation3], 2048
    $region21: #{fwd.25} parent=1 // pred_fallthru
      _
    %383 = vsyncpa [#allocation3], 1

// kernel: fwd.24
$region0: #{fwd.24}
  #allocation0 [shape = 'u32[]', space=smem, size = 0x4, offset = 0x4, fixed_abs, tag = 'smem constant byte address 0x4 - core index']
  #allocation1 [shape = 'u32[144,128]{1,0:T(1,128)}', space=vmem, size = 0x12000, scoped, tag = 'internal scratch']
  %s0 = inlined_call_operand.vmem [shape: bf16[32,128], index: 0, kind: input, shape index: {}]
  %s1 = inlined_call_operand.vmem [shape: bf16[128,128], index: 1, kind: input, shape index: {}]
  %s2 = inlined_call_operand.vmem [shape: f32[1,128], index: 2, kind: input, shape index: {}]
  %s3 = inlined_call_operand.vmem [shape: f32[1,128], index: 3, kind: input, shape index: {}]
  %s4 = inlined_call_operand.vmem [shape: f32[1,128], index: 4, kind: input, shape index: {}]
  %s5 = inlined_call_operand.vmem [shape: bf16[32,128], index: 5, kind: output, shape index: {}]
  %s6 = sld [smem:[#allocation0]]
  $region30: #{fwd.24} parent=0
    _
  %s8 = ssub.s32 1, %s6
  %s9 = scalar_select 0, %s8, %s6
  // Predicated region
  $region2: #{fwd.24} parent=0 // pred_check
    _
  $region3: #{fwd.24} parent=0 // pred_check_branch
    %11 = sbr.rel (0) target = $region5
  $region4: #{fwd.24} parent=0 // pred_region
    _
  $region5: #{fwd.24} parent=0 // pred_fallthru
    _
  // Predicated region
  $region6: #{fwd.24} parent=0 // pred_check
    _
  $region7: #{fwd.24} parent=0 // pred_check_branch
    %13 = sbr.rel (0) target = $region9
  $region8: #{fwd.24} parent=0 // pred_region
    _
  $region9: #{fwd.24} parent=0 // pred_fallthru
    _
  // Predicated region
  $region10: #{fwd.24} parent=0 // pred_check
    _
  $region11: #{fwd.24} parent=0 // pred_check_branch
    %15 = sbr.rel (0) target = $region13
  $region12: #{fwd.24} parent=0 // pred_region
    _
  $region13: #{fwd.24} parent=0 // pred_fallthru
    _
  // Predicated region
  $region14: #{fwd.24} parent=0 // pred_check
    _
  $region15: #{fwd.24} parent=0 // pred_check_branch
    %17 = sbr.rel (0) target = $region17
  $region16: #{fwd.24} parent=0 // pred_region
    _
  $region17: #{fwd.24} parent=0 // pred_fallthru
    _
  // Predicated region
  $region18: #{fwd.24} parent=0 // pred_check
    _
  $region19: #{fwd.24} parent=0 // pred_check_branch
    %19 = sbr.rel (0) target = $region21
  $region20: #{fwd.24} parent=0 // pred_region
    _
  $region21: #{fwd.24} parent=0 // pred_fallthru
    _
  %v21 = vld [vmem:[%s0] sm:$0xf]
  %v22 = vld [vmem:[%s0 + $0x4] sm:$0xf]
  %v23 = vld [vmem:[%s0 + $0x8] sm:$0xf]
  %v24 = vld [vmem:[%s0 + $0xc] sm:$0xf]
  %v25 = vld [vmem:[%s1] sm:$0xf]
  %v26 = vld [vmem:[%s1 + $0x4] sm:$0xf]
  %v27 = vld [vmem:[%s1 + $0x8] sm:$0xf]
  %v28 = vld [vmem:[%s1 + $0xc] sm:$0xf]
  %v29 = vld [vmem:[%s1 + $0x10] sm:$0xf]
  %v30 = vld [vmem:[%s1 + $0x14] sm:$0xf]
  %v31 = vld [vmem:[%s1 + $0x18] sm:$0xf]
  %v32 = vld [vmem:[%s1 + $0x1c] sm:$0xf]
  %v33 = vld [vmem:[%s1 + $0x20] sm:$0xf]
  %v34 = vld [vmem:[%s1 + $0x24] sm:$0xf]
  %v35 = vld [vmem:[%s1 + $0x28] sm:$0xf]
  %v36 = vld [vmem:[%s1 + $0x2c] sm:$0xf]
  %v37 = vld [vmem:[%s1 + $0x30] sm:$0xf]
  %v38 = vld [vmem:[%s1 + $0x34] sm:$0xf]
  %v39 = vld [vmem:[%s1 + $0x38] sm:$0xf]
  %v40 = vld [vmem:[%s1 + $0x3c] sm:$0xf]
  %v41 = vld [vmem:[%s2] sm:$0x1]
  %v43 = vlaneseq
  %v44 = vshrl.u32 %v43, 7
  %v45 = vsub.s32 0, %v44
  %v46 = vrot.slane %v41, %v45
  %v52 = vunpack.c.l.b16 %v21
  %v53 = vunpack.c.l.b16 %v22
  %v54 = vunpack.c.l.b16 %v23
  %v55 = vunpack.c.l.b16 %v24
  %v56 = vpack.c.b16 %v53, %v52
  %v57 = vpack.c.b16 %v55, %v54
  %v76 = vunpack.c.l.b16 %v25
  %v77 = vunpack.c.l.b16 %v26
  %v78 = vunpack.c.l.b16 %v27
  %v79 = vunpack.c.l.b16 %v28
  %v80 = vunpack.c.l.b16 %v29
  %v81 = vunpack.c.l.b16 %v30
  %v82 = vunpack.c.l.b16 %v31
  %v83 = vunpack.c.l.b16 %v32
  %v84 = vunpack.c.l.b16 %v33
  %v85 = vunpack.c.l.b16 %v34
  %v86 = vunpack.c.l.b16 %v35
  %v87 = vunpack.c.l.b16 %v36
  %v88 = vunpack.c.l.b16 %v37
  %v89 = vunpack.c.l.b16 %v38
  %v90 = vunpack.c.l.b16 %v39
  %v91 = vunpack.c.l.b16 %v40
  %v92 = vpack.c.b16 %v77, %v76
  %v93 = vpack.c.b16 %v79, %v78
  %v94 = vpack.c.b16 %v81, %v80
  %v95 = vpack.c.b16 %v83, %v82
  %v96 = vpack.c.b16 %v85, %v84
  %v97 = vpack.c.b16 %v87, %v86
  %v98 = vpack.c.b16 %v89, %v88
  %v99 = vpack.c.b16 %v91, %v90
  %108 = vmatprep.subr.bf16.mxu0 0
  %109 = vmatpush1.bf16.msra.mxu0 %v92
  %110 = vmatprep.subr.bf16.mxu0 0
  %111 = vmatpush1.bf16.msra.mxu0 %v93
  %112 = vmatprep.subr.bf16.mxu0 0
  %113 = vmatpush1.bf16.msra.mxu0 %v94
  %114 = vmatprep.subr.bf16.mxu0 0
  %115 = vmatpush1.bf16.msra.mxu0 %v95
  %116 = vmatprep.subr.bf16.mxu0 0
  %117 = vmatpush1.bf16.msra.mxu0 %v96
  %118 = vmatprep.subr.bf16.mxu0 0
  %119 = vmatpush1.bf16.msra.mxu0 %v97
  %120 = vmatprep.subr.bf16.mxu0 0
  %121 = vmatpush1.bf16.msra.mxu0 %v98
  %122 = vmatprep.subr.bf16.mxu0 0
  %123 = vmatpush1.bf16.msra.mxu0 %v99
  %124 = vmatprep.subr.bf16.mxu0 0
  %125 = vmatpush1.bf16.msra.mxu0 0
  %126 = vmatprep.subr.bf16.mxu0 0
  %127 = vmatpush1.bf16.msra.mxu0 0
  %128 = vmatprep.subr.bf16.mxu0 0
  %129 = vmatpush1.bf16.msra.mxu0 0
  %130 = vmatprep.subr.bf16.mxu0 0
  %131 = vmatpush1.bf16.msra.mxu0 0
  %132 = vmatprep.subr.bf16.mxu0 0
  %133 = vmatpush1.bf16.msra.mxu0 0
  %134 = vmatprep.subr.bf16.mxu0 0
  %135 = vmatpush1.bf16.msra.mxu0 0
  %136 = vmatprep.subr.bf16.mxu0 0
  %137 = vmatpush1.bf16.msra.mxu0 0
  %138 = vmatprep.subr.bf16.mxu0 0
  %139 = vmatpush1.bf16.msra.mxu0 0
  %140 = vmatprep.mubr.bf16.mxu0 0
  %141 = vmatmul.mubr.bf16.gmra.mrb[0].mxu0 %v56
  %v142 = vpop.f32.mrb[0].mxu0
  %v143 = vadd.f32 %v46, %v142
  %v144 = vpop.f32.mrb[0].mxu0
  %v145 = vpop.f32.mrb[0].mxu0
  %v146 = vadd.f32 %v46, %v145
  %v147 = vpop.f32.mrb[0].mxu0
  %148 = vmatprep.mubr.bf16.mxu0 0
  %149 = vmatmul.mubr.bf16.gmra.mrb[0].mxu0 %v57
  %v150 = vpop.f32.mrb[0].mxu0
  %v151 = vadd.f32 %v46, %v150
  %v152 = vpop.f32.mrb[0].mxu0
  %v153 = vpop.f32.mrb[0].mxu0
  %v154 = vadd.f32 %v46, %v153
  %v155 = vpop.f32.mrb[0].mxu0
  %156 = vdwg.mxu0
  %v157 = vmul.f32 %v143, 0.5
  %v158 = vmul.f32 %v146, 0.5
  %v159 = vmul.f32 %v151, 0.5
  %v160 = vmul.f32 %v154, 0.5
  %v161 = vmul.f32 %v143, 0.70710677
  %v162 = vmul.f32 %v146, 0.70710677
  %v163 = vmul.f32 %v151, 0.70710677
  %v164 = vmul.f32 %v154, 0.70710677
  %v165 = verf.f32.pop %v161
  %v166 = verf.f32.pop %v162
  %v167 = verf.f32.pop %v163
  %v168 = verf.f32.pop %v164
  %v169 = vadd.f32 %v165, 1.0
  %v170 = vadd.f32 %v166, 1.0
  %v171 = vadd.f32 %v167, 1.0
  %v172 = vadd.f32 %v168, 1.0
  %v173 = vmul.f32 %v157, %v169
  %v174 = vmul.f32 %v158, %v170
  %v175 = vmul.f32 %v159, %v171
  %v176 = vmul.f32 %v160, %v172
  %v177 = vld [vmem:[%s3] sm:$0x1]
  %v178 = vld [vmem:[%s4] sm:$0x1]
  %179 = vadd.xlane.f32.xlu0 %v173
  %v180 = vpop.xlane.xlu0 %179
  %181 = vadd.xlane.f32.xlu0 %v174
  %v182 = vpop.xlane.xlu0 %181
  %183 = vadd.xlane.f32.xlu0 %v175
  %v184 = vpop.xlane.xlu0 %183
  %185 = vadd.xlane.f32.xlu0 %v176
  %v186 = vpop.xlane.xlu0 %185
  %v187 = vrcp.pop 128.0
  %v188 = vmul.f32 %v180, %v187
  %v189 = vmul.f32 %v182, %v187
  %v190 = vmul.f32 %v184, %v187
  %v191 = vmul.f32 %v186, %v187
  %v192 = vsub.f32 %v173, %v188
  %v193 = vsub.f32 %v174, %v189
  %v194 = vsub.f32 %v175, %v190
  %v195 = vsub.f32 %v176, %v191
  %v196 = vmul.f32 %v192, %v192
  %v197 = vmul.f32 %v193, %v193
  %v198 = vmul.f32 %v194, %v194
  %v199 = vmul.f32 %v195, %v195
  %200 = vadd.xlane.f32.xlu0 %v196
  %v201 = vpop.xlane.xlu0 %200
  %202 = vadd.xlane.f32.xlu0 %v197
  %v203 = vpop.xlane.xlu0 %202
  %204 = vadd.xlane.f32.xlu0 %v198
  %v205 = vpop.xlane.xlu0 %204
  %206 = vadd.xlane.f32.xlu0 %v199
  %v207 = vpop.xlane.xlu0 %206
  %v208 = vmul.f32 %v201, %v187
  %v209 = vmul.f32 %v203, %v187
  %v210 = vmul.f32 %v205, %v187
  %v211 = vmul.f32 %v207, %v187
  %v212 = vadd.f32 %v208, 1e-12
  %v213 = vadd.f32 %v209, 1e-12
  %v214 = vadd.f32 %v210, 1e-12
  %v215 = vadd.f32 %v211, 1e-12
  %v216 = vrsqrt.pop %v212
  %v217 = vrsqrt.pop %v213
  %v218 = vrsqrt.pop %v214
  %v219 = vrsqrt.pop %v215
  %v220 = vmul.f32 %v192, %v216
  %v221 = vmul.f32 %v193, %v217
  %v222 = vmul.f32 %v194, %v218
  %v223 = vmul.f32 %v195, %v219
  %v225 = vlaneseq
  %v226 = vshrl.u32 %v225, 7
  %v227 = vsub.s32 0, %v226
  %v228 = vrot.slane %v177, %v227
  %v230 = vmul.f32 %v220, %v228
  %v231 = vmul.f32 %v221, %v228
  %v232 = vmul.f32 %v222, %v228
  %v233 = vmul.f32 %v223, %v228
  %v235 = vlaneseq
  %v236 = vshrl.u32 %v235, 7
  %v237 = vsub.s32 0, %v236
  %v238 = vrot.slane %v178, %v237
  %v240 = vadd.f32 %v230, %v238
  %v241 = vadd.f32 %v231, %v238
  %v242 = vadd.f32 %v232, %v238
  %v243 = vadd.f32 %v233, %v238
  %v244 = vpack.c.bf16 %v241, %v240
  %v245 = vpack.c.bf16 %v243, %v242
  %v248 = vunpack.c.l.b16 %v244
  %v249 = vunpack.c.h.b16 %v244
  %v250 = vunpack.c.l.b16 %v245
  %v251 = vunpack.c.h.b16 %v245
  %v252 = vpack.c.b16 %v248, %v248
  %v253 = vpack.c.b16 %v249, %v249
  %v254 = vpack.c.b16 %v250, %v250
  %v255 = vpack.c.b16 %v251, %v251
  %260 = vst [vmem:[%s5] sm:$0xf] %v252
  %261 = vst [vmem:[%s5 + $0x4] sm:$0xf] %v253
  %262 = vst [vmem:[%s5 + $0x8] sm:$0xf] %v254
  %263 = vst [vmem:[%s5 + $0xc] sm:$0xf] %v255
  // Predicated region
  $region22: #{fwd.24} parent=0 // pred_check
    _
  $region23: #{fwd.24} parent=0 // pred_check_branch
    %265 = sbr.rel (0) target = $region25
  $region24: #{fwd.24} parent=0 // pred_region
    _
  $region25: #{fwd.24} parent=0 // pred_fallthru
    _
  // Predicated region
  $region26: #{fwd.24} parent=0 // pred_check
    _
  $region27: #{fwd.24} parent=0 // pred_check_branch
    %267 = sbr.rel (0) target = $region29
  $region28: #{fwd.24} parent=0 // pred_region
    _
  $region29: #{fwd.24} parent=0 // pred_fallthru
    _

</llo_original>
